<compile_context>
chip_gen: v5e
topology: v5e:2x2
jax: 0.10.0
libtpu: 0.0.40
codegen_flags: <defaults>
</compile_context>

<pallas_src>
import functools

import numpy as np

import jax
import jax.numpy as jnp
from jax.experimental import pallas as pl
from jax.experimental.pallas import tpu as pltpu


ANCHORS_PER_CELL = 16                      # 4x4 anchors inside every stride-16 cell
STRIDE = 16
BACKBONE_CHANNELS = (1, 8, 16, 32, 32)     # 4 stride-2 conv layers -> total stride 16


# ---------------------------------------------------------------------------
# Trace-time / init-time constants: conv-as-matmul operands and anchor tables.
# ---------------------------------------------------------------------------
def _row_select_matrices(hin):
    """R[kh]: (Ho, Hin) 0/1 so that (R[kh] @ X)[ho] == Xpad[2*ho + kh]  (pad=1, stride=2)."""
    ho = hin // 2
    r = np.zeros((3, ho, hin), np.float32)
    for kh in range(3):
        for o in range(ho):
            src = 2 * o + kh - 1
            if 0 <= src < hin:
                r[kh, o, src] = 1.0
    return jnp.asarray(r, jnp.bfloat16)


def _expand_conv_weight(w, win):
    """w: (3,3,Cin,Cout) -> M[kh]: (Win*Cin, Wo*Cout) folding kw taps + column padding."""
    cin, cout = w.shape[2], w.shape[3]
    wo = win // 2
    m = np.zeros((3, win * cin, wo * cout), np.float32)
    for kh in range(3):
        for o in range(wo):
            for kw in range(3):
                src = 2 * o + kw - 1
                if 0 <= src < win:
                    m[kh, src * cin:(src + 1) * cin, o * cout:(o + 1) * cout] = w[kh, kw]
    return jnp.asarray(m, jnp.bfloat16)


def _expand_bias(b, wo):
    return jnp.asarray(np.tile(np.asarray(b, np.float32), wo)[None, :])


def make_anchor_tables(hc, wc, num_joints):
    """Anchor x/y replicated over joints: (cells, A*J); cell = col_cell*hc + row_cell
    (matches the in-kernel feature-row order), lane = ai*J + j."""
    a, j = ANCHORS_PER_CELL, num_joints
    ax = np.zeros((hc * wc, a * j), np.float32)
    ay = np.zeros((hc * wc, a * j), np.float32)
    for r in range(hc):
        for c in range(wc):
            cell = c * hc + r
            for ai in range(a):
                ax[cell, ai * j:(ai + 1) * j] = c * STRIDE + (ai % 4) * 4 + 2.0
                ay[cell, ai * j:(ai + 1) * j] = r * STRIDE + (ai // 4) * 4 + 2.0
    return jnp.asarray(ax), jnp.asarray(ay)


# ---------------------------------------------------------------------------
# Parameters (deterministic synthetic init; expanded for the fused kernel once).
# ---------------------------------------------------------------------------
def init_params(key, num_joints, height, width):
    keys = jax.random.split(key, 8)
    params = {"conv_m": [], "conv_b": []}
    win = width
    for li in range(4):
        cin, cout = BACKBONE_CHANNELS[li], BACKBONE_CHANNELS[li + 1]
        w = jax.random.normal(keys[li], (3, 3, cin, cout), jnp.float32) / np.sqrt(cin * 9.0)
        params["conv_m"].append(_expand_conv_weight(np.asarray(jax.device_get(w)), win))
        params["conv_b"].append(_expand_bias(np.zeros((cout,), np.float32), win // 2))
        win //= 2
    c = BACKBONE_CHANNELS[-1]
    a, j = ANCHORS_PER_CELL, num_joints

    def head_w(k, n):
        return jax.random.normal(k, (c, n), jnp.float32) / np.sqrt(float(c))

    w_cls = head_w(keys[4], a * j)                                      # cols = (ai, j)
    w_reg = head_w(keys[5], a * j * 2).reshape(c, a, j, 2)              # cols = (ai, j, xy)
    w_dep = head_w(keys[6], a * j)
    # fused head weight, column blocks [cls | reg_x | reg_y | dep], each (ai, j)-ordered;
    # hoisted out of the forward (single HBM-resident (C, 4*A*J) matrix).
    w_heads = jnp.concatenate(
        [w_cls, w_reg[..., 0].reshape(c, a * j), w_reg[..., 1].reshape(c, a * j), w_dep],
        axis=1)
    params["w_heads"] = w_heads.astype(jnp.bfloat16)                    # (C, 4*A*J)
    params["b_heads"] = jnp.zeros((1, 4 * a * j), jnp.float32)
    return params


# ---------------------------------------------------------------------------
# The single fused kernel: norm -> backbone -> heads -> A2J post-proc -> geometry.
# ---------------------------------------------------------------------------
def _fused_kernel(cz_ref, cb_ref, it_ref,                 # scalar prefetch (SMEM)
                  x_ref,
                  r1_ref, m1_ref, b1_ref,
                  r2_ref, m2_ref, b2_ref,
                  r3_ref, m3_ref, b3_ref,
                  r4_ref, m4_ref, b4_ref,
                  wh_ref, bh_ref, ax_ref, ay_ref,
                  crop_ref, hv_ref, res_ref,
                  f_scratch,
                  *, fx, fy, u0, v0, num_joints):
    i = pl.program_id(0)
    nj = num_joints
    aj = ANCHORS_PER_CELL * nj
    c_feat = BACKBONE_CHANNELS[-1]

    # ---- depth normalization (f32 elementwise) ----
    d_in = x_ref[0]                                         # (H, W)
    inv_half = 2.0 / cb_ref[i]
    norm = jnp.clip((d_in - cz_ref[i]) * inv_half, -1.0, 1.0)
    norm = jnp.where(d_in > 0.0, norm, jnp.ones_like(norm))
    crop_ref[0] = norm

    # ---- backbone: 4x (3x3 / stride-2 conv + bias + ReLU) == 6 small MXU matmuls each ----
    x = norm.astype(jnp.bfloat16)                           # (H, W*Cin), Cin = 1
    y = None
    for r_ref, m_ref, b_ref in ((r1_ref, m1_ref, b1_ref), (r2_ref, m2_ref, b2_ref),
                                (r3_ref, m3_ref, b3_ref), (r4_ref, m4_ref, b4_ref)):
        acc = None
        for kh in range(3):
            rows = jnp.dot(r_ref[kh], x,
                           preferred_element_type=jnp.float32).astype(jnp.bfloat16)
            term = jnp.dot(rows, m_ref[kh], preferred_element_type=jnp.float32)
            acc = term if acc is None else acc + term
        y = jnp.maximum(acc + b_ref[...], 0.0)              # (Ho, Wo*Cout) f32
        x = y.astype(jnp.bfloat16)

    # ---- gather (hc, wc*C) -> (hc*wc, C) cell features via a tiny VMEM scratch ----
    hc = y.shape[0]
    wc = y.shape[1] // c_feat
    for wo in range(wc):
        f_scratch[pl.ds(wo * hc, hc), :] = y[:, wo * c_feat:(wo + 1) * c_feat]
    feat = f_scratch[...].astype(jnp.bfloat16)              # (cells, C), cell = wo*hc + ho

    # ---- fused cls / reg_x / reg_y / dep heads: one GEMM, N = 4*A*J = 896 (lane dense) ----
    hv = jnp.dot(feat, wh_ref[...], preferred_element_type=jnp.float32) + bh_ref[...]
    hv_ref[0] = hv                                          # raw head outputs for the caller

    # ---- A2J post-processing: softmax over all anchors (per joint) + weighted sums ----
    cls = hv[:, 0 * aj:1 * aj]
    rgx = hv[:, 1 * aj:2 * aj]
    rgy = hv[:, 2 * aj:3 * aj]
    dep = hv[:, 3 * aj:4 * aj]
    m_glob = jnp.max(jnp.max(cls, axis=1, keepdims=True), axis=0, keepdims=True)   # (1, 1)
    e = jnp.exp(cls - m_glob)                               # (cells, A*J)
    ax2 = ax_ref[...]
    ay2 = ay_ref[...]

    def anchor_sum(v):                                      # (cells, A*J) -> (1, J), exact f32
        r = jnp.sum(v, axis=0, keepdims=True)               # (1, A*J)
        width = aj
        while width > nj:                                   # halving tree over the A anchors
            width //= 2
            r = r[:, :width] + r[:, width:2 * width]
        return r

    denom = anchor_sum(e)
    inv_d = pl.reciprocal(denom, approx=True)               # softmax denominator on the EUP
    ajx = anchor_sum(e * ax2) * inv_d
    ajy = anchor_sum(e * ay2) * inv_d
    rjx = anchor_sum(e * (ax2 + rgx)) * inv_d
    rjy = anchor_sum(e * (ay2 + rgy)) * inv_d
    dnm = anchor_sum(e * dep) * inv_d

    # ---- transform_2D with the inverse crop homography (scalars live in SMEM) ----
    t00 = it_ref[i, 0]; t01 = it_ref[i, 1]; t02 = it_ref[i, 2]
    t10 = it_ref[i, 3]; t11 = it_ref[i, 4]; t12 = it_ref[i, 5]
    t20 = it_ref[i, 6]; t21 = it_ref[i, 7]; t22 = it_ref[i, 8]
    pw = t20 * rjx + t21 * rjy + t22
    u = (t00 * rjx + t01 * rjy + t02) / pw
    v = (t10 * rjx + t11 * rjy + t12) / pw

    # ---- depth de-normalization + pinhole back-projection (transform_2D_to_3D) ----
    dz = dnm * (cb_ref[i] * 0.5) + cz_ref[i]
    x3 = (u - u0) * dz * (1.0 / fx)
    y3 = (v - v0) * dz * (1.0 / fy)
    # level == 0: identity view transform -> transform_3D(inverse(view_trans)) is elided.

    for k, row in enumerate((ajx, ajy, rjx, rjy, dnm, x3, y3, dz)):
        res_ref[0, pl.ds(k, 1), :] = row                    # single collapsed (8, J) output


# ---------------------------------------------------------------------------
# Full forward (level == 0, use_conf=True, random_sample=False)
# ---------------------------------------------------------------------------
def multiview_a2j_forward(params, camera, num_joints, cropped, crop_trans, com_2d, cube,
                          level=0):
    assert level == 0, "only the level==0 (identity view transform) code path is implemented"
    assert ANCHORS_PER_CELL & (ANCHORS_PER_CELL - 1) == 0
    b = cropped.shape[0]
    h, w = cropped.shape[-2], cropped.shape[-1]
    assert h % STRIDE == 0 and w % STRIDE == 0
    num_views = 1
    bn = b * num_views
    j = num_joints
    a = ANCHORS_PER_CELL
    hc, wc = h // STRIDE, w // STRIDE
    cells = hc * wc
    a_tot = cells * a
    c_feat = BACKBONE_CHANNELS[-1]

    # level == 0, not random_sample: identity view transforms
    view_trans = jnp.tile(jnp.eye(4, dtype=jnp.float32)[None, None], (b, num_views, 1, 1))

    com_z = jnp.tile(com_2d[:, 2:3], (1, num_views)).reshape(bn).astype(jnp.float32)
    cube_z = jnp.tile(cube[:, 2:3], (1, num_views)).reshape(bn).astype(jnp.float32)
    inv_crop = jnp.linalg.inv(crop_trans)                                   # (B, 3, 3)
    inv_crop_flat = jnp.tile(inv_crop[:, None], (1, num_views, 1, 1)).reshape(bn, 9)
    inv_crop_flat = inv_crop_flat.astype(jnp.float32)

    depth = cropped.reshape(bn, h, w).astype(jnp.float32)

    # trace-time geometry constants (folded by jit)
    r_mats = [_row_select_matrices(h >> li) for li in range(4)]
    anch_x, anch_y = make_anchor_tables(hc, wc, j)

    def const_spec(arr):
        nd = arr.ndim
        return pl.BlockSpec(arr.shape, lambda i, *_, _nd=nd: (0,) * _nd)

    weight_args = []
    in_specs = [pl.BlockSpec((1, h, w), lambda i, *_: (i, 0, 0))]
    for li in range(4):
        for arr in (r_mats[li], params["conv_m"][li], params["conv_b"][li]):
            in_specs.append(const_spec(arr))
            weight_args.append(arr)
    for arr in (params["w_heads"], params["b_heads"], anch_x, anch_y):
        in_specs.append(const_spec(arr))
        weight_args.append(arr)

    out_shape = (jax.ShapeDtypeStruct((bn, h, w), jnp.float32),
                 jax.ShapeDtypeStruct((bn, cells, 4 * a * j), jnp.float32),
                 jax.ShapeDtypeStruct((bn, 8, j), jnp.float32))
    out_specs = [pl.BlockSpec((1, h, w), lambda i, *_: (i, 0, 0)),
                 pl.BlockSpec((1, cells, 4 * a * j), lambda i, *_: (i, 0, 0)),
                 pl.BlockSpec((1, 8, j), lambda i, *_: (i, 0, 0))]

    kern = functools.partial(_fused_kernel, fx=float(camera["fx"]), fy=float(camera["fy"]),
                             u0=float(camera["u0"]), v0=float(camera["v0"]), num_joints=j)

    crop_norm, head_out, res = pl.pallas_call(
        kern,
        out_shape=out_shape,
        grid_spec=pltpu.PrefetchScalarGridSpec(
            num_scalar_prefetch=3,
            grid=(bn,),
            in_specs=in_specs,
            out_specs=out_specs,
            scratch_shapes=[pltpu.VMEM((cells, c_feat), jnp.float32)]),
        compiler_params=pltpu.CompilerParams(dimension_semantics=("parallel",)),
    )(com_z, cube_z, inv_crop_flat, depth, *weight_args)

    # ---- cheap output formatting (fused away under jit) ----
    preds = head_out.reshape(bn, cells, 4, a, j)            # anchor a = cell*A + ai
    classification = preds[:, :, 0].reshape(bn, a_tot, j)
    regression = jnp.stack([preds[:, :, 1].reshape(bn, a_tot, j),
                            preds[:, :, 2].reshape(bn, a_tot, j)], axis=-1)
    depthregression = preds[:, :, 3].reshape(bn, a_tot, j)

    anchor_joints_2d_crop = jnp.stack([res[:, 0], res[:, 1]], axis=-1).reshape(b, num_views, j, 2)
    regression_joints_2d_crop = jnp.stack([res[:, 2], res[:, 3]], axis=-1).reshape(b, num_views, j, 2)
    depth_value_norm = res[:, 4].reshape(b, num_views, j)
    joints_3d = jnp.stack([res[:, 5], res[:, 6], res[:, 7]], axis=-1).reshape(b, num_views, j, 3)
    joint_3d_fused = jnp.mean(joints_3d, axis=1)

    crop_expand = crop_norm.reshape(b, num_views, 1, h, w)
    classification = classification.reshape(b, num_views, a_tot, j)
    regression = regression.reshape(b, num_views, a_tot, j, 2)
    depthregression = depthregression.reshape(b, num_views, a_tot, j)

    conf = jnp.ones((b, 1), jnp.float32)                    # level == 0, use_conf=True
    joint_3d_conf = joint_3d_fused

    return (crop_expand, anchor_joints_2d_crop, regression_joints_2d_crop,
            depth_value_norm, joints_3d, view_trans, joint_3d_fused,
            classification, regression, depthregression, conf, joint_3d_conf)


# ---------------------------------------------------------------------------
if __name__ == "__main__":
    key = jax.random.PRNGKey(0)
    B, H, W = 2, 64, 64
    num_joints = 14
    camera = {"fx": 588.0, "fy": 587.0, "u0": 320.0, "v0": 240.0}

    params = init_params(key, num_joints, H, W)

    k1, k2 = jax.random.split(jax.random.fold_in(key, 1))
    com_2d = jnp.array([[30.0, 32.0, 500.0], [34.0, 28.0, 520.0]], jnp.float32)
    cube = jnp.array([[250.0, 250.0, 250.0], [260.0, 260.0, 260.0]], jnp.float32)
    crop_trans = jnp.array([[[2.0, 0.0, -10.0], [0.0, 2.0, -12.0], [0.0, 0.0, 1.0]],
                            [[1.8, 0.0, -8.0], [0.0, 1.8, -9.0], [0.0, 0.0, 1.0]]],
                           jnp.float32)
    depth = (com_2d[:, 2][:, None, None]
             + 100.0 * jax.random.uniform(k1, (B, H, W), jnp.float32, -1.0, 1.0))
    bg_mask = jax.random.uniform(k2, (B, H, W), jnp.float32) > 0.9
    cropped = jnp.where(bg_mask, 0.0, depth)[:, None, :, :]               # (B, 1, H, W)

    fwd = jax.jit(lambda cr, ct, co, cu: multiview_a2j_forward(
        params, camera, num_joints, cr, ct, co, cu, level=0))
    outs = jax.block_until_ready(fwd(cropped, crop_trans, com_2d, cube))

    A_tot = (H // STRIDE) * (W // STRIDE) * ANCHORS_PER_CELL
    assert outs[0].shape == (B, 1, 1, H, W)
    assert outs[1].shape == (B, 1, num_joints, 2)
    assert outs[2].shape == (B, 1, num_joints, 2)
    assert outs[3].shape == (B, 1, num_joints)
    assert outs[4].shape == (B, 1, num_joints, 3)
    assert outs[5].shape == (B, 1, 4, 4)
    assert outs[6].shape == (B, num_joints, 3)
    assert outs[7].shape == (B, 1, A_tot, num_joints)
    assert outs[8].shape == (B, 1, A_tot, num_joints, 2)
    assert outs[9].shape == (B, 1, A_tot, num_joints)
    assert outs[10].shape == (B, 1)
    assert outs[11].shape == (B, num_joints, 3)
    # normalized crop clipped to [-1, 1]; anchor-weighted 2D joints lie inside the crop hull
    assert bool(jnp.all(jnp.abs(outs[0]) <= 1.0 + 1e-5))
    assert bool(jnp.all((outs[1] >= 0.0) & (outs[1] <= max(H, W))))
    assert bool(jnp.all(jnp.isfinite(outs[6])))
    print("KERNEL_OK")
</pallas_src>

<mosaic_0001>
module attributes {stable_mosaic.version = 11 : i64} {
  func.func @_fused_kernel(%arg0: i32, %arg1: memref<2xf32, #tpu.memory_space<smem>>, %arg2: memref<2xf32, #tpu.memory_space<smem>>, %arg3: memref<2x9xf32, #tpu.memory_space<smem>>, %arg4: memref<1x64x64xf32, #tpu.memory_space<vmem>>, %arg5: memref<3x32x64xbf16, #tpu.memory_space<vmem>>, %arg6: memref<3x64x256xbf16, #tpu.memory_space<vmem>>, %arg7: memref<1x256xf32, #tpu.memory_space<vmem>>, %arg8: memref<3x16x32xbf16, #tpu.memory_space<vmem>>, %arg9: memref<3x256x256xbf16, #tpu.memory_space<vmem>>, %arg10: memref<1x256xf32, #tpu.memory_space<vmem>>, %arg11: memref<3x8x16xbf16, #tpu.memory_space<vmem>>, %arg12: memref<3x256x256xbf16, #tpu.memory_space<vmem>>, %arg13: memref<1x256xf32, #tpu.memory_space<vmem>>, %arg14: memref<3x4x8xbf16, #tpu.memory_space<vmem>>, %arg15: memref<3x256x128xbf16, #tpu.memory_space<vmem>>, %arg16: memref<1x128xf32, #tpu.memory_space<vmem>>, %arg17: memref<32x896xbf16, #tpu.memory_space<vmem>>, %arg18: memref<1x896xf32, #tpu.memory_space<vmem>>, %arg19: memref<16x224xf32, #tpu.memory_space<vmem>>, %arg20: memref<16x224xf32, #tpu.memory_space<vmem>>, %arg21: memref<1x64x64xf32, #tpu.memory_space<vmem>>, %arg22: memref<1x16x896xf32, #tpu.memory_space<vmem>>, %arg23: memref<1x8x14xf32, #tpu.memory_space<vmem>>, %arg24: memref<16x32xf32, #tpu.memory_space<vmem>>) attributes {dimension_semantics = [#tpu.dimension_semantics<parallel>], iteration_bounds = array<i64: 2>, scalar_prefetch = 3 : i64, scratch_operands = 1 : i64, tpu.core_type = #tpu.core_type<tc>, window_params = [{transform_indices = @transform_0, window_bounds = array<i64: 1, 64, 64>}, {pipeline_mode = #tpu.pipeline_mode<synchronous>, transform_indices = @transform_1, window_bounds = array<i64: 3, 32, 64>}, {pipeline_mode = #tpu.pipeline_mode<synchronous>, transform_indices = @transform_2, window_bounds = array<i64: 3, 64, 256>}, {pipeline_mode = #tpu.pipeline_mode<synchronous>, transform_indices = @transform_3, window_bounds = array<i64: 1, 256>}, {pipeline_mode = #tpu.pipeline_mode<synchronous>, transform_indices = @transform_4, window_bounds = array<i64: 3, 16, 32>}, {pipeline_mode = #tpu.pipeline_mode<synchronous>, transform_indices = @transform_5, window_bounds = array<i64: 3, 256, 256>}, {pipeline_mode = #tpu.pipeline_mode<synchronous>, transform_indices = @transform_6, window_bounds = array<i64: 1, 256>}, {pipeline_mode = #tpu.pipeline_mode<synchronous>, transform_indices = @transform_7, window_bounds = array<i64: 3, 8, 16>}, {pipeline_mode = #tpu.pipeline_mode<synchronous>, transform_indices = @transform_8, window_bounds = array<i64: 3, 256, 256>}, {pipeline_mode = #tpu.pipeline_mode<synchronous>, transform_indices = @transform_9, window_bounds = array<i64: 1, 256>}, {pipeline_mode = #tpu.pipeline_mode<synchronous>, transform_indices = @transform_10, window_bounds = array<i64: 3, 4, 8>}, {pipeline_mode = #tpu.pipeline_mode<synchronous>, transform_indices = @transform_11, window_bounds = array<i64: 3, 256, 128>}, {pipeline_mode = #tpu.pipeline_mode<synchronous>, transform_indices = @transform_12, window_bounds = array<i64: 1, 128>}, {pipeline_mode = #tpu.pipeline_mode<synchronous>, transform_indices = @transform_13, window_bounds = array<i64: 32, 896>}, {pipeline_mode = #tpu.pipeline_mode<synchronous>, transform_indices = @transform_14, window_bounds = array<i64: 1, 896>}, {pipeline_mode = #tpu.pipeline_mode<synchronous>, transform_indices = @transform_15, window_bounds = array<i64: 16, 224>}, {pipeline_mode = #tpu.pipeline_mode<synchronous>, transform_indices = @transform_16, window_bounds = array<i64: 16, 224>}, {transform_indices = @transform_17, window_bounds = array<i64: 1, 64, 64>}, {transform_indices = @transform_18, window_bounds = array<i64: 1, 16, 896>}, {transform_indices = @transform_19, window_bounds = array<i64: 1, 8, 14>}]} {
    %c0 = arith.constant 0 : index
    %c0_0 = arith.constant 0 : index
    %c0_1 = arith.constant 0 : index
    %0 = vector.load %arg4[%c0, %c0_0, %c0_1] : memref<1x64x64xf32, #tpu.memory_space<vmem>>, vector<1x64x64xf32>
    %1 = vector.shape_cast %0 : vector<1x64x64xf32> to vector<64x64xf32>
    %2 = arith.index_cast %arg0 : i32 to index
    %3 = memref.load %arg2[%2] : memref<2xf32, #tpu.memory_space<smem>>
    %cst = arith.constant 2.000000e+00 : f32
    %4 = arith.divf %cst, %3 : f32
    %5 = arith.index_cast %arg0 : i32 to index
    %6 = memref.load %arg1[%5] : memref<2xf32, #tpu.memory_space<smem>>
    %7 = vector.broadcast %6 : f32 to vector<64x64xf32>
    %8 = arith.subf %1, %7 : vector<64x64xf32>
    %9 = vector.broadcast %4 : f32 to vector<64x64xf32>
    %10 = arith.mulf %8, %9 : vector<64x64xf32>
    %cst_2 = arith.constant -1.000000e+00 : f32
    %cst_3 = arith.constant 1.000000e+00 : f32
    %11 = vector.broadcast %cst_2 : f32 to vector<64x64xf32>
    %12 = arith.maximumf %11, %10 : vector<64x64xf32>
    %13 = vector.broadcast %cst_3 : f32 to vector<64x64xf32>
    %14 = arith.minimumf %13, %12 : vector<64x64xf32>
    %cst_4 = arith.constant 0.000000e+00 : f32
    %15 = vector.broadcast %cst_4 : f32 to vector<64x64xf32>
    %16 = arith.cmpf ogt, %1, %15 : vector<64x64xf32>
    %cst_5 = arith.constant 1.000000e+00 : f32
    %17 = vector.broadcast %cst_5 : f32 to vector<64x64xf32>
    %18 = arith.select %16, %14, %17 : vector<64x64xi1>, vector<64x64xf32>
    %c0_6 = arith.constant 0 : index
    %c0_7 = arith.constant 0 : index
    %c0_8 = arith.constant 0 : index
    %19 = vector.load %arg21[%c0_6, %c0_7, %c0_8] : memref<1x64x64xf32, #tpu.memory_space<vmem>>, vector<1x64x64xf32>
    %20 = vector.shape_cast %19 : vector<1x64x64xf32> to vector<64x64xf32>
    %21 = vector.shape_cast %18 : vector<64x64xf32> to vector<1x64x64xf32>
    tpu.vector_store %arg21[%c0_6, %c0_7, %c0_8], %21 {strides = array<i32>} : memref<1x64x64xf32, #tpu.memory_space<vmem>>, vector<1x64x64xf32>,
    %22 = arith.truncf %18 : vector<64x64xf32> to vector<64x64xbf16>
    %c0_9 = arith.constant 0 : index
    %c0_10 = arith.constant 0 : index
    %c0_11 = arith.constant 0 : index
    %23 = vector.load %arg5[%c0_9, %c0_10, %c0_11] : memref<3x32x64xbf16, #tpu.memory_space<vmem>>, vector<1x32x64xbf16>
    %24 = vector.shape_cast %23 : vector<1x32x64xbf16> to vector<32x64xbf16>
    %cst_12 = arith.constant dense<0.000000e+00> : vector<32x64xf32>
    %25 = tpu.matmul %24, %22, %cst_12 {dimension_numbers = #tpu.dot_dimension_numbers<[1], [0], [0], [1], [0, 0, 1, 1], [], []>} : vector<32x64xbf16>, vector<64x64xbf16>, vector<32x64xf32> -> vector<32x64xf32>
    %26 = arith.truncf %25 : vector<32x64xf32> to vector<32x64xbf16>
    %c0_13 = arith.constant 0 : index
    %c0_14 = arith.constant 0 : index
    %c0_15 = arith.constant 0 : index
    %27 = vector.load %arg6[%c0_13, %c0_14, %c0_15] : memref<3x64x256xbf16, #tpu.memory_space<vmem>>, vector<1x64x256xbf16>
    %28 = vector.shape_cast %27 : vector<1x64x256xbf16> to vector<64x256xbf16>
    %cst_16 = arith.constant dense<0.000000e+00> : vector<32x256xf32>
    %29 = tpu.matmul %26, %28, %cst_16 {dimension_numbers = #tpu.dot_dimension_numbers<[1], [0], [0], [1], [0, 0, 1, 1], [], []>} : vector<32x64xbf16>, vector<64x256xbf16>, vector<32x256xf32> -> vector<32x256xf32>
    %c1 = arith.constant 1 : index
    %c0_17 = arith.constant 0 : index
    %c0_18 = arith.constant 0 : index
    %30 = vector.load %arg5[%c1, %c0_17, %c0_18] : memref<3x32x64xbf16, #tpu.memory_space<vmem>>, vector<1x32x64xbf16>
    %31 = vector.shape_cast %30 : vector<1x32x64xbf16> to vector<32x64xbf16>
    %cst_19 = arith.constant dense<0.000000e+00> : vector<32x64xf32>
    %32 = tpu.matmul %31, %22, %cst_19 {dimension_numbers = #tpu.dot_dimension_numbers<[1], [0], [0], [1], [0, 0, 1, 1], [], []>} : vector<32x64xbf16>, vector<64x64xbf16>, vector<32x64xf32> -> vector<32x64xf32>
    %33 = arith.truncf %32 : vector<32x64xf32> to vector<32x64xbf16>
    %c1_20 = arith.constant 1 : index
    %c0_21 = arith.constant 0 : index
    %c0_22 = arith.constant 0 : index
    %34 = vector.load %arg6[%c1_20, %c0_21, %c0_22] : memref<3x64x256xbf16, #tpu.memory_space<vmem>>, vector<1x64x256xbf16>
    %35 = vector.shape_cast %34 : vector<1x64x256xbf16> to vector<64x256xbf16>
    %cst_23 = arith.constant dense<0.000000e+00> : vector<32x256xf32>
    %36 = tpu.matmul %33, %35, %cst_23 {dimension_numbers = #tpu.dot_dimension_numbers<[1], [0], [0], [1], [0, 0, 1, 1], [], []>} : vector<32x64xbf16>, vector<64x256xbf16>, vector<32x256xf32> -> vector<32x256xf32>
    %37 = arith.addf %29, %36 : vector<32x256xf32>
    %c2 = arith.constant 2 : index
    %c0_24 = arith.constant 0 : index
    %c0_25 = arith.constant 0 : index
    %38 = vector.load %arg5[%c2, %c0_24, %c0_25] : memref<3x32x64xbf16, #tpu.memory_space<vmem>>, vector<1x32x64xbf16>
    %39 = vector.shape_cast %38 : vector<1x32x64xbf16> to vector<32x64xbf16>
    %cst_26 = arith.constant dense<0.000000e+00> : vector<32x64xf32>
    %40 = tpu.matmul %39, %22, %cst_26 {dimension_numbers = #tpu.dot_dimension_numbers<[1], [0], [0], [1], [0, 0, 1, 1], [], []>} : vector<32x64xbf16>, vector<64x64xbf16>, vector<32x64xf32> -> vector<32x64xf32>
    %41 = arith.truncf %40 : vector<32x64xf32> to vector<32x64xbf16>
    %c2_27 = arith.constant 2 : index
    %c0_28 = arith.constant 0 : index
    %c0_29 = arith.constant 0 : index
    %42 = vector.load %arg6[%c2_27, %c0_28, %c0_29] : memref<3x64x256xbf16, #tpu.memory_space<vmem>>, vector<1x64x256xbf16>
    %43 = vector.shape_cast %42 : vector<1x64x256xbf16> to vector<64x256xbf16>
    %cst_30 = arith.constant dense<0.000000e+00> : vector<32x256xf32>
    %44 = tpu.matmul %41, %43, %cst_30 {dimension_numbers = #tpu.dot_dimension_numbers<[1], [0], [0], [1], [0, 0, 1, 1], [], []>} : vector<32x64xbf16>, vector<64x256xbf16>, vector<32x256xf32> -> vector<32x256xf32>
    %45 = arith.addf %37, %44 : vector<32x256xf32>
    %c0_31 = arith.constant 0 : index
    %c0_32 = arith.constant 0 : index
    %46 = vector.load %arg7[%c0_31, %c0_32] : memref<1x256xf32, #tpu.memory_space<vmem>>, vector<1x256xf32>
    %47 = vector.broadcast %46 : vector<1x256xf32> to vector<32x256xf32>
    %48 = arith.addf %45, %47 : vector<32x256xf32>
    %cst_33 = arith.constant 0.000000e+00 : f32
    %49 = vector.broadcast %cst_33 : f32 to vector<32x256xf32>
    %50 = arith.maximumf %48, %49 : vector<32x256xf32>
    %51 = arith.truncf %50 : vector<32x256xf32> to vector<32x256xbf16>
    %c0_34 = arith.constant 0 : index
    %c0_35 = arith.constant 0 : index
    %c0_36 = arith.constant 0 : index
    %52 = vector.load %arg8[%c0_34, %c0_35, %c0_36] : memref<3x16x32xbf16, #tpu.memory_space<vmem>>, vector<1x16x32xbf16>
    %53 = vector.shape_cast %52 : vector<1x16x32xbf16> to vector<16x32xbf16>
    %cst_37 = arith.constant dense<0.000000e+00> : vector<16x256xf32>
    %54 = tpu.matmul %53, %51, %cst_37 {dimension_numbers = #tpu.dot_dimension_numbers<[1], [0], [0], [1], [0, 0, 1, 1], [], []>} : vector<16x32xbf16>, vector<32x256xbf16>, vector<16x256xf32> -> vector<16x256xf32>
    %55 = arith.truncf %54 : vector<16x256xf32> to vector<16x256xbf16>
    %c0_38 = arith.constant 0 : index
    %c0_39 = arith.constant 0 : index
    %c0_40 = arith.constant 0 : index
    %56 = vector.load %arg9[%c0_38, %c0_39, %c0_40] : memref<3x256x256xbf16, #tpu.memory_space<vmem>>, vector<1x256x256xbf16>
    %57 = vector.shape_cast %56 : vector<1x256x256xbf16> to vector<256x256xbf16>
    %cst_41 = arith.constant dense<0.000000e+00> : vector<16x256xf32>
    %58 = tpu.matmul %55, %57, %cst_41 {dimension_numbers = #tpu.dot_dimension_numbers<[1], [0], [0], [1], [0, 0, 1, 1], [], []>} : vector<16x256xbf16>, vector<256x256xbf16>, vector<16x256xf32> -> vector<16x256xf32>
    %c1_42 = arith.constant 1 : index
    %c0_43 = arith.constant 0 : index
    %c0_44 = arith.constant 0 : index
    %59 = vector.load %arg8[%c1_42, %c0_43, %c0_44] : memref<3x16x32xbf16, #tpu.memory_space<vmem>>, vector<1x16x32xbf16>
    %60 = vector.shape_cast %59 : vector<1x16x32xbf16> to vector<16x32xbf16>
    %cst_45 = arith.constant dense<0.000000e+00> : vector<16x256xf32>
    %61 = tpu.matmul %60, %51, %cst_45 {dimension_numbers = #tpu.dot_dimension_numbers<[1], [0], [0], [1], [0, 0, 1, 1], [], []>} : vector<16x32xbf16>, vector<32x256xbf16>, vector<16x256xf32> -> vector<16x256xf32>
    %62 = arith.truncf %61 : vector<16x256xf32> to vector<16x256xbf16>
    %c1_46 = arith.constant 1 : index
    %c0_47 = arith.constant 0 : index
    %c0_48 = arith.constant 0 : index
    %63 = vector.load %arg9[%c1_46, %c0_47, %c0_48] : memref<3x256x256xbf16, #tpu.memory_space<vmem>>, vector<1x256x256xbf16>
    %64 = vector.shape_cast %63 : vector<1x256x256xbf16> to vector<256x256xbf16>
    %cst_49 = arith.constant dense<0.000000e+00> : vector<16x256xf32>
    %65 = tpu.matmul %62, %64, %cst_49 {dimension_numbers = #tpu.dot_dimension_numbers<[1], [0], [0], [1], [0, 0, 1, 1], [], []>} : vector<16x256xbf16>, vector<256x256xbf16>, vector<16x256xf32> -> vector<16x256xf32>
    %66 = arith.addf %58, %65 : vector<16x256xf32>
    %c2_50 = arith.constant 2 : index
    %c0_51 = arith.constant 0 : index
    %c0_52 = arith.constant 0 : index
    %67 = vector.load %arg8[%c2_50, %c0_51, %c0_52] : memref<3x16x32xbf16, #tpu.memory_space<vmem>>, vector<1x16x32xbf16>
    %68 = vector.shape_cast %67 : vector<1x16x32xbf16> to vector<16x32xbf16>
    %cst_53 = arith.constant dense<0.000000e+00> : vector<16x256xf32>
    %69 = tpu.matmul %68, %51, %cst_53 {dimension_numbers = #tpu.dot_dimension_numbers<[1], [0], [0], [1], [0, 0, 1, 1], [], []>} : vector<16x32xbf16>, vector<32x256xbf16>, vector<16x256xf32> -> vector<16x256xf32>
    %70 = arith.truncf %69 : vector<16x256xf32> to vector<16x256xbf16>
    %c2_54 = arith.constant 2 : index
    %c0_55 = arith.constant 0 : index
    %c0_56 = arith.constant 0 : index
    %71 = vector.load %arg9[%c2_54, %c0_55, %c0_56] : memref<3x256x256xbf16, #tpu.memory_space<vmem>>, vector<1x256x256xbf16>
    %72 = vector.shape_cast %71 : vector<1x256x256xbf16> to vector<256x256xbf16>
    %cst_57 = arith.constant dense<0.000000e+00> : vector<16x256xf32>
    %73 = tpu.matmul %70, %72, %cst_57 {dimension_numbers = #tpu.dot_dimension_numbers<[1], [0], [0], [1], [0, 0, 1, 1], [], []>} : vector<16x256xbf16>, vector<256x256xbf16>, vector<16x256xf32> -> vector<16x256xf32>
    %74 = arith.addf %66, %73 : vector<16x256xf32>
    %c0_58 = arith.constant 0 : index
    %c0_59 = arith.constant 0 : index
    %75 = vector.load %arg10[%c0_58, %c0_59] : memref<1x256xf32, #tpu.memory_space<vmem>>, vector<1x256xf32>
    %76 = vector.broadcast %75 : vector<1x256xf32> to vector<16x256xf32>
    %77 = arith.addf %74, %76 : vector<16x256xf32>
    %cst_60 = arith.constant 0.000000e+00 : f32
    %78 = vector.broadcast %cst_60 : f32 to vector<16x256xf32>
    %79 = arith.maximumf %77, %78 : vector<16x256xf32>
    %80 = arith.truncf %79 : vector<16x256xf32> to vector<16x256xbf16>
    %c0_61 = arith.constant 0 : index
    %c0_62 = arith.constant 0 : index
    %c0_63 = arith.constant 0 : index
    %81 = vector.load %arg11[%c0_61, %c0_62, %c0_63] : memref<3x8x16xbf16, #tpu.memory_space<vmem>>, vector<1x8x16xbf16>
    %82 = vector.shape_cast %81 : vector<1x8x16xbf16> to vector<8x16xbf16>
    %cst_64 = arith.constant dense<0.000000e+00> : vector<8x256xf32>
    %83 = tpu.matmul %82, %80, %cst_64 {dimension_numbers = #tpu.dot_dimension_numbers<[1], [0], [0], [1], [0, 0, 1, 1], [], []>} : vector<8x16xbf16>, vector<16x256xbf16>, vector<8x256xf32> -> vector<8x256xf32>
    %84 = arith.truncf %83 : vector<8x256xf32> to vector<8x256xbf16>
    %c0_65 = arith.constant 0 : index
    %c0_66 = arith.constant 0 : index
    %c0_67 = arith.constant 0 : index
    %85 = vector.load %arg12[%c0_65, %c0_66, %c0_67] : memref<3x256x256xbf16, #tpu.memory_space<vmem>>, vector<1x256x256xbf16>
    %86 = vector.shape_cast %85 : vector<1x256x256xbf16> to vector<256x256xbf16>
    %cst_68 = arith.constant dense<0.000000e+00> : vector<8x256xf32>
    %87 = tpu.matmul %84, %86, %cst_68 {dimension_numbers = #tpu.dot_dimension_numbers<[1], [0], [0], [1], [0, 0, 1, 1], [], []>} : vector<8x256xbf16>, vector<256x256xbf16>, vector<8x256xf32> -> vector<8x256xf32>
    %c1_69 = arith.constant 1 : index
    %c0_70 = arith.constant 0 : index
    %c0_71 = arith.constant 0 : index
    %88 = vector.load %arg11[%c1_69, %c0_70, %c0_71] : memref<3x8x16xbf16, #tpu.memory_space<vmem>>, vector<1x8x16xbf16>
    %89 = vector.shape_cast %88 : vector<1x8x16xbf16> to vector<8x16xbf16>
    %cst_72 = arith.constant dense<0.000000e+00> : vector<8x256xf32>
    %90 = tpu.matmul %89, %80, %cst_72 {dimension_numbers = #tpu.dot_dimension_numbers<[1], [0], [0], [1], [0, 0, 1, 1], [], []>} : vector<8x16xbf16>, vector<16x256xbf16>, vector<8x256xf32> -> vector<8x256xf32>
    %91 = arith.truncf %90 : vector<8x256xf32> to vector<8x256xbf16>
    %c1_73 = arith.constant 1 : index
    %c0_74 = arith.constant 0 : index
    %c0_75 = arith.constant 0 : index
    %92 = vector.load %arg12[%c1_73, %c0_74, %c0_75] : memref<3x256x256xbf16, #tpu.memory_space<vmem>>, vector<1x256x256xbf16>
    %93 = vector.shape_cast %92 : vector<1x256x256xbf16> to vector<256x256xbf16>
    %cst_76 = arith.constant dense<0.000000e+00> : vector<8x256xf32>
    %94 = tpu.matmul %91, %93, %cst_76 {dimension_numbers = #tpu.dot_dimension_numbers<[1], [0], [0], [1], [0, 0, 1, 1], [], []>} : vector<8x256xbf16>, vector<256x256xbf16>, vector<8x256xf32> -> vector<8x256xf32>
    %95 = arith.addf %87, %94 : vector<8x256xf32>
    %c2_77 = arith.constant 2 : index
    %c0_78 = arith.constant 0 : index
    %c0_79 = arith.constant 0 : index
    %96 = vector.load %arg11[%c2_77, %c0_78, %c0_79] : memref<3x8x16xbf16, #tpu.memory_space<vmem>>, vector<1x8x16xbf16>
    %97 = vector.shape_cast %96 : vector<1x8x16xbf16> to vector<8x16xbf16>
    %cst_80 = arith.constant dense<0.000000e+00> : vector<8x256xf32>
    %98 = tpu.matmul %97, %80, %cst_80 {dimension_numbers = #tpu.dot_dimension_numbers<[1], [0], [0], [1], [0, 0, 1, 1], [], []>} : vector<8x16xbf16>, vector<16x256xbf16>, vector<8x256xf32> -> vector<8x256xf32>
    %99 = arith.truncf %98 : vector<8x256xf32> to vector<8x256xbf16>
    %c2_81 = arith.constant 2 : index
    %c0_82 = arith.constant 0 : index
    %c0_83 = arith.constant 0 : index
    %100 = vector.load %arg12[%c2_81, %c0_82, %c0_83] : memref<3x256x256xbf16, #tpu.memory_space<vmem>>, vector<1x256x256xbf16>
    %101 = vector.shape_cast %100 : vector<1x256x256xbf16> to vector<256x256xbf16>
    %cst_84 = arith.constant dense<0.000000e+00> : vector<8x256xf32>
    %102 = tpu.matmul %99, %101, %cst_84 {dimension_numbers = #tpu.dot_dimension_numbers<[1], [0], [0], [1], [0, 0, 1, 1], [], []>} : vector<8x256xbf16>, vector<256x256xbf16>, vector<8x256xf32> -> vector<8x256xf32>
    %103 = arith.addf %95, %102 : vector<8x256xf32>
    %c0_85 = arith.constant 0 : index
    %c0_86 = arith.constant 0 : index
    %104 = vector.load %arg13[%c0_85, %c0_86] : memref<1x256xf32, #tpu.memory_space<vmem>>, vector<1x256xf32>
    %105 = vector.broadcast %104 : vector<1x256xf32> to vector<8x256xf32>
    %106 = arith.addf %103, %105 : vector<8x256xf32>
    %cst_87 = arith.constant 0.000000e+00 : f32
    %107 = vector.broadcast %cst_87 : f32 to vector<8x256xf32>
    %108 = arith.maximumf %106, %107 : vector<8x256xf32>
    %109 = arith.truncf %108 : vector<8x256xf32> to vector<8x256xbf16>
    %c0_88 = arith.constant 0 : index
    %c0_89 = arith.constant 0 : index
    %c0_90 = arith.constant 0 : index
    %110 = vector.load %arg14[%c0_88, %c0_89, %c0_90] : memref<3x4x8xbf16, #tpu.memory_space<vmem>>, vector<1x4x8xbf16>
    %111 = vector.shape_cast %110 : vector<1x4x8xbf16> to vector<4x8xbf16>
    %cst_91 = arith.constant dense<0.000000e+00> : vector<4x256xf32>
    %112 = tpu.matmul %111, %109, %cst_91 {dimension_numbers = #tpu.dot_dimension_numbers<[1], [0], [0], [1], [0, 0, 1, 1], [], []>} : vector<4x8xbf16>, vector<8x256xbf16>, vector<4x256xf32> -> vector<4x256xf32>
    %113 = arith.truncf %112 : vector<4x256xf32> to vector<4x256xbf16>
    %c0_92 = arith.constant 0 : index
    %c0_93 = arith.constant 0 : index
    %c0_94 = arith.constant 0 : index
    %114 = vector.load %arg15[%c0_92, %c0_93, %c0_94] : memref<3x256x128xbf16, #tpu.memory_space<vmem>>, vector<1x256x128xbf16>
    %115 = vector.shape_cast %114 : vector<1x256x128xbf16> to vector<256x128xbf16>
    %cst_95 = arith.constant dense<0.000000e+00> : vector<4x128xf32>
    %116 = tpu.matmul %113, %115, %cst_95 {dimension_numbers = #tpu.dot_dimension_numbers<[1], [0], [0], [1], [0, 0, 1, 1], [], []>} : vector<4x256xbf16>, vector<256x128xbf16>, vector<4x128xf32> -> vector<4x128xf32>
    %c1_96 = arith.constant 1 : index
    %c0_97 = arith.constant 0 : index
    %c0_98 = arith.constant 0 : index
    %117 = vector.load %arg14[%c1_96, %c0_97, %c0_98] : memref<3x4x8xbf16, #tpu.memory_space<vmem>>, vector<1x4x8xbf16>
    %118 = vector.shape_cast %117 : vector<1x4x8xbf16> to vector<4x8xbf16>
    %cst_99 = arith.constant dense<0.000000e+00> : vector<4x256xf32>
    %119 = tpu.matmul %118, %109, %cst_99 {dimension_numbers = #tpu.dot_dimension_numbers<[1], [0], [0], [1], [0, 0, 1, 1], [], []>} : vector<4x8xbf16>, vector<8x256xbf16>, vector<4x256xf32> -> vector<4x256xf32>
    %120 = arith.truncf %119 : vector<4x256xf32> to vector<4x256xbf16>
    %c1_100 = arith.constant 1 : index
    %c0_101 = arith.constant 0 : index
    %c0_102 = arith.constant 0 : index
    %121 = vector.load %arg15[%c1_100, %c0_101, %c0_102] : memref<3x256x128xbf16, #tpu.memory_space<vmem>>, vector<1x256x128xbf16>
    %122 = vector.shape_cast %121 : vector<1x256x128xbf16> to vector<256x128xbf16>
    %cst_103 = arith.constant dense<0.000000e+00> : vector<4x128xf32>
    %123 = tpu.matmul %120, %122, %cst_103 {dimension_numbers = #tpu.dot_dimension_numbers<[1], [0], [0], [1], [0, 0, 1, 1], [], []>} : vector<4x256xbf16>, vector<256x128xbf16>, vector<4x128xf32> -> vector<4x128xf32>
    %124 = arith.addf %116, %123 : vector<4x128xf32>
    %c2_104 = arith.constant 2 : index
    %c0_105 = arith.constant 0 : index
    %c0_106 = arith.constant 0 : index
    %125 = vector.load %arg14[%c2_104, %c0_105, %c0_106] : memref<3x4x8xbf16, #tpu.memory_space<vmem>>, vector<1x4x8xbf16>
    %126 = vector.shape_cast %125 : vector<1x4x8xbf16> to vector<4x8xbf16>
    %cst_107 = arith.constant dense<0.000000e+00> : vector<4x256xf32>
    %127 = tpu.matmul %126, %109, %cst_107 {dimension_numbers = #tpu.dot_dimension_numbers<[1], [0], [0], [1], [0, 0, 1, 1], [], []>} : vector<4x8xbf16>, vector<8x256xbf16>, vector<4x256xf32> -> vector<4x256xf32>
    %128 = arith.truncf %127 : vector<4x256xf32> to vector<4x256xbf16>
    %c2_108 = arith.constant 2 : index
    %c0_109 = arith.constant 0 : index
    %c0_110 = arith.constant 0 : index
    %129 = vector.load %arg15[%c2_108, %c0_109, %c0_110] : memref<3x256x128xbf16, #tpu.memory_space<vmem>>, vector<1x256x128xbf16>
    %130 = vector.shape_cast %129 : vector<1x256x128xbf16> to vector<256x128xbf16>
    %cst_111 = arith.constant dense<0.000000e+00> : vector<4x128xf32>
    %131 = tpu.matmul %128, %130, %cst_111 {dimension_numbers = #tpu.dot_dimension_numbers<[1], [0], [0], [1], [0, 0, 1, 1], [], []>} : vector<4x256xbf16>, vector<256x128xbf16>, vector<4x128xf32> -> vector<4x128xf32>
    %132 = arith.addf %124, %131 : vector<4x128xf32>
    %c0_112 = arith.constant 0 : index
    %c0_113 = arith.constant 0 : index
    %133 = vector.load %arg16[%c0_112, %c0_113] : memref<1x128xf32, #tpu.memory_space<vmem>>, vector<1x128xf32>
    %134 = vector.broadcast %133 : vector<1x128xf32> to vector<4x128xf32>
    %135 = arith.addf %132, %134 : vector<4x128xf32>
    %cst_114 = arith.constant 0.000000e+00 : f32
    %136 = vector.broadcast %cst_114 : f32 to vector<4x128xf32>
    %137 = arith.maximumf %135, %136 : vector<4x128xf32>
    %138 = vector.extract_strided_slice %137 {offsets = [0, 0], sizes = [4, 32], strides = [1, 1]} : vector<4x128xf32> to vector<4x32xf32>
    %c0_115 = arith.constant 0 : index
    %c0_116 = arith.constant 0 : index
    %139 = vector.load %arg24[%c0_115, %c0_116] : memref<16x32xf32, #tpu.memory_space<vmem>>, vector<4x32xf32>
    tpu.vector_store %arg24[%c0_115, %c0_116], %138 {strides = array<i32>} : memref<16x32xf32, #tpu.memory_space<vmem>>, vector<4x32xf32>,
    %140 = vector.extract_strided_slice %137 {offsets = [0, 32], sizes = [4, 32], strides = [1, 1]} : vector<4x128xf32> to vector<4x32xf32>
    %c4 = arith.constant 4 : index
    %c0_117 = arith.constant 0 : index
    %141 = vector.load %arg24[%c4, %c0_117] : memref<16x32xf32, #tpu.memory_space<vmem>>, vector<4x32xf32>
    tpu.vector_store %arg24[%c4, %c0_117], %140 {strides = array<i32>} : memref<16x32xf32, #tpu.memory_space<vmem>>, vector<4x32xf32>,
    %142 = vector.extract_strided_slice %137 {offsets = [0, 64], sizes = [4, 32], strides = [1, 1]} : vector<4x128xf32> to vector<4x32xf32>
    %c8 = arith.constant 8 : index
    %c0_118 = arith.constant 0 : index
    %143 = vector.load %arg24[%c8, %c0_118] : memref<16x32xf32, #tpu.memory_space<vmem>>, vector<4x32xf32>
    tpu.vector_store %arg24[%c8, %c0_118], %142 {strides = array<i32>} : memref<16x32xf32, #tpu.memory_space<vmem>>, vector<4x32xf32>,
    %144 = vector.extract_strided_slice %137 {offsets = [0, 96], sizes = [4, 32], strides = [1, 1]} : vector<4x128xf32> to vector<4x32xf32>
    %c12 = arith.constant 12 : index
    %c0_119 = arith.constant 0 : index
    %145 = vector.load %arg24[%c12, %c0_119] : memref<16x32xf32, #tpu.memory_space<vmem>>, vector<4x32xf32>
    tpu.vector_store %arg24[%c12, %c0_119], %144 {strides = array<i32>} : memref<16x32xf32, #tpu.memory_space<vmem>>, vector<4x32xf32>,
    %c0_120 = arith.constant 0 : index
    %c0_121 = arith.constant 0 : index
    %146 = vector.load %arg24[%c0_120, %c0_121] : memref<16x32xf32, #tpu.memory_space<vmem>>, vector<16x32xf32>
    %147 = arith.truncf %146 : vector<16x32xf32> to vector<16x32xbf16>
    %c0_122 = arith.constant 0 : index
    %c0_123 = arith.constant 0 : index
    %148 = vector.load %arg17[%c0_122, %c0_123] : memref<32x896xbf16, #tpu.memory_space<vmem>>, vector<32x896xbf16>
    %cst_124 = arith.constant dense<0.000000e+00> : vector<16x896xf32>
    %149 = tpu.matmul %147, %148, %cst_124 {dimension_numbers = #tpu.dot_dimension_numbers<[1], [0], [0], [1], [0, 0, 1, 1], [], []>} : vector<16x32xbf16>, vector<32x896xbf16>, vector<16x896xf32> -> vector<16x896xf32>
    %c0_125 = arith.constant 0 : index
    %c0_126 = arith.constant 0 : index
    %150 = vector.load %arg18[%c0_125, %c0_126] : memref<1x896xf32, #tpu.memory_space<vmem>>, vector<1x896xf32>
    %151 = vector.broadcast %150 : vector<1x896xf32> to vector<16x896xf32>
    %152 = arith.addf %149, %151 : vector<16x896xf32>
    %c0_127 = arith.constant 0 : index
    %c0_128 = arith.constant 0 : index
    %c0_129 = arith.constant 0 : index
    %153 = vector.load %arg22[%c0_127, %c0_128, %c0_129] : memref<1x16x896xf32, #tpu.memory_space<vmem>>, vector<1x16x896xf32>
    %154 = vector.shape_cast %153 : vector<1x16x896xf32> to vector<16x896xf32>
    %155 = vector.shape_cast %152 : vector<16x896xf32> to vector<1x16x896xf32>
    tpu.vector_store %arg22[%c0_127, %c0_128, %c0_129], %155 {strides = array<i32>} : memref<1x16x896xf32, #tpu.memory_space<vmem>>, vector<1x16x896xf32>,
    %156 = vector.extract_strided_slice %152 {offsets = [0, 0], sizes = [16, 224], strides = [1, 1]} : vector<16x896xf32> to vector<16x224xf32>
    %157 = vector.extract_strided_slice %152 {offsets = [0, 224], sizes = [16, 224], strides = [1, 1]} : vector<16x896xf32> to vector<16x224xf32>
    %158 = vector.extract_strided_slice %152 {offsets = [0, 448], sizes = [16, 224], strides = [1, 1]} : vector<16x896xf32> to vector<16x224xf32>
    %159 = vector.extract_strided_slice %152 {offsets = [0, 672], sizes = [16, 224], strides = [1, 1]} : vector<16x896xf32> to vector<16x224xf32>
    %cst_130 = arith.constant dense<0xFF800000> : vector<16xf32>
    %160 = vector.multi_reduction <maximumf>, %156, %cst_130 [1] : vector<16x224xf32> to vector<16xf32>
    %161 = vector.shape_cast %160 : vector<16xf32> to vector<16x1xf32>
    %cst_131 = arith.constant dense<0xFF800000> : vector<1xf32>
    %162 = vector.multi_reduction <maximumf>, %161, %cst_131 [0] : vector<16x1xf32> to vector<1xf32>
    %163 = vector.shape_cast %162 : vector<1xf32> to vector<1x1xf32>
    %164 = vector.broadcast %163 : vector<1x1xf32> to vector<16x224xf32>
    %165 = arith.subf %156, %164 : vector<16x224xf32>
    %166 = math.exp %165 : vector<16x224xf32>
    %c0_132 = arith.constant 0 : index
    %c0_133 = arith.constant 0 : index
    %167 = vector.load %arg19[%c0_132, %c0_133] : memref<16x224xf32, #tpu.memory_space<vmem>>, vector<16x224xf32>
    %c0_134 = arith.constant 0 : index
    %c0_135 = arith.constant 0 : index
    %168 = vector.load %arg20[%c0_134, %c0_135] : memref<16x224xf32, #tpu.memory_space<vmem>>, vector<16x224xf32>
    %cst_136 = arith.constant dense<0.000000e+00> : vector<224xf32>
    %169 = vector.multi_reduction <add>, %166, %cst_136 [0] : vector<16x224xf32> to vector<224xf32>
    %170 = vector.shape_cast %169 : vector<224xf32> to vector<1x224xf32>
    %171 = vector.extract_strided_slice %170 {offsets = [0, 0], sizes = [1, 112], strides = [1, 1]} : vector<1x224xf32> to vector<1x112xf32>
    %172 = vector.extract_strided_slice %170 {offsets = [0, 112], sizes = [1, 112], strides = [1, 1]} : vector<1x224xf32> to vector<1x112xf32>
    %173 = arith.addf %171, %172 : vector<1x112xf32>
    %174 = vector.extract_strided_slice %173 {offsets = [0, 0], sizes = [1, 56], strides = [1, 1]} : vector<1x112xf32> to vector<1x56xf32>
    %175 = vector.extract_strided_slice %173 {offsets = [0, 56], sizes = [1, 56], strides = [1, 1]} : vector<1x112xf32> to vector<1x56xf32>
    %176 = arith.addf %174, %175 : vector<1x56xf32>
    %177 = vector.extract_strided_slice %176 {offsets = [0, 0], sizes = [1, 28], strides = [1, 1]} : vector<1x56xf32> to vector<1x28xf32>
    %178 = vector.extract_strided_slice %176 {offsets = [0, 28], sizes = [1, 28], strides = [1, 1]} : vector<1x56xf32> to vector<1x28xf32>
    %179 = arith.addf %177, %178 : vector<1x28xf32>
    %180 = vector.extract_strided_slice %179 {offsets = [0, 0], sizes = [1, 14], strides = [1, 1]} : vector<1x28xf32> to vector<1x14xf32>
    %181 = vector.extract_strided_slice %179 {offsets = [0, 14], sizes = [1, 14], strides = [1, 1]} : vector<1x28xf32> to vector<1x14xf32>
    %182 = arith.addf %180, %181 : vector<1x14xf32>
    %183 = tpu.reciprocal %182 {approx = true} : vector<1x14xf32> -> vector<1x14xf32>
    %184 = arith.mulf %166, %167 : vector<16x224xf32>
    %cst_137 = arith.constant dense<0.000000e+00> : vector<224xf32>
    %185 = vector.multi_reduction <add>, %184, %cst_137 [0] : vector<16x224xf32> to vector<224xf32>
    %186 = vector.shape_cast %185 : vector<224xf32> to vector<1x224xf32>
    %187 = vector.extract_strided_slice %186 {offsets = [0, 0], sizes = [1, 112], strides = [1, 1]} : vector<1x224xf32> to vector<1x112xf32>
    %188 = vector.extract_strided_slice %186 {offsets = [0, 112], sizes = [1, 112], strides = [1, 1]} : vector<1x224xf32> to vector<1x112xf32>
    %189 = arith.addf %187, %188 : vector<1x112xf32>
    %190 = vector.extract_strided_slice %189 {offsets = [0, 0], sizes = [1, 56], strides = [1, 1]} : vector<1x112xf32> to vector<1x56xf32>
    %191 = vector.extract_strided_slice %189 {offsets = [0, 56], sizes = [1, 56], strides = [1, 1]} : vector<1x112xf32> to vector<1x56xf32>
    %192 = arith.addf %190, %191 : vector<1x56xf32>
    %193 = vector.extract_strided_slice %192 {offsets = [0, 0], sizes = [1, 28], strides = [1, 1]} : vector<1x56xf32> to vector<1x28xf32>
    %194 = vector.extract_strided_slice %192 {offsets = [0, 28], sizes = [1, 28], strides = [1, 1]} : vector<1x56xf32> to vector<1x28xf32>
    %195 = arith.addf %193, %194 : vector<1x28xf32>
    %196 = vector.extract_strided_slice %195 {offsets = [0, 0], sizes = [1, 14], strides = [1, 1]} : vector<1x28xf32> to vector<1x14xf32>
    %197 = vector.extract_strided_slice %195 {offsets = [0, 14], sizes = [1, 14], strides = [1, 1]} : vector<1x28xf32> to vector<1x14xf32>
    %198 = arith.addf %196, %197 : vector<1x14xf32>
    %199 = arith.mulf %198, %183 : vector<1x14xf32>
    %200 = arith.mulf %166, %168 : vector<16x224xf32>
    %cst_138 = arith.constant dense<0.000000e+00> : vector<224xf32>
    %201 = vector.multi_reduction <add>, %200, %cst_138 [0] : vector<16x224xf32> to vector<224xf32>
    %202 = vector.shape_cast %201 : vector<224xf32> to vector<1x224xf32>
    %203 = vector.extract_strided_slice %202 {offsets = [0, 0], sizes = [1, 112], strides = [1, 1]} : vector<1x224xf32> to vector<1x112xf32>
    %204 = vector.extract_strided_slice %202 {offsets = [0, 112], sizes = [1, 112], strides = [1, 1]} : vector<1x224xf32> to vector<1x112xf32>
    %205 = arith.addf %203, %204 : vector<1x112xf32>
    %206 = vector.extract_strided_slice %205 {offsets = [0, 0], sizes = [1, 56], strides = [1, 1]} : vector<1x112xf32> to vector<1x56xf32>
    %207 = vector.extract_strided_slice %205 {offsets = [0, 56], sizes = [1, 56], strides = [1, 1]} : vector<1x112xf32> to vector<1x56xf32>
    %208 = arith.addf %206, %207 : vector<1x56xf32>
    %209 = vector.extract_strided_slice %208 {offsets = [0, 0], sizes = [1, 28], strides = [1, 1]} : vector<1x56xf32> to vector<1x28xf32>
    %210 = vector.extract_strided_slice %208 {offsets = [0, 28], sizes = [1, 28], strides = [1, 1]} : vector<1x56xf32> to vector<1x28xf32>
    %211 = arith.addf %209, %210 : vector<1x28xf32>
    %212 = vector.extract_strided_slice %211 {offsets = [0, 0], sizes = [1, 14], strides = [1, 1]} : vector<1x28xf32> to vector<1x14xf32>
    %213 = vector.extract_strided_slice %211 {offsets = [0, 14], sizes = [1, 14], strides = [1, 1]} : vector<1x28xf32> to vector<1x14xf32>
    %214 = arith.addf %212, %213 : vector<1x14xf32>
    %215 = arith.mulf %214, %183 : vector<1x14xf32>
    %216 = arith.addf %167, %157 : vector<16x224xf32>
    %217 = arith.mulf %166, %216 : vector<16x224xf32>
    %cst_139 = arith.constant dense<0.000000e+00> : vector<224xf32>
    %218 = vector.multi_reduction <add>, %217, %cst_139 [0] : vector<16x224xf32> to vector<224xf32>
    %219 = vector.shape_cast %218 : vector<224xf32> to vector<1x224xf32>
    %220 = vector.extract_strided_slice %219 {offsets = [0, 0], sizes = [1, 112], strides = [1, 1]} : vector<1x224xf32> to vector<1x112xf32>
    %221 = vector.extract_strided_slice %219 {offsets = [0, 112], sizes = [1, 112], strides = [1, 1]} : vector<1x224xf32> to vector<1x112xf32>
    %222 = arith.addf %220, %221 : vector<1x112xf32>
    %223 = vector.extract_strided_slice %222 {offsets = [0, 0], sizes = [1, 56], strides = [1, 1]} : vector<1x112xf32> to vector<1x56xf32>
    %224 = vector.extract_strided_slice %222 {offsets = [0, 56], sizes = [1, 56], strides = [1, 1]} : vector<1x112xf32> to vector<1x56xf32>
    %225 = arith.addf %223, %224 : vector<1x56xf32>
    %226 = vector.extract_strided_slice %225 {offsets = [0, 0], sizes = [1, 28], strides = [1, 1]} : vector<1x56xf32> to vector<1x28xf32>
    %227 = vector.extract_strided_slice %225 {offsets = [0, 28], sizes = [1, 28], strides = [1, 1]} : vector<1x56xf32> to vector<1x28xf32>
    %228 = arith.addf %226, %227 : vector<1x28xf32>
    %229 = vector.extract_strided_slice %228 {offsets = [0, 0], sizes = [1, 14], strides = [1, 1]} : vector<1x28xf32> to vector<1x14xf32>
    %230 = vector.extract_strided_slice %228 {offsets = [0, 14], sizes = [1, 14], strides = [1, 1]} : vector<1x28xf32> to vector<1x14xf32>
    %231 = arith.addf %229, %230 : vector<1x14xf32>
    %232 = arith.mulf %231, %183 : vector<1x14xf32>
    %233 = arith.addf %168, %158 : vector<16x224xf32>
    %234 = arith.mulf %166, %233 : vector<16x224xf32>
    %cst_140 = arith.constant dense<0.000000e+00> : vector<224xf32>
    %235 = vector.multi_reduction <add>, %234, %cst_140 [0] : vector<16x224xf32> to vector<224xf32>
    %236 = vector.shape_cast %235 : vector<224xf32> to vector<1x224xf32>
    %237 = vector.extract_strided_slice %236 {offsets = [0, 0], sizes = [1, 112], strides = [1, 1]} : vector<1x224xf32> to vector<1x112xf32>
    %238 = vector.extract_strided_slice %236 {offsets = [0, 112], sizes = [1, 112], strides = [1, 1]} : vector<1x224xf32> to vector<1x112xf32>
    %239 = arith.addf %237, %238 : vector<1x112xf32>
    %240 = vector.extract_strided_slice %239 {offsets = [0, 0], sizes = [1, 56], strides = [1, 1]} : vector<1x112xf32> to vector<1x56xf32>
    %241 = vector.extract_strided_slice %239 {offsets = [0, 56], sizes = [1, 56], strides = [1, 1]} : vector<1x112xf32> to vector<1x56xf32>
    %242 = arith.addf %240, %241 : vector<1x56xf32>
    %243 = vector.extract_strided_slice %242 {offsets = [0, 0], sizes = [1, 28], strides = [1, 1]} : vector<1x56xf32> to vector<1x28xf32>
    %244 = vector.extract_strided_slice %242 {offsets = [0, 28], sizes = [1, 28], strides = [1, 1]} : vector<1x56xf32> to vector<1x28xf32>
    %245 = arith.addf %243, %244 : vector<1x28xf32>
    %246 = vector.extract_strided_slice %245 {offsets = [0, 0], sizes = [1, 14], strides = [1, 1]} : vector<1x28xf32> to vector<1x14xf32>
    %247 = vector.extract_strided_slice %245 {offsets = [0, 14], sizes = [1, 14], strides = [1, 1]} : vector<1x28xf32> to vector<1x14xf32>
    %248 = arith.addf %246, %247 : vector<1x14xf32>
    %249 = arith.mulf %248, %183 : vector<1x14xf32>
    %250 = arith.mulf %166, %159 : vector<16x224xf32>
    %cst_141 = arith.constant dense<0.000000e+00> : vector<224xf32>
    %251 = vector.multi_reduction <add>, %250, %cst_141 [0] : vector<16x224xf32> to vector<224xf32>
    %252 = vector.shape_cast %251 : vector<224xf32> to vector<1x224xf32>
    %253 = vector.extract_strided_slice %252 {offsets = [0, 0], sizes = [1, 112], strides = [1, 1]} : vector<1x224xf32> to vector<1x112xf32>
    %254 = vector.extract_strided_slice %252 {offsets = [0, 112], sizes = [1, 112], strides = [1, 1]} : vector<1x224xf32> to vector<1x112xf32>
    %255 = arith.addf %253, %254 : vector<1x112xf32>
    %256 = vector.extract_strided_slice %255 {offsets = [0, 0], sizes = [1, 56], strides = [1, 1]} : vector<1x112xf32> to vector<1x56xf32>
    %257 = vector.extract_strided_slice %255 {offsets = [0, 56], sizes = [1, 56], strides = [1, 1]} : vector<1x112xf32> to vector<1x56xf32>
    %258 = arith.addf %256, %257 : vector<1x56xf32>
    %259 = vector.extract_strided_slice %258 {offsets = [0, 0], sizes = [1, 28], strides = [1, 1]} : vector<1x56xf32> to vector<1x28xf32>
    %260 = vector.extract_strided_slice %258 {offsets = [0, 28], sizes = [1, 28], strides = [1, 1]} : vector<1x56xf32> to vector<1x28xf32>
    %261 = arith.addf %259, %260 : vector<1x28xf32>
    %262 = vector.extract_strided_slice %261 {offsets = [0, 0], sizes = [1, 14], strides = [1, 1]} : vector<1x28xf32> to vector<1x14xf32>
    %263 = vector.extract_strided_slice %261 {offsets = [0, 14], sizes = [1, 14], strides = [1, 1]} : vector<1x28xf32> to vector<1x14xf32>
    %264 = arith.addf %262, %263 : vector<1x14xf32>
    %265 = arith.mulf %264, %183 : vector<1x14xf32>
    %266 = arith.index_cast %arg0 : i32 to index
    %c0_142 = arith.constant 0 : index
    %267 = memref.load %arg3[%266, %c0_142] : memref<2x9xf32, #tpu.memory_space<smem>>
    %268 = arith.index_cast %arg0 : i32 to index
    %c1_143 = arith.constant 1 : index
    %269 = memref.load %arg3[%268, %c1_143] : memref<2x9xf32, #tpu.memory_space<smem>>
    %270 = arith.index_cast %arg0 : i32 to index
    %c2_144 = arith.constant 2 : index
    %271 = memref.load %arg3[%270, %c2_144] : memref<2x9xf32, #tpu.memory_space<smem>>
    %272 = arith.index_cast %arg0 : i32 to index
    %c3 = arith.constant 3 : index
    %273 = memref.load %arg3[%272, %c3] : memref<2x9xf32, #tpu.memory_space<smem>>
    %274 = arith.index_cast %arg0 : i32 to index
    %c4_145 = arith.constant 4 : index
    %275 = memref.load %arg3[%274, %c4_145] : memref<2x9xf32, #tpu.memory_space<smem>>
    %276 = arith.index_cast %arg0 : i32 to index
    %c5 = arith.constant 5 : index
    %277 = memref.load %arg3[%276, %c5] : memref<2x9xf32, #tpu.memory_space<smem>>
    %278 = arith.index_cast %arg0 : i32 to index
    %c6 = arith.constant 6 : index
    %279 = memref.load %arg3[%278, %c6] : memref<2x9xf32, #tpu.memory_space<smem>>
    %280 = arith.index_cast %arg0 : i32 to index
    %c7 = arith.constant 7 : index
    %281 = memref.load %arg3[%280, %c7] : memref<2x9xf32, #tpu.memory_space<smem>>
    %282 = arith.index_cast %arg0 : i32 to index
    %c8_146 = arith.constant 8 : index
    %283 = memref.load %arg3[%282, %c8_146] : memref<2x9xf32, #tpu.memory_space<smem>>
    %284 = vector.broadcast %279 : f32 to vector<1x14xf32>
    %285 = arith.mulf %284, %232 : vector<1x14xf32>
    %286 = vector.broadcast %281 : f32 to vector<1x14xf32>
    %287 = arith.mulf %286, %249 : vector<1x14xf32>
    %288 = arith.addf %285, %287 : vector<1x14xf32>
    %289 = vector.broadcast %283 : f32 to vector<1x14xf32>
    %290 = arith.addf %288, %289 : vector<1x14xf32>
    %291 = vector.broadcast %267 : f32 to vector<1x14xf32>
    %292 = arith.mulf %291, %232 : vector<1x14xf32>
    %293 = vector.broadcast %269 : f32 to vector<1x14xf32>
    %294 = arith.mulf %293, %249 : vector<1x14xf32>
    %295 = arith.addf %292, %294 : vector<1x14xf32>
    %296 = vector.broadcast %271 : f32 to vector<1x14xf32>
    %297 = arith.addf %295, %296 : vector<1x14xf32>
    %298 = arith.divf %297, %290 : vector<1x14xf32>
    %299 = vector.broadcast %273 : f32 to vector<1x14xf32>
    %300 = arith.mulf %299, %232 : vector<1x14xf32>
    %301 = vector.broadcast %275 : f32 to vector<1x14xf32>
    %302 = arith.mulf %301, %249 : vector<1x14xf32>
    %303 = arith.addf %300, %302 : vector<1x14xf32>
    %304 = vector.broadcast %277 : f32 to vector<1x14xf32>
    %305 = arith.addf %303, %304 : vector<1x14xf32>
    %306 = arith.divf %305, %290 : vector<1x14xf32>
    %307 = arith.index_cast %arg0 : i32 to index
    %308 = memref.load %arg2[%307] : memref<2xf32, #tpu.memory_space<smem>>
    %cst_147 = arith.constant 5.000000e-01 : f32
    %309 = arith.mulf %308, %cst_147 : f32
    %310 = vector.broadcast %309 : f32 to vector<1x14xf32>
    %311 = arith.mulf %265, %310 : vector<1x14xf32>
    %312 = arith.index_cast %arg0 : i32 to index
    %313 = memref.load %arg1[%312] : memref<2xf32, #tpu.memory_space<smem>>
    %314 = vector.broadcast %313 : f32 to vector<1x14xf32>
    %315 = arith.addf %311, %314 : vector<1x14xf32>
    %cst_148 = arith.constant 3.200000e+02 : f32
    %316 = vector.broadcast %cst_148 : f32 to vector<1x14xf32>
    %317 = arith.subf %298, %316 : vector<1x14xf32>
    %318 = arith.mulf %317, %315 : vector<1x14xf32>
    %cst_149 = arith.constant 0.00170068024 : f32
    %319 = vector.broadcast %cst_149 : f32 to vector<1x14xf32>
    %320 = arith.mulf %318, %319 : vector<1x14xf32>
    %cst_150 = arith.constant 2.400000e+02 : f32
    %321 = vector.broadcast %cst_150 : f32 to vector<1x14xf32>
    %322 = arith.subf %306, %321 : vector<1x14xf32>
    %323 = arith.mulf %322, %315 : vector<1x14xf32>
    %cst_151 = arith.constant 0.00170357747 : f32
    %324 = vector.broadcast %cst_151 : f32 to vector<1x14xf32>
    %325 = arith.mulf %323, %324 : vector<1x14xf32>
    %c0_152 = arith.constant 0 : index
    %c0_153 = arith.constant 0 : index
    %c0_154 = arith.constant 0 : index
    %326 = vector.load %arg23[%c0_152, %c0_153, %c0_154] : memref<1x8x14xf32, #tpu.memory_space<vmem>>, vector<1x1x14xf32>
    %327 = vector.shape_cast %326 : vector<1x1x14xf32> to vector<1x14xf32>
    %328 = vector.shape_cast %199 : vector<1x14xf32> to vector<1x1x14xf32>
    tpu.vector_store %arg23[%c0_152, %c0_153, %c0_154], %328 {strides = array<i32>} : memref<1x8x14xf32, #tpu.memory_space<vmem>>, vector<1x1x14xf32>,
    %c0_155 = arith.constant 0 : index
    %c1_156 = arith.constant 1 : index
    %c0_157 = arith.constant 0 : index
    %329 = vector.load %arg23[%c0_155, %c1_156, %c0_157] : memref<1x8x14xf32, #tpu.memory_space<vmem>>, vector<1x1x14xf32>
    %330 = vector.shape_cast %329 : vector<1x1x14xf32> to vector<1x14xf32>
    %331 = vector.shape_cast %215 : vector<1x14xf32> to vector<1x1x14xf32>
    tpu.vector_store %arg23[%c0_155, %c1_156, %c0_157], %331 {strides = array<i32>} : memref<1x8x14xf32, #tpu.memory_space<vmem>>, vector<1x1x14xf32>,
    %c0_158 = arith.constant 0 : index
    %c2_159 = arith.constant 2 : index
    %c0_160 = arith.constant 0 : index
    %332 = vector.load %arg23[%c0_158, %c2_159, %c0_160] : memref<1x8x14xf32, #tpu.memory_space<vmem>>, vector<1x1x14xf32>
    %333 = vector.shape_cast %332 : vector<1x1x14xf32> to vector<1x14xf32>
    %334 = vector.shape_cast %232 : vector<1x14xf32> to vector<1x1x14xf32>
    tpu.vector_store %arg23[%c0_158, %c2_159, %c0_160], %334 {strides = array<i32>} : memref<1x8x14xf32, #tpu.memory_space<vmem>>, vector<1x1x14xf32>,
    %c0_161 = arith.constant 0 : index
    %c3_162 = arith.constant 3 : index
    %c0_163 = arith.constant 0 : index
    %335 = vector.load %arg23[%c0_161, %c3_162, %c0_163] : memref<1x8x14xf32, #tpu.memory_space<vmem>>, vector<1x1x14xf32>
    %336 = vector.shape_cast %335 : vector<1x1x14xf32> to vector<1x14xf32>
    %337 = vector.shape_cast %249 : vector<1x14xf32> to vector<1x1x14xf32>
    tpu.vector_store %arg23[%c0_161, %c3_162, %c0_163], %337 {strides = array<i32>} : memref<1x8x14xf32, #tpu.memory_space<vmem>>, vector<1x1x14xf32>,
    %c0_164 = arith.constant 0 : index
    %c4_165 = arith.constant 4 : index
    %c0_166 = arith.constant 0 : index
    %338 = vector.load %arg23[%c0_164, %c4_165, %c0_166] : memref<1x8x14xf32, #tpu.memory_space<vmem>>, vector<1x1x14xf32>
    %339 = vector.shape_cast %338 : vector<1x1x14xf32> to vector<1x14xf32>
    %340 = vector.shape_cast %265 : vector<1x14xf32> to vector<1x1x14xf32>
    tpu.vector_store %arg23[%c0_164, %c4_165, %c0_166], %340 {strides = array<i32>} : memref<1x8x14xf32, #tpu.memory_space<vmem>>, vector<1x1x14xf32>,
    %c0_167 = arith.constant 0 : index
    %c5_168 = arith.constant 5 : index
    %c0_169 = arith.constant 0 : index
    %341 = vector.load %arg23[%c0_167, %c5_168, %c0_169] : memref<1x8x14xf32, #tpu.memory_space<vmem>>, vector<1x1x14xf32>
    %342 = vector.shape_cast %341 : vector<1x1x14xf32> to vector<1x14xf32>
    %343 = vector.shape_cast %320 : vector<1x14xf32> to vector<1x1x14xf32>
    tpu.vector_store %arg23[%c0_167, %c5_168, %c0_169], %343 {strides = array<i32>} : memref<1x8x14xf32, #tpu.memory_space<vmem>>, vector<1x1x14xf32>,
    %c0_170 = arith.constant 0 : index
    %c6_171 = arith.constant 6 : index
    %c0_172 = arith.constant 0 : index
    %344 = vector.load %arg23[%c0_170, %c6_171, %c0_172] : memref<1x8x14xf32, #tpu.memory_space<vmem>>, vector<1x1x14xf32>
    %345 = vector.shape_cast %344 : vector<1x1x14xf32> to vector<1x14xf32>
    %346 = vector.shape_cast %325 : vector<1x14xf32> to vector<1x1x14xf32>
    tpu.vector_store %arg23[%c0_170, %c6_171, %c0_172], %346 {strides = array<i32>} : memref<1x8x14xf32, #tpu.memory_space<vmem>>, vector<1x1x14xf32>,
    %c0_173 = arith.constant 0 : index
    %c7_174 = arith.constant 7 : index
    %c0_175 = arith.constant 0 : index
    %347 = vector.load %arg23[%c0_173, %c7_174, %c0_175] : memref<1x8x14xf32, #tpu.memory_space<vmem>>, vector<1x1x14xf32>
    %348 = vector.shape_cast %347 : vector<1x1x14xf32> to vector<1x14xf32>
    %349 = vector.shape_cast %315 : vector<1x14xf32> to vector<1x1x14xf32>
    tpu.vector_store %arg23[%c0_173, %c7_174, %c0_175], %349 {strides = array<i32>} : memref<1x8x14xf32, #tpu.memory_space<vmem>>, vector<1x1x14xf32>,
    return
  }
  func.func @transform_0(%arg0: i32, %arg1: memref<2xf32, #tpu.memory_space<smem>>, %arg2: memref<2xf32, #tpu.memory_space<smem>>, %arg3: memref<2x9xf32, #tpu.memory_space<smem>>) -> (i32, i32, i32) {
    %c0_i32 = arith.constant 0 : i32
    %c0_i32_0 = arith.constant 0 : i32
    %c0_i32_1 = arith.constant 0 : i32
    return %arg0, %c0_i32, %c0_i32_0 : i32, i32, i32
  }
  func.func @transform_1(%arg0: i32, %arg1: memref<2xf32, #tpu.memory_space<smem>>, %arg2: memref<2xf32, #tpu.memory_space<smem>>, %arg3: memref<2x9xf32, #tpu.memory_space<smem>>) -> (i32, i32, i32) {
    %c0_i32 = arith.constant 0 : i32
    %c0_i32_0 = arith.constant 0 : i32
    %c0_i32_1 = arith.constant 0 : i32
    %c0_i32_2 = arith.constant 0 : i32
    return %c0_i32, %c0_i32_0, %c0_i32_1 : i32, i32, i32
  }
  func.func @transform_2(%arg0: i32, %arg1: memref<2xf32, #tpu.memory_space<smem>>, %arg2: memref<2xf32, #tpu.memory_space<smem>>, %arg3: memref<2x9xf32, #tpu.memory_space<smem>>) -> (i32, i32, i32) {
    %c0_i32 = arith.constant 0 : i32
    %c0_i32_0 = arith.constant 0 : i32
    %c0_i32_1 = arith.constant 0 : i32
    %c0_i32_2 = arith.constant 0 : i32
    return %c0_i32, %c0_i32_0, %c0_i32_1 : i32, i32, i32
  }
  func.func @transform_3(%arg0: i32, %arg1: memref<2xf32, #tpu.memory_space<smem>>, %arg2: memref<2xf32, #tpu.memory_space<smem>>, %arg3: memref<2x9xf32, #tpu.memory_space<smem>>) -> (i32, i32) {
    %c0_i32 = arith.constant 0 : i32
    %c0_i32_0 = arith.constant 0 : i32
    %c0_i32_1 = arith.constant 0 : i32
    return %c0_i32, %c0_i32_0 : i32, i32
  }
  func.func @transform_4(%arg0: i32, %arg1: memref<2xf32, #tpu.memory_space<smem>>, %arg2: memref<2xf32, #tpu.memory_space<smem>>, %arg3: memref<2x9xf32, #tpu.memory_space<smem>>) -> (i32, i32, i32) {
    %c0_i32 = arith.constant 0 : i32
    %c0_i32_0 = arith.constant 0 : i32
    %c0_i32_1 = arith.constant 0 : i32
    %c0_i32_2 = arith.constant 0 : i32
    return %c0_i32, %c0_i32_0, %c0_i32_1 : i32, i32, i32
  }
  func.func @transform_5(%arg0: i32, %arg1: memref<2xf32, #tpu.memory_space<smem>>, %arg2: memref<2xf32, #tpu.memory_space<smem>>, %arg3: memref<2x9xf32, #tpu.memory_space<smem>>) -> (i32, i32, i32) {
    %c0_i32 = arith.constant 0 : i32
    %c0_i32_0 = arith.constant 0 : i32
    %c0_i32_1 = arith.constant 0 : i32
    %c0_i32_2 = arith.constant 0 : i32
    return %c0_i32, %c0_i32_0, %c0_i32_1 : i32, i32, i32
  }
  func.func @transform_6(%arg0: i32, %arg1: memref<2xf32, #tpu.memory_space<smem>>, %arg2: memref<2xf32, #tpu.memory_space<smem>>, %arg3: memref<2x9xf32, #tpu.memory_space<smem>>) -> (i32, i32) {
    %c0_i32 = arith.constant 0 : i32
    %c0_i32_0 = arith.constant 0 : i32
    %c0_i32_1 = arith.constant 0 : i32
    return %c0_i32, %c0_i32_0 : i32, i32
  }
  func.func @transform_7(%arg0: i32, %arg1: memref<2xf32, #tpu.memory_space<smem>>, %arg2: memref<2xf32, #tpu.memory_space<smem>>, %arg3: memref<2x9xf32, #tpu.memory_space<smem>>) -> (i32, i32, i32) {
    %c0_i32 = arith.constant 0 : i32
    %c0_i32_0 = arith.constant 0 : i32
    %c0_i32_1 = arith.constant 0 : i32
    %c0_i32_2 = arith.constant 0 : i32
    return %c0_i32, %c0_i32_0, %c0_i32_1 : i32, i32, i32
  }
  func.func @transform_8(%arg0: i32, %arg1: memref<2xf32, #tpu.memory_space<smem>>, %arg2: memref<2xf32, #tpu.memory_space<smem>>, %arg3: memref<2x9xf32, #tpu.memory_space<smem>>) -> (i32, i32, i32) {
    %c0_i32 = arith.constant 0 : i32
    %c0_i32_0 = arith.constant 0 : i32
    %c0_i32_1 = arith.constant 0 : i32
    %c0_i32_2 = arith.constant 0 : i32
    return %c0_i32, %c0_i32_0, %c0_i32_1 : i32, i32, i32
  }
  func.func @transform_9(%arg0: i32, %arg1: memref<2xf32, #tpu.memory_space<smem>>, %arg2: memref<2xf32, #tpu.memory_space<smem>>, %arg3: memref<2x9xf32, #tpu.memory_space<smem>>) -> (i32, i32) {
    %c0_i32 = arith.constant 0 : i32
    %c0_i32_0 = arith.constant 0 : i32
    %c0_i32_1 = arith.constant 0 : i32
    return %c0_i32, %c0_i32_0 : i32, i32
  }
  func.func @transform_10(%arg0: i32, %arg1: memref<2xf32, #tpu.memory_space<smem>>, %arg2: memref<2xf32, #tpu.memory_space<smem>>, %arg3: memref<2x9xf32, #tpu.memory_space<smem>>) -> (i32, i32, i32) {
    %c0_i32 = arith.constant 0 : i32
    %c0_i32_0 = arith.constant 0 : i32
    %c0_i32_1 = arith.constant 0 : i32
    %c0_i32_2 = arith.constant 0 : i32
    return %c0_i32, %c0_i32_0, %c0_i32_1 : i32, i32, i32
  }
  func.func @transform_11(%arg0: i32, %arg1: memref<2xf32, #tpu.memory_space<smem>>, %arg2: memref<2xf32, #tpu.memory_space<smem>>, %arg3: memref<2x9xf32, #tpu.memory_space<smem>>) -> (i32, i32, i32) {
    %c0_i32 = arith.constant 0 : i32
    %c0_i32_0 = arith.constant 0 : i32
    %c0_i32_1 = arith.constant 0 : i32
    %c0_i32_2 = arith.constant 0 : i32
    return %c0_i32, %c0_i32_0, %c0_i32_1 : i32, i32, i32
  }
  func.func @transform_12(%arg0: i32, %arg1: memref<2xf32, #tpu.memory_space<smem>>, %arg2: memref<2xf32, #tpu.memory_space<smem>>, %arg3: memref<2x9xf32, #tpu.memory_space<smem>>) -> (i32, i32) {
    %c0_i32 = arith.constant 0 : i32
    %c0_i32_0 = arith.constant 0 : i32
    %c0_i32_1 = arith.constant 0 : i32
    return %c0_i32, %c0_i32_0 : i32, i32
  }
  func.func @transform_13(%arg0: i32, %arg1: memref<2xf32, #tpu.memory_space<smem>>, %arg2: memref<2xf32, #tpu.memory_space<smem>>, %arg3: memref<2x9xf32, #tpu.memory_space<smem>>) -> (i32, i32) {
    %c0_i32 = arith.constant 0 : i32
    %c0_i32_0 = arith.constant 0 : i32
    %c0_i32_1 = arith.constant 0 : i32
    return %c0_i32, %c0_i32_0 : i32, i32
  }
  func.func @transform_14(%arg0: i32, %arg1: memref<2xf32, #tpu.memory_space<smem>>, %arg2: memref<2xf32, #tpu.memory_space<smem>>, %arg3: memref<2x9xf32, #tpu.memory_space<smem>>) -> (i32, i32) {
    %c0_i32 = arith.constant 0 : i32
    %c0_i32_0 = arith.constant 0 : i32
    %c0_i32_1 = arith.constant 0 : i32
    return %c0_i32, %c0_i32_0 : i32, i32
  }
  func.func @transform_15(%arg0: i32, %arg1: memref<2xf32, #tpu.memory_space<smem>>, %arg2: memref<2xf32, #tpu.memory_space<smem>>, %arg3: memref<2x9xf32, #tpu.memory_space<smem>>) -> (i32, i32) {
    %c0_i32 = arith.constant 0 : i32
    %c0_i32_0 = arith.constant 0 : i32
    %c0_i32_1 = arith.constant 0 : i32
    return %c0_i32, %c0_i32_0 : i32, i32
  }
  func.func @transform_16(%arg0: i32, %arg1: memref<2xf32, #tpu.memory_space<smem>>, %arg2: memref<2xf32, #tpu.memory_space<smem>>, %arg3: memref<2x9xf32, #tpu.memory_space<smem>>) -> (i32, i32) {
    %c0_i32 = arith.constant 0 : i32
    %c0_i32_0 = arith.constant 0 : i32
    %c0_i32_1 = arith.constant 0 : i32
    return %c0_i32, %c0_i32_0 : i32, i32
  }
  func.func @transform_17(%arg0: i32, %arg1: memref<2xf32, #tpu.memory_space<smem>>, %arg2: memref<2xf32, #tpu.memory_space<smem>>, %arg3: memref<2x9xf32, #tpu.memory_space<smem>>) -> (i32, i32, i32) {
    %c0_i32 = arith.constant 0 : i32
    %c0_i32_0 = arith.constant 0 : i32
    %c0_i32_1 = arith.constant 0 : i32
    return %arg0, %c0_i32, %c0_i32_0 : i32, i32, i32
  }
  func.func @transform_18(%arg0: i32, %arg1: memref<2xf32, #tpu.memory_space<smem>>, %arg2: memref<2xf32, #tpu.memory_space<smem>>, %arg3: memref<2x9xf32, #tpu.memory_space<smem>>) -> (i32, i32, i32) {
    %c0_i32 = arith.constant 0 : i32
    %c0_i32_0 = arith.constant 0 : i32
    %c0_i32_1 = arith.constant 0 : i32
    return %arg0, %c0_i32, %c0_i32_0 : i32, i32, i32
  }
  func.func @transform_19(%arg0: i32, %arg1: memref<2xf32, #tpu.memory_space<smem>>, %arg2: memref<2xf32, #tpu.memory_space<smem>>, %arg3: memref<2x9xf32, #tpu.memory_space<smem>>) -> (i32, i32, i32) {
    %c0_i32 = arith.constant 0 : i32
    %c0_i32_0 = arith.constant 0 : i32
    %c0_i32_1 = arith.constant 0 : i32
    return %arg0, %c0_i32, %c0_i32_0 : i32, i32, i32
  }
}

</mosaic_0001>

<llo_original>
// kernel: custom-call.11
$region0: #{custom-call.11}
  %s0 = inlined_call_operand.vmem [shape: f32[2,3,3], index: 0, kind: input, shape index: {}]
  %s1 = inlined_call_operand.vmem [shape: f32[2,3,3], index: 1, kind: output, shape index: {0}]
  %s2 = inlined_call_operand.hbm [shape: s32[2,3], index: 2, kind: output, shape index: {1}]
  %s3 = inlined_call_operand.vmem [shape: s32[2,3], index: 3, kind: output, shape index: {2}]
  %4 = xla_tuple %s1, %s2, %s3
  $region1: #{custom-call.11} parent=0
    #allocation0 [shape = 'u8[4096]{0}', space=vmem, size = 0x1000, scoped, tag = 'operand span for operand 0']
    #allocation1 [shape = 'u8[4096]{0}', space=vmem, size = 0x1000, scoped, tag = 'packed  for operand 0']
    #allocation2 [shape = 'u8[4096]{0}', space=vmem, size = 0x1000, scoped, tag = 'operand span for operand 1']
    #allocation3 [shape = 'u8[4096]{0}', space=vmem, size = 0x1000, scoped, tag = 'packed  for operand 1']
    #allocation4 [shape = 'u8[4096]{0}', space=vmem, size = 0x1000, scoped, tag = 'operand span for operand 2']
    #allocation5 [shape = 'u8[2048]{0}', space=vmem, size = 0x800, scoped, tag = 'packed  for operand 2']
    #allocation6 [shape = 's32[2]{0}', space=sflag, size = 0x8, scoped, tag = 'scoped memory for custom-call.11']
    #allocation7 [shape = 'u8[4096]{0}', space=vmem, size = 0x1000, scoped, tag = 'operand span for operand 3']
    #allocation8 [shape = 'u8[2048]{0}', space=vmem, size = 0x800, scoped, tag = 'packed  for operand 3']
    %5 = vsyncpa [#allocation6], 0
    %s6 = scalar_lea.sflag [#allocation6], 1
    %7 = vsyncpa %s6, 0
    loop: start=0, step=1, limit=4
    $region2: #{custom-call.11} parent=1 // loop_pre_header
      _
    $region3: #{custom-call.11} parent=1 // loop_header
      %s9 = sphi 0, %s13
      %p10 = scmp.ge.s32.totalorder %s9, 4
      %s21 = sphi 0, %s23
      %s24 = sphi 0, %s21
      %s25 = sphi 0, %s24
      %s41 = sphi 0, %s25
      %s49 = sphi 0, %s51
      %s52 = sphi 0, %s49
      %s53 = sphi 0, %s52
      %s69 = sphi 0, %s53
    $region4: #{custom-call.11} parent=1 // loop_header_branch
      %12 = sbr.rel (%p10) target = $region8
    $region5: #{custom-call.11} parent=1 // loop_body
      %s14 = ssub.s32 %s9, 1
      %s15 = ssub.s32 %s9, 2
      %s16 = sadd.s32 %s9, 1
      %s17 = sshrl.u32 %s9, 3
      %s18 = sshrl.u32 %s16, 3
      %s19 = ssub.s32 %s17, %s18
      %p20 = scmp.eq.s32.totalorder %s19, 0
      %s22 = sadd.s32 %s21, 1
      %s23 = scalar_select %p20, %s21, %s22
      %p26 = pneg %p20
      %p27 = scmp.eq.s32.totalorder %s9, 1
      %p28 = por %p26, %p27
      %p29 = scmp.ne.s32.totalorder %s21, %s24
      %p30 = scmp.eq.s32.totalorder %s9, 0
      %p31 = por %p29, %p30
      %p32 = scmp.ne.s32.totalorder %s21, %s24
      %p33 = scmp.eq.s32.totalorder %s14, 1
      %p34 = por %p32, %p33
      %p35 = scmp.ne.s32.totalorder %s24, %s25
      %p36 = scmp.eq.s32.totalorder %s14, 0
      %p37 = por %p35, %p36
      %p38 = scmp.ne.s32.totalorder %s24, %s25
      %p39 = scmp.eq.s32.totalorder %s15, 1
      %p40 = por %p38, %p39
      %p42 = scmp.ne.s32.totalorder %s25, %s41
      %p43 = scmp.eq.s32.totalorder %s15, 0
      %p44 = por %p42, %p43
      %s45 = sshrl.u32 %s9, 3
      %s46 = sshrl.u32 %s16, 3
      %s47 = ssub.s32 %s45, %s46
      %p48 = scmp.eq.s32.totalorder %s47, 0
      %s50 = sadd.s32 %s49, 1
      %s51 = scalar_select %p48, %s49, %s50
      %p54 = pneg %p48
      %p55 = scmp.eq.s32.totalorder %s9, 1
      %p56 = por %p54, %p55
      %p57 = scmp.ne.s32.totalorder %s49, %s52
      %p58 = scmp.eq.s32.totalorder %s9, 0
      %p59 = por %p57, %p58
      %p60 = scmp.ne.s32.totalorder %s49, %s52
      %p61 = scmp.eq.s32.totalorder %s14, 1
      %p62 = por %p60, %p61
      %p63 = scmp.ne.s32.totalorder %s52, %s53
      %p64 = scmp.eq.s32.totalorder %s14, 0
      %p65 = por %p63, %p64
      %p66 = scmp.ne.s32.totalorder %s52, %s53
      %p67 = scmp.eq.s32.totalorder %s15, 1
      %p68 = por %p66, %p67
      %p70 = scmp.ne.s32.totalorder %s53, %s69
      %p71 = scmp.eq.s32.totalorder %s15, 0
      %p72 = por %p70, %p71
      %p73 = scmp.le.s32.totalorder 1, %s9
      %p74 = scmp.lt.s32.totalorder %s9, 3
      %p75 = pnand %p73, %p74
      %p76 = pneg %p75
      // Predicated region
      $region9: #{custom-call.11} parent=5 // pred_check
        _
      $region10: #{custom-call.11} parent=5 // pred_check_branch
        %78 = sbr.rel (%p75) target = $region12
      $region11: #{custom-call.11} parent=5 // pred_region
        %s79 = ssub.s32 %s9, 1
      $region12: #{custom-call.11} parent=5 // pred_fallthru
        _
      %p80 = scmp.lt.s32.totalorder %s9, 2
      // Predicated region
      $region13: #{custom-call.11} parent=5 // pred_check
        %p81 = pneg %p80
      $region14: #{custom-call.11} parent=5 // pred_check_branch
        %83 = sbr.rel (%p81) target = $region16
      $region15: #{custom-call.11} parent=5 // pred_region
        %s84 = sand.u32 %s9, 1
        %s85 = sand.u32 %s9, 1
        %s86 = smul.addr %s85, 4
        %s87 = scalar_lea.vmem [#allocation1], %s86
        %s88 = smul.addr %s9, 4
        %s89 = scalar_lea.vmem %s0, %s88
        // Predicated region
        $region17: #{custom-call.11} parent=15 // pred_check
          _
        $region18: #{custom-call.11} parent=15 // pred_check_branch
          %91 = sbr.rel (0) target = $region20
        $region19: #{custom-call.11} parent=15 // pred_region
          // Predicated region
          $region21: #{custom-call.11} parent=19 // pred_check
            _
          $region22: #{custom-call.11} parent=19 // pred_check_branch
            %93 = sbr.rel target = $region24
          $region23: #{custom-call.11} parent=19 // pred_region
            // Predicated region
            $region36: #{custom-call.11} parent=23 // pred_check
              _
            $region37: #{custom-call.11} parent=23 // pred_check_branch
              %109 = sbr.rel (0) target = $region39
            $region38: #{custom-call.11} parent=23 // pred_region
              %s111 = ssub.s32 16, 1
              loop: start=0, step=1, limit=1
              $region40: #{custom-call.11} parent=38 // loop_pre_header
                _
              $region41: #{custom-call.11} parent=38 // loop_header
                %s113 = sphi 0, %s117
                %p114 = scmp.ge.s32.totalorder %s113, 1
                %s118 = sphi %s89, %s89
                %s119 = sphi %s87, %s87
              $region42: #{custom-call.11} parent=38 // loop_header_branch
                %116 = sbr.rel (%p114) target = $region46
              $region43: #{custom-call.11} parent=38 // loop_body
                %v120 = vld [vmem:[%s118] sm:%s111]
                %121 = vst [vmem:[%s119] sm:%s111] %v120
              $region44: #{custom-call.11} parent=38 // loop_footer
                %s117 = sadd.s32 1, %s113
              $region45: #{custom-call.11} parent=38 // loop_footer_branch
                %112 = sbr.rel target = $region41
              $region46: #{custom-call.11} parent=38 // loop_exit
                _
            $region39: #{custom-call.11} parent=23 // pred_fallthru
              _
          $region24: #{custom-call.11} parent=19 // pred_fallthru
            _
          // Predicated region
          $region25: #{custom-call.11} parent=19 // pred_check
            _
          $region26: #{custom-call.11} parent=19 // pred_check_branch
            %95 = sbr.rel (0) target = $region28
          $region27: #{custom-call.11} parent=19 // pred_region
            %s97 = ssub.s32 16, 1
            loop: start=0, step=1, limit=1
            $region29: #{custom-call.11} parent=27 // loop_pre_header
              _
            $region30: #{custom-call.11} parent=27 // loop_header
              %s99 = sphi 0, %s103
              %p100 = scmp.ge.s32.totalorder %s99, 1
              %s104 = sphi %s89, %s89
              %s105 = sphi %s87, %s87
            $region31: #{custom-call.11} parent=27 // loop_header_branch
              %102 = sbr.rel (%p100) target = $region35
            $region32: #{custom-call.11} parent=27 // loop_body
              %v106 = vld [vmem:[%s104] sm:%s97]
              %107 = vst [vmem:[%s105] sm:%s97] %v106
            $region33: #{custom-call.11} parent=27 // loop_footer
              %s103 = sadd.s32 1, %s99
            $region34: #{custom-call.11} parent=27 // loop_footer_branch
              %98 = sbr.rel target = $region30
            $region35: #{custom-call.11} parent=27 // loop_exit
              _
          $region28: #{custom-call.11} parent=19 // pred_fallthru
            _
        $region20: #{custom-call.11} parent=15 // pred_fallthru
          _
        %122 = vnop
      $region16: #{custom-call.11} parent=5 // pred_fallthru
        _
      %p123 = scmp.le.s32.totalorder 1, %s9
      %p124 = scmp.lt.s32.totalorder %s9, 3
      %p125 = pnand %p123, %p124
      %p126 = pneg %p125
      // Predicated region
      $region47: #{custom-call.11} parent=5 // pred_check
        _
      $region48: #{custom-call.11} parent=5 // pred_check_branch
        %128 = sbr.rel (%p125) target = $region50
      $region49: #{custom-call.11} parent=5 // pred_region
        #allocation9 [shape = 's32[3,128]{1,0}', space=vmem, size = 0x1000, scoped, tag = 'scratch for permutations']
        %s129 = ssub.s32 %s9, 1
        %s130 = sand.u32 %s14, 1
        %s131 = sand.u32 %s14, 1
        %s132 = smul.addr %s131, 4
        %s133 = scalar_lea.vmem [#allocation1], %s132
        %s134 = sand.u32 %s14, 1
        %s135 = sand.u32 %s14, 1
        %s136 = smul.addr %s135, 4
        %s137 = scalar_lea.vmem [#allocation1], %s136
        %s138 = sand.u32 %s14, 1
        %s139 = sand.u32 %s14, 1
        %s140 = smul.addr %s139, 4
        %s141 = scalar_lea.vmem [#allocation3], %s140
        %p142 = pneg %p37
        %p143 = pneg %p34
        %s144 = sand.u32 %s24, 1
        %s145 = scalar_lea.sflag [#allocation6], %s144
        %s146 = sand.u32 %s24, 1
        %s147 = smul.addr %s146, 2
        %s148 = scalar_lea.vmem [#allocation5], %s147
        %p149 = pneg %p65
        %p150 = pneg %p62
        %s151 = sand.u32 %s52, 1
        %s152 = sand.u32 %s52, 1
        %s153 = smul.addr %s152, 2
        %s154 = scalar_lea.vmem [#allocation8], %s153
        %s156 = ssub.s32 16, 1
        %v157 = vld [vmem:[%s137] sm:%s156]
        %158 = vst [vmem:[#allocation0] sm:%s156] %v157
        %s159 = sshrl.u32 %s14, 3
        %s160 = sshrl.u32 %s14, 3
        %v161 = vld [vmem:[#allocation0] sm:$0xff]
        %162 = vst [vmem:[#allocation2] sm:$0xff] %v161
        %s163 = sand.u32 %s14, 7
        %s164 = scalar_lea.vmem [#allocation4], %s163
        %s165 = sand.u32 %s14, 7
        %s166 = scalar_lea.vmem [#allocation7], %s165
        %167 = vst [vmem:[%s164] sm:$0x1] 0
        %v168 = vlaneseq
        %v169 = vshrl.u32 %v168, 7
        %v170 = vmov %v169
        %172 = vst [vmem:[#allocation9] sm:$0xff] %v170
        loop: start=0, step=1, limit=3
        $region52: #{custom-call.11} parent=49 // loop_pre_header
          _
        $region53: #{custom-call.11} parent=49 // loop_header
          %s174 = sphi 0, %s178
          %p175 = scmp.ge.s32.totalorder %s174, 3
        $region54: #{custom-call.11} parent=49 // loop_header_branch
          %177 = sbr.rel (%p175) target = $region58
        $region55: #{custom-call.11} parent=49 // loop_body
          %v179 = vstv %s174
          %v180 = vlaneseq
          %v181 = vshrl.u32 %v180, 7
          %v182 = vmov %v181
          %v183 = vld [vmem:[#allocation2] sm:$0xff]
          %v184 = vand.u32 2147483647, %v183
          %v186 = vstv %s174
          %vm187 = vcmp.ge.s32.totalorder %v182, %v186
          %vm188 = vcmp.lt.s32.totalorder %v182, 3
          %vm189 = vmand %vm187, %vm188
          %vm190 = vcmp.lt.f32.partialorder -inf, %v184
          %vm191 = vmand %vm189, %vm190
          %v192 = vsel %vm191, %v182, %v179
          %v193 = vsel %vm191, %v184, -inf
          %v194 = vrot.slane %v193, 1
          %v195 = vrot.slane %v192, 1
          %vm196 = vcmp.ge.f32.partialorder %v194, %v193
          %v197 = vsel %vm196, %v194, %v193
          %v198 = vsel %vm196, %v195, %v192
          %v199 = vrot.slane %v194, 1
          %v200 = vrot.slane %v195, 1
          %vm201 = vcmp.ge.f32.partialorder %v199, %v197
          %v202 = vsel %vm201, %v199, %v197
          %v203 = vsel %vm201, %v200, %v198
          %v204 = vrot.slane %v199, 1
          %v205 = vrot.slane %v200, 1
          %vm206 = vcmp.ge.f32.partialorder %v204, %v202
          %v207 = vsel %vm206, %v204, %v202
          %v208 = vsel %vm206, %v205, %v203
          %v209 = vrot.slane %v204, 1
          %v210 = vrot.slane %v205, 1
          %vm211 = vcmp.ge.f32.partialorder %v209, %v207
          %v212 = vsel %vm211, %v209, %v207
          %v213 = vsel %vm211, %v210, %v208
          %v214 = vrot.slane %v209, 1
          %v215 = vrot.slane %v210, 1
          %vm216 = vcmp.ge.f32.partialorder %v214, %v212
          %v217 = vsel %vm216, %v214, %v212
          %v218 = vsel %vm216, %v215, %v213
          %v219 = vrot.slane %v214, 1
          %v220 = vrot.slane %v215, 1
          %vm221 = vcmp.ge.f32.partialorder %v219, %v217
          %v222 = vsel %vm221, %v219, %v217
          %v223 = vsel %vm221, %v220, %v218
          %v224 = vrot.slane %v219, 1
          %v225 = vrot.slane %v220, 1
          %vm226 = vcmp.ge.f32.partialorder %v224, %v222
          %v227 = vsel %vm226, %v224, %v222
          %v228 = vsel %vm226, %v225, %v223
          %s229 = ssub.s32 128, %s174
          %230 = vrot.lane.b32.xlu0 %v228, %s229
          %v231 = vpop.permute.xlu0 %230
          %s232 = vtos %v231
          %v233 = vstv %s174
          %v234 = vlaneseq
          %v235 = vand.u32 %v234, 127
          %vm236 = vcmp.eq.s32.totalorder %v235, %v233
          %v237 = vstv %s232
          %v238 = vld [vmem:[%s164] ss:$0 sm:$0xff]
          %v239 = vsel %vm236, %v237, %v238
          %240 = vst [vmem:[%s164] sm:$0x1] %v239
          %s241 = scalar_lea.vmem [#allocation2], %s174
          %s242 = scalar_lea.vmem [#allocation2], %s232
          %v243 = vld [vmem:[%s241] ss:$0 sm:$0xff]
          %v244 = vld [vmem:[%s242] ss:$0 sm:$0xff]
          %245 = vst [vmem:[%s242] sm:$0x1] %v243
          %246 = vst [vmem:[%s241] sm:$0x1] %v244
          %s247 = scalar_lea.vmem [#allocation9], %s174
          %s248 = scalar_lea.vmem [#allocation9], %s232
          %v249 = vld [vmem:[%s247] ss:$0 sm:$0xff]
          %v250 = vld [vmem:[%s248] ss:$0 sm:$0xff]
          %251 = vst [vmem:[%s248] sm:$0x1] %v249
          %252 = vst [vmem:[%s247] sm:$0x1] %v250
          %vm253 = vcmp.ne.f32.partialorder %v244, 0.0
          %vm254 = vmand %vm236, %vm253
          %v255 = vsel %vm254, %v244, 1.0
          %v256 = vlaneseq
          %v257 = vand.u32 %v256, 127
          %v258 = vstv %s174
          %vm259 = vcmp.gt.s32.totalorder %v257, %v258
          %v260 = vsel %vm259, %v244, 0.0
          %v261 = vlaneseq
          %v262 = vshrl.u32 %v261, 7
          %v263 = vmov %v262
          %v264 = vld [vmem:[#allocation2] sm:$0xff]
          %v266 = vstv %s174
          %vm267 = vcmp.gt.s32.totalorder %v263, %v266
          %v268 = vsel %vm267, %v255, 1.0
          %v269 = vrcp.pop %v268
          %v270 = vmul.f32 %v268, %v269
          %v271 = vsub.f32 1.0, %v270
          %v272 = vmul.f32 %v269, %v271
          %v273 = vadd.f32 %v269, %v272
          %vm274 = vweird.f32 %v268
          %vm275 = vweird.f32 %v269
          %vm276 = vmor %vm274, %vm275
          %v277 = vsel %vm276, %v269, %v273
          %v278 = vand.u32 2147483647, %v268
          %vm279 = vcmp.eq.f32.partialorder %v278, 8.507059e+37
          %v280 = vand.u32 %v268, 2147483648
          %v281 = vor.u32 1.1754944e-38, %v280
          %v282 = vsel %vm279, %v281, %v277
          %v283 = vmul.f32 %v264, %v282
          %vm284 = vmand %vm267, %vm236
          %v285 = vsel %vm284, %v283, 0.0
          %286 = vadd.xlane.f32.xlu0 %v285
          %v287 = vpop.xlane.xlu0 %286
          %v288 = vmul.f32 %v287, %v260
          %v289 = vsub.f32 %v283, %v288
          %290 = vst [vmem:[#allocation2] sm:$0xff] %v289
        $region56: #{custom-call.11} parent=49 // loop_footer
          %s178 = sadd.s32 1, %s174
        $region57: #{custom-call.11} parent=49 // loop_footer_branch
          %173 = sbr.rel target = $region53
        $region58: #{custom-call.11} parent=49 // loop_exit
          _
        %v291 = vld [vmem:[#allocation9] sm:$0xff]
        %s292 = scalar_lea.vmem [#allocation9], 8
        %s293 = scalar_lea.vmem [#allocation9], 16
        %s294 = scalar_lea.vmem [#allocation9], 24
        %s295 = scalar_lea.vmem [#allocation9], 32
        %s296 = scalar_lea.vmem [#allocation9], 40
        %s297 = scalar_lea.vmem [#allocation9], 48
        %s298 = scalar_lea.vmem [#allocation9], 56
        %s299 = scalar_lea.vmem [#allocation9], 64
        %s300 = scalar_lea.vmem [#allocation9], 72
        %s301 = scalar_lea.vmem [#allocation9], 80
        %s302 = scalar_lea.vmem [#allocation9], 88
        %s303 = scalar_lea.vmem [#allocation9], 96
        %s304 = scalar_lea.vmem [#allocation9], 104
        %s305 = scalar_lea.vmem [#allocation9], 112
        %s306 = scalar_lea.vmem [#allocation9], 120
        %307 = vxpose.xlu0.b32.start [1/16] %v291, 128
        %308 = vxpose.xlu0.b32.cont [2/16] 0, 128
        %309 = vxpose.xlu0.b32.cont [3/16] 0, 128
        %310 = vxpose.xlu0.b32.cont [4/16] 0, 128
        %311 = vxpose.xlu0.b32.cont [5/16] 0, 128
        %312 = vxpose.xlu0.b32.cont [6/16] 0, 128
        %313 = vxpose.xlu0.b32.cont [7/16] 0, 128
        %314 = vxpose.xlu0.b32.cont [8/16] 0, 128
        %315 = vxpose.xlu0.b32.cont [9/16] 0, 128
        %316 = vxpose.xlu0.b32.cont [10/16] 0, 128
        %317 = vxpose.xlu0.b32.cont [11/16] 0, 128
        %318 = vxpose.xlu0.b32.cont [12/16] 0, 128
        %319 = vxpose.xlu0.b32.cont [13/16] 0, 128
        %320 = vxpose.xlu0.b32.cont [14/16] 0, 128
        %321 = vxpose.xlu0.b32.cont [15/16] 0, 128
        %322 = vxpose.xlu0.b32.end [16/16] 0, 128
        %v323 = vpop.trf.xlu0
        %v324 = vpop.trf.xlu0
        %v325 = vpop.trf.xlu0
        %v326 = vpop.trf.xlu0
        %v327 = vpop.trf.xlu0
        %v328 = vpop.trf.xlu0
        %v329 = vpop.trf.xlu0
        %v330 = vpop.trf.xlu0
        %v331 = vpop.trf.xlu0
        %v332 = vpop.trf.xlu0
        %v333 = vpop.trf.xlu0
        %v334 = vpop.trf.xlu0
        %v335 = vpop.trf.xlu0
        %v336 = vpop.trf.xlu0
        %v337 = vpop.trf.xlu0
        %v338 = vpop.trf.xlu0
        %339 = vst [vmem:[%s166] sm:$0x1] %v323
        %s341 = ssub.s32 16, 1
        %v342 = vld [vmem:[#allocation2] sm:%s341]
        %s344 = ssub.s32 16, 1
        %345 = vst [vmem:[%s141] sm:%s344] %v342
        %s347 = ssub.s32 4, 1
        %v348 = vld [vmem:[#allocation4] sm:%s347]
        %s350 = ssub.s32 4, 1
        %351 = vst [vmem:[%s148] sm:%s350] %v348
        %s353 = ssub.s32 4, 1
        %v354 = vld [vmem:[#allocation7] sm:%s353]
        %s356 = ssub.s32 4, 1
        %357 = vst [vmem:[%s154] sm:%s356] %v354
        %s358 = sand.u32 %s14, 1
        %s359 = sand.u32 %s14, 1
        %s360 = smul.addr %s359, 4
        %s361 = scalar_lea.vmem [#allocation3], %s360
        %s362 = sand.u32 %s24, 1
        %s363 = scalar_lea.sflag [#allocation6], %s362
        %s364 = sand.u32 %s24, 1
        %s365 = smul.addr %s364, 2
        %s366 = scalar_lea.vmem [#allocation5], %s365
        %s367 = sand.u32 %s52, 1
        %s368 = sand.u32 %s52, 1
        %s369 = smul.addr %s368, 2
        %s370 = scalar_lea.vmem [#allocation8], %s369
        %s371 = smul.addr %s14, 4
        %s372 = scalar_lea.vmem %s1, %s371
        // Predicated region
        $region59: #{custom-call.11} parent=49 // pred_check
          _
        $region60: #{custom-call.11} parent=49 // pred_check_branch
          %374 = sbr.rel (0) target = $region62
        $region61: #{custom-call.11} parent=49 // pred_region
          // Predicated region
          $region63: #{custom-call.11} parent=61 // pred_check
            _
          $region64: #{custom-call.11} parent=61 // pred_check_branch
            %376 = sbr.rel target = $region66
          $region65: #{custom-call.11} parent=61 // pred_region
            // Predicated region
            $region78: #{custom-call.11} parent=65 // pred_check
              _
            $region79: #{custom-call.11} parent=65 // pred_check_branch
              %392 = sbr.rel (0) target = $region81
            $region80: #{custom-call.11} parent=65 // pred_region
              %s394 = ssub.s32 16, 1
              loop: start=0, step=1, limit=1
              $region82: #{custom-call.11} parent=80 // loop_pre_header
                _
              $region83: #{custom-call.11} parent=80 // loop_header
                %s396 = sphi 0, %s400
                %p397 = scmp.ge.s32.totalorder %s396, 1
                %s401 = sphi %s361, %s361
                %s402 = sphi %s372, %s372
              $region84: #{custom-call.11} parent=80 // loop_header_branch
                %399 = sbr.rel (%p397) target = $region88
              $region85: #{custom-call.11} parent=80 // loop_body
                %v403 = vld [vmem:[%s401] sm:%s394]
                %404 = vst [vmem:[%s402] sm:%s394] %v403
              $region86: #{custom-call.11} parent=80 // loop_footer
                %s400 = sadd.s32 1, %s396
              $region87: #{custom-call.11} parent=80 // loop_footer_branch
                %395 = sbr.rel target = $region83
              $region88: #{custom-call.11} parent=80 // loop_exit
                _
            $region81: #{custom-call.11} parent=65 // pred_fallthru
              _
          $region66: #{custom-call.11} parent=61 // pred_fallthru
            _
          // Predicated region
          $region67: #{custom-call.11} parent=61 // pred_check
            _
          $region68: #{custom-call.11} parent=61 // pred_check_branch
            %378 = sbr.rel (0) target = $region70
          $region69: #{custom-call.11} parent=61 // pred_region
            %s380 = ssub.s32 16, 1
            loop: start=0, step=1, limit=1
            $region71: #{custom-call.11} parent=69 // loop_pre_header
              _
            $region72: #{custom-call.11} parent=69 // loop_header
              %s382 = sphi 0, %s386
              %p383 = scmp.ge.s32.totalorder %s382, 1
              %s387 = sphi %s361, %s361
              %s388 = sphi %s372, %s372
            $region73: #{custom-call.11} parent=69 // loop_header_branch
              %385 = sbr.rel (%p383) target = $region77
            $region74: #{custom-call.11} parent=69 // loop_body
              %v389 = vld [vmem:[%s387] sm:%s380]
              %390 = vst [vmem:[%s388] sm:%s380] %v389
            $region75: #{custom-call.11} parent=69 // loop_footer
              %s386 = sadd.s32 1, %s382
            $region76: #{custom-call.11} parent=69 // loop_footer_branch
              %381 = sbr.rel target = $region72
            $region77: #{custom-call.11} parent=69 // loop_exit
              _
          $region70: #{custom-call.11} parent=61 // pred_fallthru
            _
        $region62: #{custom-call.11} parent=49 // pred_fallthru
          _
        %405 = vnop
        // Predicated region
        $region89: #{custom-call.11} parent=49 // pred_check
          %p406 = pneg %p34
        $region90: #{custom-call.11} parent=49 // pred_check_branch
          %408 = sbr.rel (%p406) target = $region92
        $region91: #{custom-call.11} parent=49 // pred_region
          %s409 = sshrl.u32 %s14, 3
          %411 = vsyncadd %s363, 0
          %s412 = smul.addr %s409, 2
          %s413 = scalar_lea.hbm %s2, %s412
          %s415 = sshll.u32 %s366, 4
          %s416 = int_to_ptr.vmem [resolvable:$true] %s415
          %s417 = sshll.u32 %s413, 4
          %s418 = int_to_ptr.hbm [resolvable:$true] %s417
          %420 = dma.vmem_to_hbm [thread:$0]  %s416, 32, %s418, %s363
        $region92: #{custom-call.11} parent=49 // pred_fallthru
          _
        // Predicated region
        $region93: #{custom-call.11} parent=49 // pred_check
          %p421 = pneg %p62
        $region94: #{custom-call.11} parent=49 // pred_check_branch
          %423 = sbr.rel (%p421) target = $region96
        $region95: #{custom-call.11} parent=49 // pred_region
          %s424 = sshrl.u32 %s14, 3
          %s425 = smul.addr %s424, 2
          %s426 = scalar_lea.vmem %s3, %s425
          // Predicated region
          $region97: #{custom-call.11} parent=95 // pred_check
            _
          $region98: #{custom-call.11} parent=95 // pred_check_branch
            %428 = sbr.rel (0) target = $region100
          $region99: #{custom-call.11} parent=95 // pred_region
            // Predicated region
            $region101: #{custom-call.11} parent=99 // pred_check
              _
            $region102: #{custom-call.11} parent=99 // pred_check_branch
              %430 = sbr.rel target = $region104
            $region103: #{custom-call.11} parent=99 // pred_region
              // Predicated region
              $region116: #{custom-call.11} parent=103 // pred_check
                _
              $region117: #{custom-call.11} parent=103 // pred_check_branch
                %446 = sbr.rel (0) target = $region119
              $region118: #{custom-call.11} parent=103 // pred_region
                %s448 = ssub.s32 4, 1
                loop: start=0, step=1, limit=1
                $region120: #{custom-call.11} parent=118 // loop_pre_header
                  _
                $region121: #{custom-call.11} parent=118 // loop_header
                  %s450 = sphi 0, %s454
                  %p451 = scmp.ge.s32.totalorder %s450, 1
                  %s455 = sphi %s370, %s370
                  %s456 = sphi %s426, %s426
                $region122: #{custom-call.11} parent=118 // loop_header_branch
                  %453 = sbr.rel (%p451) target = $region126
                $region123: #{custom-call.11} parent=118 // loop_body
                  %v457 = vld [vmem:[%s455] sm:%s448]
                  %458 = vst [vmem:[%s456] sm:%s448] %v457
                $region124: #{custom-call.11} parent=118 // loop_footer
                  %s454 = sadd.s32 1, %s450
                $region125: #{custom-call.11} parent=118 // loop_footer_branch
                  %449 = sbr.rel target = $region121
                $region126: #{custom-call.11} parent=118 // loop_exit
                  _
              $region119: #{custom-call.11} parent=103 // pred_fallthru
                _
            $region104: #{custom-call.11} parent=99 // pred_fallthru
              _
            // Predicated region
            $region105: #{custom-call.11} parent=99 // pred_check
              _
            $region106: #{custom-call.11} parent=99 // pred_check_branch
              %432 = sbr.rel (0) target = $region108
            $region107: #{custom-call.11} parent=99 // pred_region
              %s434 = ssub.s32 4, 1
              loop: start=0, step=1, limit=1
              $region109: #{custom-call.11} parent=107 // loop_pre_header
                _
              $region110: #{custom-call.11} parent=107 // loop_header
                %s436 = sphi 0, %s440
                %p437 = scmp.ge.s32.totalorder %s436, 1
                %s441 = sphi %s370, %s370
                %s442 = sphi %s426, %s426
              $region111: #{custom-call.11} parent=107 // loop_header_branch
                %439 = sbr.rel (%p437) target = $region115
              $region112: #{custom-call.11} parent=107 // loop_body
                %v443 = vld [vmem:[%s441] sm:%s434]
                %444 = vst [vmem:[%s442] sm:%s434] %v443
              $region113: #{custom-call.11} parent=107 // loop_footer
                %s440 = sadd.s32 1, %s436
              $region114: #{custom-call.11} parent=107 // loop_footer_branch
                %435 = sbr.rel target = $region110
              $region115: #{custom-call.11} parent=107 // loop_exit
                _
            $region108: #{custom-call.11} parent=99 // pred_fallthru
              _
          $region100: #{custom-call.11} parent=95 // pred_fallthru
            _
          %459 = vnop
        $region96: #{custom-call.11} parent=49 // pred_fallthru
          _
      $region50: #{custom-call.11} parent=5 // pred_fallthru
        _
      %p460 = scmp.le.s32.totalorder 2, %s9
      // Predicated region
      $region127: #{custom-call.11} parent=5 // pred_check
        %p461 = pneg %p460
      $region128: #{custom-call.11} parent=5 // pred_check_branch
        %463 = sbr.rel (%p461) target = $region130
      $region129: #{custom-call.11} parent=5 // pred_region
        %s464 = ssub.s32 %s9, 2
        %s465 = sand.u32 %s15, 1
        %s466 = sand.u32 %s15, 1
        %s467 = smul.addr %s466, 4
        %s468 = scalar_lea.vmem [#allocation3], %s467
        // Predicated region
        $region131: #{custom-call.11} parent=129 // pred_check
          %p469 = pneg %p40
        $region132: #{custom-call.11} parent=129 // pred_check_branch
          %471 = sbr.rel (%p469) target = $region134
        $region133: #{custom-call.11} parent=129 // pred_region
          %s472 = sand.u32 %s25, 1
          %s473 = scalar_lea.sflag [#allocation6], %s472
          %s474 = sand.u32 %s25, 1
          %s475 = smul.addr %s474, 2
          %s476 = scalar_lea.vmem [#allocation5], %s475
          %478 = dma.done %s473, 32
        $region134: #{custom-call.11} parent=129 // pred_fallthru
          _
        // Predicated region
        $region135: #{custom-call.11} parent=129 // pred_check
          %p479 = pneg %p68
        $region136: #{custom-call.11} parent=129 // pred_check_branch
          %481 = sbr.rel (%p479) target = $region138
        $region137: #{custom-call.11} parent=129 // pred_region
          %s482 = sand.u32 %s53, 1
          %s483 = sand.u32 %s53, 1
          %s484 = smul.addr %s483, 2
          %s485 = scalar_lea.vmem [#allocation8], %s484
        $region138: #{custom-call.11} parent=129 // pred_fallthru
          _
      $region130: #{custom-call.11} parent=5 // pred_fallthru
        _
    $region6: #{custom-call.11} parent=1 // loop_footer
      %s13 = sadd.s32 1, %s9
    $region7: #{custom-call.11} parent=1 // loop_footer_branch
      %8 = sbr.rel target = $region3
    $region8: #{custom-call.11} parent=1 // loop_exit
      _
    %486 = vsyncpa [#allocation6], 1
    %s487 = scalar_lea.sflag [#allocation6], 1
    %488 = vsyncpa %s487, 1

// kernel: custom-call.13
$region0: #{custom-call.13}
  %s0 = inlined_call_operand.vmem [shape: f32[2,1,3,3], index: 0, kind: input, shape index: {}]
  %s1 = inlined_call_operand.vmem [shape: f32[2,1,3,3], index: 1, kind: output, shape index: {}]
  $region1: #{custom-call.13} parent=0
    #allocation0 [shape = 'u8[4096]{0}', space=vmem, size = 0x1000, scoped, tag = 'operand span for operand 0']
    #allocation1 [shape = 'u8[4096]{0}', space=vmem, size = 0x1000, scoped, tag = 'packed  for operand 0']
    #allocation2 [shape = 'u8[4096]{0}', space=vmem, size = 0x1000, scoped, tag = 'operand span for operand 1']
    #allocation3 [shape = 'u8[4096]{0}', space=vmem, size = 0x1000, scoped, tag = 'packed  for operand 1']
    loop: start=0, step=1, limit=4
    $region2: #{custom-call.13} parent=1 // loop_pre_header
      _
    $region3: #{custom-call.13} parent=1 // loop_header
      %s3 = sphi 0, %s7
      %p4 = scmp.ge.s32.totalorder %s3, 4
      %s10 = sphi 0, %s36
      %s11 = sphi 0, %s32
      %s12 = sphi 0, %s28
      %s13 = sphi 0, %s24
      %s14 = sphi 0, %s10
      %s15 = sphi 0, %s11
      %s16 = sphi 0, %s12
      %s17 = sphi 0, %s13
      %s18 = sphi 0, %s14
      %s19 = sphi 0, %s15
      %s20 = sphi 0, %s16
      %s21 = sphi 0, %s17
    $region4: #{custom-call.13} parent=1 // loop_header_branch
      %6 = sbr.rel (%p4) target = $region8
    $region5: #{custom-call.13} parent=1 // loop_body
      %s8 = ssub.s32 %s3, 1
      %s9 = ssub.s32 %s3, 2
      %s22 = sadd.s32 1, %s13
      %p23 = scmp.ge.s32.totalorder %s22, 1
      %s24 = scalar_select %p23, 0, %s22
      %s25 = sadd.s32 1, %s12
      %s26 = scalar_select %p23, %s25, %s12
      %p27 = scmp.ge.s32.totalorder %s26, 1
      %s28 = scalar_select %p27, 0, %s26
      %s29 = sadd.s32 1, %s11
      %s30 = scalar_select %p27, %s29, %s11
      %p31 = scmp.ge.s32.totalorder %s30, 1
      %s32 = scalar_select %p31, 0, %s30
      %s33 = sadd.s32 1, %s10
      %s34 = scalar_select %p31, %s33, %s10
      %p35 = scmp.ge.s32.totalorder %s34, 2
      %s36 = scalar_select %p35, 0, %s34
      %p37 = scmp.le.s32.totalorder 1, %s3
      %p38 = scmp.lt.s32.totalorder %s3, 3
      %p39 = pnand %p37, %p38
      %p40 = pneg %p39
      // Predicated region
      $region9: #{custom-call.13} parent=5 // pred_check
        _
      $region10: #{custom-call.13} parent=5 // pred_check_branch
        %42 = sbr.rel (%p39) target = $region12
      $region11: #{custom-call.13} parent=5 // pred_region
        %s43 = ssub.s32 %s3, 1
      $region12: #{custom-call.13} parent=5 // pred_fallthru
        _
      %p44 = scmp.lt.s32.totalorder %s3, 2
      // Predicated region
      $region13: #{custom-call.13} parent=5 // pred_check
        %p45 = pneg %p44
      $region14: #{custom-call.13} parent=5 // pred_check_branch
        %47 = sbr.rel (%p45) target = $region16
      $region15: #{custom-call.13} parent=5 // pred_region
        %s48 = sand.u32 %s3, 1
        %s49 = sand.u32 %s3, 1
        %s50 = smul.addr %s49, 4
        %s51 = scalar_lea.vmem [#allocation1], %s50
        %s52 = sadd.s32 %s13, %s12
        %s53 = sadd.s32 %s52, %s11
        %s54 = sadd.s32 %s53, %s10
        %s55 = smul.addr %s54, 4
        %s56 = scalar_lea.vmem %s0, %s55
        // Predicated region
        $region17: #{custom-call.13} parent=15 // pred_check
          _
        $region18: #{custom-call.13} parent=15 // pred_check_branch
          %58 = sbr.rel (0) target = $region20
        $region19: #{custom-call.13} parent=15 // pred_region
          // Predicated region
          $region21: #{custom-call.13} parent=19 // pred_check
            _
          $region22: #{custom-call.13} parent=19 // pred_check_branch
            %60 = sbr.rel target = $region24
          $region23: #{custom-call.13} parent=19 // pred_region
            // Predicated region
            $region36: #{custom-call.13} parent=23 // pred_check
              _
            $region37: #{custom-call.13} parent=23 // pred_check_branch
              %76 = sbr.rel (0) target = $region39
            $region38: #{custom-call.13} parent=23 // pred_region
              %s78 = ssub.s32 16, 1
              loop: start=0, step=1, limit=1
              $region40: #{custom-call.13} parent=38 // loop_pre_header
                _
              $region41: #{custom-call.13} parent=38 // loop_header
                %s80 = sphi 0, %s84
                %p81 = scmp.ge.s32.totalorder %s80, 1
                %s85 = sphi %s56, %s56
                %s86 = sphi %s51, %s51
              $region42: #{custom-call.13} parent=38 // loop_header_branch
                %83 = sbr.rel (%p81) target = $region46
              $region43: #{custom-call.13} parent=38 // loop_body
                %v87 = vld [vmem:[%s85] sm:%s78]
                %88 = vst [vmem:[%s86] sm:%s78] %v87
              $region44: #{custom-call.13} parent=38 // loop_footer
                %s84 = sadd.s32 1, %s80
              $region45: #{custom-call.13} parent=38 // loop_footer_branch
                %79 = sbr.rel target = $region41
              $region46: #{custom-call.13} parent=38 // loop_exit
                _
            $region39: #{custom-call.13} parent=23 // pred_fallthru
              _
          $region24: #{custom-call.13} parent=19 // pred_fallthru
            _
          // Predicated region
          $region25: #{custom-call.13} parent=19 // pred_check
            _
          $region26: #{custom-call.13} parent=19 // pred_check_branch
            %62 = sbr.rel (0) target = $region28
          $region27: #{custom-call.13} parent=19 // pred_region
            %s64 = ssub.s32 16, 1
            loop: start=0, step=1, limit=1
            $region29: #{custom-call.13} parent=27 // loop_pre_header
              _
            $region30: #{custom-call.13} parent=27 // loop_header
              %s66 = sphi 0, %s70
              %p67 = scmp.ge.s32.totalorder %s66, 1
              %s71 = sphi %s56, %s56
              %s72 = sphi %s51, %s51
            $region31: #{custom-call.13} parent=27 // loop_header_branch
              %69 = sbr.rel (%p67) target = $region35
            $region32: #{custom-call.13} parent=27 // loop_body
              %v73 = vld [vmem:[%s71] sm:%s64]
              %74 = vst [vmem:[%s72] sm:%s64] %v73
            $region33: #{custom-call.13} parent=27 // loop_footer
              %s70 = sadd.s32 1, %s66
            $region34: #{custom-call.13} parent=27 // loop_footer_branch
              %65 = sbr.rel target = $region30
            $region35: #{custom-call.13} parent=27 // loop_exit
              _
          $region28: #{custom-call.13} parent=19 // pred_fallthru
            _
        $region20: #{custom-call.13} parent=15 // pred_fallthru
          _
        %89 = vnop
      $region16: #{custom-call.13} parent=5 // pred_fallthru
        _
      %p90 = scmp.le.s32.totalorder 1, %s3
      %p91 = scmp.lt.s32.totalorder %s3, 3
      %p92 = pnand %p90, %p91
      %p93 = pneg %p92
      // Predicated region
      $region47: #{custom-call.13} parent=5 // pred_check
        _
      $region48: #{custom-call.13} parent=5 // pred_check_branch
        %95 = sbr.rel (%p92) target = $region50
      $region49: #{custom-call.13} parent=5 // pred_region
        #allocation4 [shape = 'f32[3,3]{1,0}', space=vmem, size = 0x1000, scoped, tag = 'rescaled input a']
        %s96 = ssub.s32 %s3, 1
        %s97 = sand.u32 %s8, 1
        %s98 = sand.u32 %s8, 1
        %s99 = smul.addr %s98, 4
        %s100 = scalar_lea.vmem [#allocation1], %s99
        %s101 = sand.u32 %s8, 1
        %s102 = sand.u32 %s8, 1
        %s103 = smul.addr %s102, 4
        %s104 = scalar_lea.vmem [#allocation1], %s103
        %s105 = sand.u32 %s8, 1
        %s106 = sand.u32 %s8, 1
        %s107 = smul.addr %s106, 4
        %s108 = scalar_lea.vmem [#allocation3], %s107
        %s110 = ssub.s32 16, 1
        %v111 = vld [vmem:[%s104] sm:%s110]
        %112 = vst [vmem:[#allocation0] sm:%s110] %v111
        %v113 = vlaneseq
        %v114 = vand.u32 %v113, 127
        %vm115 = vcmp.lt.s32.totalorder %v114, 3
        %v116 = vlaneseq
        %v117 = vshrl.u32 %v116, 7
        %vm119 = vcmp.eq.s32.totalorder %v117, %v114
        %v120 = vld [vmem:[#allocation0] sm:$0xff]
        %v121 = vsel %vm119, %v120, 0.0
        %122 = vadd.xlane.f32.xlu0 %v121
        %v123 = vpop.xlane.xlu0 %122
        %vm124 = vcmp.ge.s32.totalorder %v117, %v114
        %vm125 = vmand %vm124, %vm115
        %v126 = vsel %vm125, %v120, 0.0
        %v127 = vrcp.pop %v123
        %v128 = vmul.f32 %v123, %v127
        %v129 = vsub.f32 1.0, %v128
        %v130 = vmul.f32 %v127, %v129
        %v131 = vadd.f32 %v127, %v130
        %vm132 = vweird.f32 %v123
        %vm133 = vweird.f32 %v127
        %vm134 = vmor %vm132, %vm133
        %v135 = vsel %vm134, %v127, %v131
        %v136 = vand.u32 2147483647, %v123
        %vm137 = vcmp.eq.f32.partialorder %v136, 8.507059e+37
        %v138 = vand.u32 %v123, 2147483648
        %v139 = vor.u32 1.1754944e-38, %v138
        %v140 = vsel %vm137, %v139, %v135
        %v141 = vmul.f32 %v126, %v140
        %142 = vst [vmem:[#allocation4] sm:$0xff] %v141
        %v143 = vlaneseq
        %v144 = vand.u32 %v143, 127
        %v145 = vlaneseq
        %v146 = vshrl.u32 %v145, 7
        %vm148 = vcmp.eq.s32.totalorder %v144, %v146
        %v149 = vlaneseq
        %v150 = vand.u32 %v149, 127
        %vm151 = vcmp.eq.s32.totalorder %v150, 0
        %v152 = vsel %vm151, 1.0, -1.0
        %v153 = vsel %vm148, %v152, 0.0
        %s154 = scalar_lea.vmem [#allocation4], 1
        %v155 = vld [vmem:[%s154] ss:$0 sm:$0xff]
        %v156 = vxor.u32 %v155, 2147483648
        %v157 = vlaneseq
        %v158 = vand.u32 %v157, 127
        %vm159 = vcmp.eq.s32.totalorder %v158, 1
        %v160 = vmul.f32 %v156, %v153
        %161 = vadd.xlane.f32.xlu0 %v160
        %v162 = vpop.xlane.xlu0 %161
        %v163 = vsel %vm159, %v162, %v153
        %s164 = scalar_lea.vmem [#allocation4], 2
        %v165 = vld [vmem:[%s164] ss:$0 sm:$0xff]
        %v166 = vxor.u32 %v165, 2147483648
        %v167 = vlaneseq
        %v168 = vand.u32 %v167, 127
        %vm169 = vcmp.eq.s32.totalorder %v168, 2
        %v170 = vmul.f32 %v166, %v163
        %171 = vadd.xlane.f32.xlu0 %v170
        %v172 = vpop.xlane.xlu0 %171
        %v173 = vsel %vm169, %v172, %v163
        %v174 = vrcp.pop %v123
        %v175 = vmul.f32 %v123, %v174
        %v176 = vsub.f32 1.0, %v175
        %v177 = vmul.f32 %v174, %v176
        %v178 = vadd.f32 %v174, %v177
        %vm179 = vweird.f32 %v123
        %vm180 = vweird.f32 %v174
        %vm181 = vmor %vm179, %vm180
        %v182 = vsel %vm181, %v174, %v178
        %v183 = vand.u32 2147483647, %v123
        %vm184 = vcmp.eq.f32.partialorder %v183, 8.507059e+37
        %v185 = vand.u32 %v123, 2147483648
        %v186 = vor.u32 1.1754944e-38, %v185
        %v187 = vsel %vm184, %v186, %v182
        %v188 = vmul.f32 %v173, %v187
        %vm189 = vweird.f32 %v123
        %v190 = vsel %vm189, %v173, %v188
        %191 = vst [vmem:[#allocation2] sm:$0xff] %v190
        %s193 = ssub.s32 16, 1
        %v194 = vld [vmem:[#allocation2] sm:%s193]
        %s196 = ssub.s32 16, 1
        %197 = vst [vmem:[%s108] sm:%s196] %v194
        %s198 = sand.u32 %s8, 1
        %s199 = sand.u32 %s8, 1
        %s200 = smul.addr %s199, 4
        %s201 = scalar_lea.vmem [#allocation3], %s200
        %s202 = sadd.s32 %s17, %s16
        %s203 = sadd.s32 %s202, %s15
        %s204 = sadd.s32 %s203, %s14
        %s205 = smul.addr %s204, 4
        %s206 = scalar_lea.vmem %s1, %s205
        // Predicated region
        $region51: #{custom-call.13} parent=49 // pred_check
          _
        $region52: #{custom-call.13} parent=49 // pred_check_branch
          %208 = sbr.rel (0) target = $region54
        $region53: #{custom-call.13} parent=49 // pred_region
          // Predicated region
          $region55: #{custom-call.13} parent=53 // pred_check
            _
          $region56: #{custom-call.13} parent=53 // pred_check_branch
            %210 = sbr.rel target = $region58
          $region57: #{custom-call.13} parent=53 // pred_region
            // Predicated region
            $region70: #{custom-call.13} parent=57 // pred_check
              _
            $region71: #{custom-call.13} parent=57 // pred_check_branch
              %226 = sbr.rel (0) target = $region73
            $region72: #{custom-call.13} parent=57 // pred_region
              %s228 = ssub.s32 16, 1
              loop: start=0, step=1, limit=1
              $region74: #{custom-call.13} parent=72 // loop_pre_header
                _
              $region75: #{custom-call.13} parent=72 // loop_header
                %s230 = sphi 0, %s234
                %p231 = scmp.ge.s32.totalorder %s230, 1
                %s235 = sphi %s201, %s201
                %s236 = sphi %s206, %s206
              $region76: #{custom-call.13} parent=72 // loop_header_branch
                %233 = sbr.rel (%p231) target = $region80
              $region77: #{custom-call.13} parent=72 // loop_body
                %v237 = vld [vmem:[%s235] sm:%s228]
                %238 = vst [vmem:[%s236] sm:%s228] %v237
              $region78: #{custom-call.13} parent=72 // loop_footer
                %s234 = sadd.s32 1, %s230
              $region79: #{custom-call.13} parent=72 // loop_footer_branch
                %229 = sbr.rel target = $region75
              $region80: #{custom-call.13} parent=72 // loop_exit
                _
            $region73: #{custom-call.13} parent=57 // pred_fallthru
              _
          $region58: #{custom-call.13} parent=53 // pred_fallthru
            _
          // Predicated region
          $region59: #{custom-call.13} parent=53 // pred_check
            _
          $region60: #{custom-call.13} parent=53 // pred_check_branch
            %212 = sbr.rel (0) target = $region62
          $region61: #{custom-call.13} parent=53 // pred_region
            %s214 = ssub.s32 16, 1
            loop: start=0, step=1, limit=1
            $region63: #{custom-call.13} parent=61 // loop_pre_header
              _
            $region64: #{custom-call.13} parent=61 // loop_header
              %s216 = sphi 0, %s220
              %p217 = scmp.ge.s32.totalorder %s216, 1
              %s221 = sphi %s201, %s201
              %s222 = sphi %s206, %s206
            $region65: #{custom-call.13} parent=61 // loop_header_branch
              %219 = sbr.rel (%p217) target = $region69
            $region66: #{custom-call.13} parent=61 // loop_body
              %v223 = vld [vmem:[%s221] sm:%s214]
              %224 = vst [vmem:[%s222] sm:%s214] %v223
            $region67: #{custom-call.13} parent=61 // loop_footer
              %s220 = sadd.s32 1, %s216
            $region68: #{custom-call.13} parent=61 // loop_footer_branch
              %215 = sbr.rel target = $region64
            $region69: #{custom-call.13} parent=61 // loop_exit
              _
          $region62: #{custom-call.13} parent=53 // pred_fallthru
            _
        $region54: #{custom-call.13} parent=49 // pred_fallthru
          _
        %239 = vnop
      $region50: #{custom-call.13} parent=5 // pred_fallthru
        _
      %p240 = scmp.le.s32.totalorder 2, %s3
      // Predicated region
      $region81: #{custom-call.13} parent=5 // pred_check
        %p241 = pneg %p240
      $region82: #{custom-call.13} parent=5 // pred_check_branch
        %243 = sbr.rel (%p241) target = $region84
      $region83: #{custom-call.13} parent=5 // pred_region
        %s244 = ssub.s32 %s3, 2
        %s245 = sand.u32 %s9, 1
        %s246 = sand.u32 %s9, 1
        %s247 = smul.addr %s246, 4
        %s248 = scalar_lea.vmem [#allocation3], %s247
      $region84: #{custom-call.13} parent=5 // pred_fallthru
        _
    $region6: #{custom-call.13} parent=1 // loop_footer
      %s7 = sadd.s32 1, %s3
    $region7: #{custom-call.13} parent=1 // loop_footer_branch
      %2 = sbr.rel target = $region3
    $region8: #{custom-call.13} parent=1 // loop_exit
      _

// kernel: custom-call.12
$region0: #{custom-call.12}
  %s0 = inlined_call_operand.vmem [shape: f32[2,1,3,3], index: 0, kind: input, shape index: {}]
  %s1 = inlined_call_operand.vmem [shape: f32[2,1,3,3], index: 1, kind: output, shape index: {}]
  $region1: #{custom-call.12} parent=0
    #allocation0 [shape = 'u8[4096]{0}', space=vmem, size = 0x1000, scoped, tag = 'operand span for operand 0']
    #allocation1 [shape = 'u8[4096]{0}', space=vmem, size = 0x1000, scoped, tag = 'packed  for operand 0']
    #allocation2 [shape = 'u8[4096]{0}', space=vmem, size = 0x1000, scoped, tag = 'operand span for operand 1']
    #allocation3 [shape = 'u8[4096]{0}', space=vmem, size = 0x1000, scoped, tag = 'packed  for operand 1']
    loop: start=0, step=1, limit=4
    $region2: #{custom-call.12} parent=1 // loop_pre_header
      _
    $region3: #{custom-call.12} parent=1 // loop_header
      %s3 = sphi 0, %s7
      %p4 = scmp.ge.s32.totalorder %s3, 4
      %s10 = sphi 0, %s36
      %s11 = sphi 0, %s32
      %s12 = sphi 0, %s28
      %s13 = sphi 0, %s24
      %s14 = sphi 0, %s10
      %s15 = sphi 0, %s11
      %s16 = sphi 0, %s12
      %s17 = sphi 0, %s13
      %s18 = sphi 0, %s14
      %s19 = sphi 0, %s15
      %s20 = sphi 0, %s16
      %s21 = sphi 0, %s17
    $region4: #{custom-call.12} parent=1 // loop_header_branch
      %6 = sbr.rel (%p4) target = $region8
    $region5: #{custom-call.12} parent=1 // loop_body
      %s8 = ssub.s32 %s3, 1
      %s9 = ssub.s32 %s3, 2
      %s22 = sadd.s32 1, %s13
      %p23 = scmp.ge.s32.totalorder %s22, 1
      %s24 = scalar_select %p23, 0, %s22
      %s25 = sadd.s32 1, %s12
      %s26 = scalar_select %p23, %s25, %s12
      %p27 = scmp.ge.s32.totalorder %s26, 1
      %s28 = scalar_select %p27, 0, %s26
      %s29 = sadd.s32 1, %s11
      %s30 = scalar_select %p27, %s29, %s11
      %p31 = scmp.ge.s32.totalorder %s30, 1
      %s32 = scalar_select %p31, 0, %s30
      %s33 = sadd.s32 1, %s10
      %s34 = scalar_select %p31, %s33, %s10
      %p35 = scmp.ge.s32.totalorder %s34, 2
      %s36 = scalar_select %p35, 0, %s34
      %p37 = scmp.le.s32.totalorder 1, %s3
      %p38 = scmp.lt.s32.totalorder %s3, 3
      %p39 = pnand %p37, %p38
      %p40 = pneg %p39
      // Predicated region
      $region9: #{custom-call.12} parent=5 // pred_check
        _
      $region10: #{custom-call.12} parent=5 // pred_check_branch
        %42 = sbr.rel (%p39) target = $region12
      $region11: #{custom-call.12} parent=5 // pred_region
        %s43 = ssub.s32 %s3, 1
      $region12: #{custom-call.12} parent=5 // pred_fallthru
        _
      %p44 = scmp.lt.s32.totalorder %s3, 2
      // Predicated region
      $region13: #{custom-call.12} parent=5 // pred_check
        %p45 = pneg %p44
      $region14: #{custom-call.12} parent=5 // pred_check_branch
        %47 = sbr.rel (%p45) target = $region16
      $region15: #{custom-call.12} parent=5 // pred_region
        %s48 = sand.u32 %s3, 1
        %s49 = sand.u32 %s3, 1
        %s50 = smul.addr %s49, 4
        %s51 = scalar_lea.vmem [#allocation1], %s50
        %s52 = sadd.s32 %s13, %s12
        %s53 = sadd.s32 %s52, %s11
        %s54 = sadd.s32 %s53, %s10
        %s55 = smul.addr %s54, 4
        %s56 = scalar_lea.vmem %s0, %s55
        // Predicated region
        $region17: #{custom-call.12} parent=15 // pred_check
          _
        $region18: #{custom-call.12} parent=15 // pred_check_branch
          %58 = sbr.rel (0) target = $region20
        $region19: #{custom-call.12} parent=15 // pred_region
          // Predicated region
          $region21: #{custom-call.12} parent=19 // pred_check
            _
          $region22: #{custom-call.12} parent=19 // pred_check_branch
            %60 = sbr.rel target = $region24
          $region23: #{custom-call.12} parent=19 // pred_region
            // Predicated region
            $region36: #{custom-call.12} parent=23 // pred_check
              _
            $region37: #{custom-call.12} parent=23 // pred_check_branch
              %76 = sbr.rel (0) target = $region39
            $region38: #{custom-call.12} parent=23 // pred_region
              %s78 = ssub.s32 16, 1
              loop: start=0, step=1, limit=1
              $region40: #{custom-call.12} parent=38 // loop_pre_header
                _
              $region41: #{custom-call.12} parent=38 // loop_header
                %s80 = sphi 0, %s84
                %p81 = scmp.ge.s32.totalorder %s80, 1
                %s85 = sphi %s56, %s56
                %s86 = sphi %s51, %s51
              $region42: #{custom-call.12} parent=38 // loop_header_branch
                %83 = sbr.rel (%p81) target = $region46
              $region43: #{custom-call.12} parent=38 // loop_body
                %v87 = vld [vmem:[%s85] sm:%s78]
                %88 = vst [vmem:[%s86] sm:%s78] %v87
              $region44: #{custom-call.12} parent=38 // loop_footer
                %s84 = sadd.s32 1, %s80
              $region45: #{custom-call.12} parent=38 // loop_footer_branch
                %79 = sbr.rel target = $region41
              $region46: #{custom-call.12} parent=38 // loop_exit
                _
            $region39: #{custom-call.12} parent=23 // pred_fallthru
              _
          $region24: #{custom-call.12} parent=19 // pred_fallthru
            _
          // Predicated region
          $region25: #{custom-call.12} parent=19 // pred_check
            _
          $region26: #{custom-call.12} parent=19 // pred_check_branch
            %62 = sbr.rel (0) target = $region28
          $region27: #{custom-call.12} parent=19 // pred_region
            %s64 = ssub.s32 16, 1
            loop: start=0, step=1, limit=1
            $region29: #{custom-call.12} parent=27 // loop_pre_header
              _
            $region30: #{custom-call.12} parent=27 // loop_header
              %s66 = sphi 0, %s70
              %p67 = scmp.ge.s32.totalorder %s66, 1
              %s71 = sphi %s56, %s56
              %s72 = sphi %s51, %s51
            $region31: #{custom-call.12} parent=27 // loop_header_branch
              %69 = sbr.rel (%p67) target = $region35
            $region32: #{custom-call.12} parent=27 // loop_body
              %v73 = vld [vmem:[%s71] sm:%s64]
              %74 = vst [vmem:[%s72] sm:%s64] %v73
            $region33: #{custom-call.12} parent=27 // loop_footer
              %s70 = sadd.s32 1, %s66
            $region34: #{custom-call.12} parent=27 // loop_footer_branch
              %65 = sbr.rel target = $region30
            $region35: #{custom-call.12} parent=27 // loop_exit
              _
          $region28: #{custom-call.12} parent=19 // pred_fallthru
            _
        $region20: #{custom-call.12} parent=15 // pred_fallthru
          _
        %89 = vnop
      $region16: #{custom-call.12} parent=5 // pred_fallthru
        _
      %p90 = scmp.le.s32.totalorder 1, %s3
      %p91 = scmp.lt.s32.totalorder %s3, 3
      %p92 = pnand %p90, %p91
      %p93 = pneg %p92
      // Predicated region
      $region47: #{custom-call.12} parent=5 // pred_check
        _
      $region48: #{custom-call.12} parent=5 // pred_check_branch
        %95 = sbr.rel (%p92) target = $region50
      $region49: #{custom-call.12} parent=5 // pred_region
        #allocation4 [shape = 'f32[3,3]{1,0}', space=vmem, size = 0x1000, scoped, tag = 'rescaled input a']
        %s96 = ssub.s32 %s3, 1
        %s97 = sand.u32 %s8, 1
        %s98 = sand.u32 %s8, 1
        %s99 = smul.addr %s98, 4
        %s100 = scalar_lea.vmem [#allocation1], %s99
        %s101 = sand.u32 %s8, 1
        %s102 = sand.u32 %s8, 1
        %s103 = smul.addr %s102, 4
        %s104 = scalar_lea.vmem [#allocation1], %s103
        %s105 = sand.u32 %s8, 1
        %s106 = sand.u32 %s8, 1
        %s107 = smul.addr %s106, 4
        %s108 = scalar_lea.vmem [#allocation3], %s107
        %s110 = ssub.s32 16, 1
        %v111 = vld [vmem:[%s104] sm:%s110]
        %112 = vst [vmem:[#allocation0] sm:%s110] %v111
        %v113 = vlaneseq
        %v114 = vand.u32 %v113, 127
        %vm115 = vcmp.lt.s32.totalorder %v114, 3
        %v116 = vlaneseq
        %v117 = vshrl.u32 %v116, 7
        %vm119 = vcmp.eq.s32.totalorder %v117, %v114
        %v120 = vld [vmem:[#allocation0] sm:$0xff]
        %v121 = vsel %vm119, %v120, 0.0
        %122 = vadd.xlane.f32.xlu0 %v121
        %v123 = vpop.xlane.xlu0 %122
        %vm124 = vcmp.le.s32.totalorder %v117, %v114
        %vm125 = vmand %vm124, %vm115
        %v126 = vsel %vm125, %v120, 0.0
        %v127 = vrcp.pop %v123
        %v128 = vmul.f32 %v123, %v127
        %v129 = vsub.f32 1.0, %v128
        %v130 = vmul.f32 %v127, %v129
        %v131 = vadd.f32 %v127, %v130
        %vm132 = vweird.f32 %v123
        %vm133 = vweird.f32 %v127
        %vm134 = vmor %vm132, %vm133
        %v135 = vsel %vm134, %v127, %v131
        %v136 = vand.u32 2147483647, %v123
        %vm137 = vcmp.eq.f32.partialorder %v136, 8.507059e+37
        %v138 = vand.u32 %v123, 2147483648
        %v139 = vor.u32 1.1754944e-38, %v138
        %v140 = vsel %vm137, %v139, %v135
        %v141 = vmul.f32 %v126, %v140
        %142 = vst [vmem:[#allocation4] sm:$0xff] %v141
        %v143 = vlaneseq
        %v144 = vand.u32 %v143, 127
        %v145 = vlaneseq
        %v146 = vshrl.u32 %v145, 7
        %vm148 = vcmp.eq.s32.totalorder %v144, %v146
        %v149 = vlaneseq
        %v150 = vand.u32 %v149, 127
        %vm151 = vcmp.eq.s32.totalorder %v150, 2
        %v152 = vsel %vm151, 1.0, -1.0
        %v153 = vsel %vm148, %v152, 0.0
        %s154 = scalar_lea.vmem [#allocation4], 1
        %v155 = vld [vmem:[%s154] ss:$0 sm:$0xff]
        %v156 = vxor.u32 %v155, 2147483648
        %v157 = vlaneseq
        %v158 = vand.u32 %v157, 127
        %vm159 = vcmp.eq.s32.totalorder %v158, 1
        %v160 = vmul.f32 %v156, %v153
        %161 = vadd.xlane.f32.xlu0 %v160
        %v162 = vpop.xlane.xlu0 %161
        %v163 = vsel %vm159, %v162, %v153
        %v164 = vld [vmem:[#allocation4] ss:$0 sm:$0xff]
        %v165 = vxor.u32 %v164, 2147483648
        %v166 = vlaneseq
        %v167 = vand.u32 %v166, 127
        %vm168 = vcmp.eq.s32.totalorder %v167, 0
        %v169 = vmul.f32 %v165, %v163
        %170 = vadd.xlane.f32.xlu0 %v169
        %v171 = vpop.xlane.xlu0 %170
        %v172 = vsel %vm168, %v171, %v163
        %v173 = vrcp.pop %v123
        %v174 = vmul.f32 %v123, %v173
        %v175 = vsub.f32 1.0, %v174
        %v176 = vmul.f32 %v173, %v175
        %v177 = vadd.f32 %v173, %v176
        %vm178 = vweird.f32 %v123
        %vm179 = vweird.f32 %v173
        %vm180 = vmor %vm178, %vm179
        %v181 = vsel %vm180, %v173, %v177
        %v182 = vand.u32 2147483647, %v123
        %vm183 = vcmp.eq.f32.partialorder %v182, 8.507059e+37
        %v184 = vand.u32 %v123, 2147483648
        %v185 = vor.u32 1.1754944e-38, %v184
        %v186 = vsel %vm183, %v185, %v181
        %v187 = vmul.f32 %v172, %v186
        %vm188 = vweird.f32 %v123
        %v189 = vsel %vm188, %v172, %v187
        %190 = vst [vmem:[#allocation2] sm:$0xff] %v189
        %s192 = ssub.s32 16, 1
        %v193 = vld [vmem:[#allocation2] sm:%s192]
        %s195 = ssub.s32 16, 1
        %196 = vst [vmem:[%s108] sm:%s195] %v193
        %s197 = sand.u32 %s8, 1
        %s198 = sand.u32 %s8, 1
        %s199 = smul.addr %s198, 4
        %s200 = scalar_lea.vmem [#allocation3], %s199
        %s201 = sadd.s32 %s17, %s16
        %s202 = sadd.s32 %s201, %s15
        %s203 = sadd.s32 %s202, %s14
        %s204 = smul.addr %s203, 4
        %s205 = scalar_lea.vmem %s1, %s204
        // Predicated region
        $region51: #{custom-call.12} parent=49 // pred_check
          _
        $region52: #{custom-call.12} parent=49 // pred_check_branch
          %207 = sbr.rel (0) target = $region54
        $region53: #{custom-call.12} parent=49 // pred_region
          // Predicated region
          $region55: #{custom-call.12} parent=53 // pred_check
            _
          $region56: #{custom-call.12} parent=53 // pred_check_branch
            %209 = sbr.rel target = $region58
          $region57: #{custom-call.12} parent=53 // pred_region
            // Predicated region
            $region70: #{custom-call.12} parent=57 // pred_check
              _
            $region71: #{custom-call.12} parent=57 // pred_check_branch
              %225 = sbr.rel (0) target = $region73
            $region72: #{custom-call.12} parent=57 // pred_region
              %s227 = ssub.s32 16, 1
              loop: start=0, step=1, limit=1
              $region74: #{custom-call.12} parent=72 // loop_pre_header
                _
              $region75: #{custom-call.12} parent=72 // loop_header
                %s229 = sphi 0, %s233
                %p230 = scmp.ge.s32.totalorder %s229, 1
                %s234 = sphi %s200, %s200
                %s235 = sphi %s205, %s205
              $region76: #{custom-call.12} parent=72 // loop_header_branch
                %232 = sbr.rel (%p230) target = $region80
              $region77: #{custom-call.12} parent=72 // loop_body
                %v236 = vld [vmem:[%s234] sm:%s227]
                %237 = vst [vmem:[%s235] sm:%s227] %v236
              $region78: #{custom-call.12} parent=72 // loop_footer
                %s233 = sadd.s32 1, %s229
              $region79: #{custom-call.12} parent=72 // loop_footer_branch
                %228 = sbr.rel target = $region75
              $region80: #{custom-call.12} parent=72 // loop_exit
                _
            $region73: #{custom-call.12} parent=57 // pred_fallthru
              _
          $region58: #{custom-call.12} parent=53 // pred_fallthru
            _
          // Predicated region
          $region59: #{custom-call.12} parent=53 // pred_check
            _
          $region60: #{custom-call.12} parent=53 // pred_check_branch
            %211 = sbr.rel (0) target = $region62
          $region61: #{custom-call.12} parent=53 // pred_region
            %s213 = ssub.s32 16, 1
            loop: start=0, step=1, limit=1
            $region63: #{custom-call.12} parent=61 // loop_pre_header
              _
            $region64: #{custom-call.12} parent=61 // loop_header
              %s215 = sphi 0, %s219
              %p216 = scmp.ge.s32.totalorder %s215, 1
              %s220 = sphi %s200, %s200
              %s221 = sphi %s205, %s205
            $region65: #{custom-call.12} parent=61 // loop_header_branch
              %218 = sbr.rel (%p216) target = $region69
            $region66: #{custom-call.12} parent=61 // loop_body
              %v222 = vld [vmem:[%s220] sm:%s213]
              %223 = vst [vmem:[%s221] sm:%s213] %v222
            $region67: #{custom-call.12} parent=61 // loop_footer
              %s219 = sadd.s32 1, %s215
            $region68: #{custom-call.12} parent=61 // loop_footer_branch
              %214 = sbr.rel target = $region64
            $region69: #{custom-call.12} parent=61 // loop_exit
              _
          $region62: #{custom-call.12} parent=53 // pred_fallthru
            _
        $region54: #{custom-call.12} parent=49 // pred_fallthru
          _
        %238 = vnop
      $region50: #{custom-call.12} parent=5 // pred_fallthru
        _
      %p239 = scmp.le.s32.totalorder 2, %s3
      // Predicated region
      $region81: #{custom-call.12} parent=5 // pred_check
        %p240 = pneg %p239
      $region82: #{custom-call.12} parent=5 // pred_check_branch
        %242 = sbr.rel (%p240) target = $region84
      $region83: #{custom-call.12} parent=5 // pred_region
        %s243 = ssub.s32 %s3, 2
        %s244 = sand.u32 %s9, 1
        %s245 = sand.u32 %s9, 1
        %s246 = smul.addr %s245, 4
        %s247 = scalar_lea.vmem [#allocation3], %s246
      $region84: #{custom-call.12} parent=5 // pred_fallthru
        _
    $region6: #{custom-call.12} parent=1 // loop_footer
      %s7 = sadd.s32 1, %s3
    $region7: #{custom-call.12} parent=1 // loop_footer_branch
      %2 = sbr.rel target = $region3
    $region8: #{custom-call.12} parent=1 // loop_exit
      _

// kernel: _lambda_.1
$region0: #{_lambda_.1}
  #allocation0 [shape = 'u32[]', space=smem, size = 0x4, offset = 0x4, fixed_abs, tag = 'smem constant byte address 0x4 - core index']
  #allocation1 [shape = 'u32[72,128]{1,0:T(1,128)}', space=vmem, size = 0x9000, scoped, tag = 'internal scratch']
  #allocation2 [shape = 'f32[16,32]{1,0:T(8,128)}', space=vmem, size = 0x2000, scoped, tag = 'scratch operand']
  #allocation3 [shape = 's32[1]{0}', space=sflag, size = 0x4, scoped, tag = 'scoped memory for _lambda_.1']
  #allocation4 [shape = 'u8[512]{0}', space=smem, size = 0x200, scoped, tag = 'prefetched SMEM operand 0']
  #allocation5 [shape = 'u8[512]{0}', space=smem, size = 0x200, scoped, tag = 'prefetched SMEM operand 1']
  #allocation6 [shape = 'u8[1024]{0}', space=smem, size = 0x400, scoped, tag = 'prefetched SMEM operand 2']
  %s0 = inlined_call_operand.vmem [shape: f32[2], index: 0, kind: input, shape index: {}]
  %s1 = inlined_call_operand.vmem [shape: f32[2], index: 1, kind: input, shape index: {}]
  %s2 = inlined_call_operand.vmem [shape: f32[2,9], index: 2, kind: input, shape index: {}]
  %s3 = inlined_call_operand.vmem [shape: f32[2,64,64], index: 3, kind: input, shape index: {}]
  %s4 = inlined_call_operand.vmem [shape: bf16[3,32,64], index: 4, kind: input, shape index: {}]
  %s5 = inlined_call_operand.vmem [shape: bf16[3,64,256], index: 5, kind: input, shape index: {}]
  %s6 = inlined_call_operand.vmem [shape: f32[1,256], index: 6, kind: input, shape index: {}, may-alias: {6,9,12}]
  %s7 = inlined_call_operand.hbm [shape: bf16[3,16,32], index: 7, kind: input, shape index: {}]
  %s8 = inlined_call_operand.vmem [shape: bf16[3,256,256], index: 8, kind: input, shape index: {}]
  %s9 = inlined_call_operand.vmem [shape: f32[1,256], index: 9, kind: input, shape index: {}, may-alias: {6,9,12}]
  %s10 = inlined_call_operand.vmem [shape: bf16[3,8,16], index: 10, kind: input, shape index: {}]
  %s11 = inlined_call_operand.vmem [shape: bf16[3,256,256], index: 11, kind: input, shape index: {}]
  %s12 = inlined_call_operand.vmem [shape: f32[1,256], index: 12, kind: input, shape index: {}, may-alias: {6,9,12}]
  %s13 = inlined_call_operand.vmem [shape: bf16[3,4,8], index: 13, kind: input, shape index: {}]
  %s14 = inlined_call_operand.vmem [shape: bf16[3,256,128], index: 14, kind: input, shape index: {}]
  %s15 = inlined_call_operand.vmem [shape: f32[1,128], index: 15, kind: input, shape index: {}]
  %s16 = inlined_call_operand.hbm [shape: bf16[32,896], index: 16, kind: input, shape index: {}]
  %s17 = inlined_call_operand.vmem [shape: f32[1,896], index: 17, kind: input, shape index: {}]
  %s18 = inlined_call_operand.hbm [shape: f32[16,224], index: 18, kind: input, shape index: {}]
  %s19 = inlined_call_operand.hbm [shape: f32[16,224], index: 19, kind: input, shape index: {}]
  %s20 = inlined_call_operand.hbm [shape: f32[2,64,64], index: 20, kind: output, shape index: {0}]
  %s21 = inlined_call_operand.vmem [shape: f32[2,16,896], index: 21, kind: output, shape index: {1}]
  %s22 = inlined_call_operand.vmem [shape: f32[2,8,14], index: 22, kind: output, shape index: {2}]
  %23 = xla_tuple %s20, %s21, %s22
  %s24 = sld [smem:[#allocation0]]
  $region133: #{_lambda_.1} parent=0
    _
  %s26 = ssub.s32 1, %s24
  %s27 = scalar_select 0, %s26, %s24
  %s29 = sshll.u32 %s0, 4
  %s30 = int_to_ptr.vmem [resolvable:$true] %s29
  %32 = dma.vmem_to_smem %s30, 16, [#allocation4], [#allocation3]
  %s34 = sshll.u32 %s1, 4
  %s35 = int_to_ptr.vmem [resolvable:$true] %s34
  %37 = dma.vmem_to_smem %s35, 16, [#allocation5], [#allocation3]
  %s39 = sshll.u32 %s2, 4
  %s40 = int_to_ptr.vmem [resolvable:$true] %s39
  %42 = dma.vmem_to_smem %s40, 32, [#allocation6], [#allocation3]
  %44 = dma.done [#allocation3], 64
  %45 = sfence
  $region1: #{_lambda_.1} parent=0
    #allocation7 [shape = 'u8[12288]{0}', space=vmem, size = 0x3000, scoped, tag = 'input window, operand 7, single buffered']
    #allocation8 [shape = 's32[2]{0}', space=sflag, size = 0x8, scoped, tag = 'scoped memory for _lambda_.1']
    #allocation9 [shape = 's32[2]{0}', space=sflag, size = 0x8, scoped, tag = 'scoped memory for _lambda_.1']
    #allocation10 [shape = 'u8[57344]{0}', space=vmem, size = 0xe000, scoped, tag = 'input window, operand 16, single buffered']
    #allocation11 [shape = 's32[1]{0}', space=sflag, size = 0x4, scoped, tag = 'scoped memory for _lambda_.1']
    #allocation12 [shape = 'u8[16384]{0}', space=vmem, size = 0x4000, scoped, tag = 'input window, operand 18, single buffered']
    #allocation13 [shape = 'u8[16384]{0}', space=vmem, size = 0x4000, scoped, tag = 'input window, operand 19, single buffered']
    #allocation14 [shape = 's32[1]{0}', space=sflag, size = 0x4, scoped, tag = 'scoped memory for _lambda_.1']
    #allocation15 [shape = 'u8[65536]{0}', space=vmem, size = 0x10000, scoped, tag = 'output window, operand 0']
    %46 = vsyncpa [#allocation8], 0
    %47 = vsyncpa [#allocation11], 0
    %48 = vsyncpa [#allocation14], 0
    %49 = vsyncpa [#allocation9], 0
    %s50 = scalar_lea.sflag [#allocation9], 1
    %51 = vsyncpa %s50, 0
    loop: start=0, step=1, limit=4
    $region2: #{_lambda_.1} parent=1 // loop_pre_header
      _
    $region3: #{_lambda_.1} parent=1 // loop_header
      %s53 = sphi 0, %s57
      %p54 = scmp.ge.s32.totalorder %s53, 4
      %s63 = sphi 0, %s65
      %s66 = sphi 0, %s63
      %s67 = sphi 0, %s66
      %s83 = sphi 0, %s67
      %s87 = sphi 0, %s87
      %s89 = sphi 0, %s87
      %s90 = sphi 0, %s89
      %s104 = sphi 0, %s90
      %s108 = sphi 0, %s108
      %s110 = sphi 0, %s108
      %s111 = sphi 0, %s110
      %s125 = sphi 0, %s111
      %s129 = sphi 0, %s129
      %s131 = sphi 0, %s129
      %s132 = sphi 0, %s131
      %s146 = sphi 0, %s132
      %s150 = sphi 0, %s150
      %s152 = sphi 0, %s150
      %s153 = sphi 0, %s152
      %s167 = sphi 0, %s153
      %s171 = sphi 0, %s171
      %s173 = sphi 0, %s171
      %s174 = sphi 0, %s173
      %s188 = sphi 0, %s174
      %s192 = sphi 0, %s192
      %s194 = sphi 0, %s192
      %s195 = sphi 0, %s194
      %s209 = sphi 0, %s195
      %s213 = sphi 0, %s213
      %s215 = sphi 0, %s213
      %s216 = sphi 0, %s215
      %s230 = sphi 0, %s216
      %s234 = sphi 0, %s234
      %s236 = sphi 0, %s234
      %s237 = sphi 0, %s236
      %s251 = sphi 0, %s237
      %s255 = sphi 0, %s255
      %s257 = sphi 0, %s255
      %s258 = sphi 0, %s257
      %s272 = sphi 0, %s258
      %s276 = sphi 0, %s276
      %s278 = sphi 0, %s276
      %s279 = sphi 0, %s278
      %s293 = sphi 0, %s279
      %s297 = sphi 0, %s297
      %s299 = sphi 0, %s297
      %s300 = sphi 0, %s299
      %s314 = sphi 0, %s300
      %s318 = sphi 0, %s318
      %s320 = sphi 0, %s318
      %s321 = sphi 0, %s320
      %s335 = sphi 0, %s321
      %s339 = sphi 0, %s339
      %s341 = sphi 0, %s339
      %s342 = sphi 0, %s341
      %s356 = sphi 0, %s342
      %s360 = sphi 0, %s360
      %s362 = sphi 0, %s360
      %s363 = sphi 0, %s362
      %s377 = sphi 0, %s363
      %s381 = sphi 0, %s381
      %s383 = sphi 0, %s381
      %s384 = sphi 0, %s383
      %s398 = sphi 0, %s384
      %s402 = sphi 0, %s402
      %s404 = sphi 0, %s402
      %s405 = sphi 0, %s404
      %s419 = sphi 0, %s405
      %s425 = sphi 0, %s427
      %s428 = sphi 0, %s425
      %s429 = sphi 0, %s428
      %s445 = sphi 0, %s429
      %s451 = sphi 0, %s453
      %s454 = sphi 0, %s451
      %s455 = sphi 0, %s454
      %s471 = sphi 0, %s455
      %s477 = sphi 0, %s479
      %s480 = sphi 0, %s477
      %s481 = sphi 0, %s480
      %s497 = sphi 0, %s481
    $region4: #{_lambda_.1} parent=1 // loop_header_branch
      %56 = sbr.rel (%p54) target = $region8
    $region5: #{_lambda_.1} parent=1 // loop_body
      %s58 = ssub.s32 %s53, 1
      %s59 = ssub.s32 %s53, 2
      %s60 = sadd.s32 %s53, 1
      %s61 = ssub.s32 %s53, %s60
      %p62 = scmp.eq.s32.totalorder %s61, 0
      %s64 = sadd.s32 %s63, 1
      %s65 = scalar_select %p62, %s63, %s64
      %p68 = pneg %p62
      %p69 = scmp.eq.s32.totalorder %s53, 1
      %p70 = por %p68, %p69
      %p71 = scmp.ne.s32.totalorder %s63, %s66
      %p72 = scmp.eq.s32.totalorder %s53, 0
      %p73 = por %p71, %p72
      %p74 = scmp.ne.s32.totalorder %s63, %s66
      %p75 = scmp.eq.s32.totalorder %s58, 1
      %p76 = por %p74, %p75
      %p77 = scmp.ne.s32.totalorder %s66, %s67
      %p78 = scmp.eq.s32.totalorder %s58, 0
      %p79 = por %p77, %p78
      %p80 = scmp.ne.s32.totalorder %s66, %s67
      %p81 = scmp.eq.s32.totalorder %s59, 1
      %p82 = por %p80, %p81
      %p84 = scmp.ne.s32.totalorder %s67, %s83
      %p85 = scmp.eq.s32.totalorder %s59, 0
      %p86 = por %p84, %p85
      %s88 = sadd.s32 %s87, 1
      %p91 = scmp.eq.s32.totalorder %s53, 1
      %p92 = scmp.ne.s32.totalorder %s87, %s89
      %p93 = scmp.eq.s32.totalorder %s53, 0
      %p94 = por %p92, %p93
      %p95 = scmp.ne.s32.totalorder %s87, %s89
      %p96 = scmp.eq.s32.totalorder %s58, 1
      %p97 = por %p95, %p96
      %p98 = scmp.ne.s32.totalorder %s89, %s90
      %p99 = scmp.eq.s32.totalorder %s58, 0
      %p100 = por %p98, %p99
      %p101 = scmp.ne.s32.totalorder %s89, %s90
      %p102 = scmp.eq.s32.totalorder %s59, 1
      %p103 = por %p101, %p102
      %p105 = scmp.ne.s32.totalorder %s90, %s104
      %p106 = scmp.eq.s32.totalorder %s59, 0
      %p107 = por %p105, %p106
      %s109 = sadd.s32 %s108, 1
      %p112 = scmp.eq.s32.totalorder %s53, 1
      %p113 = scmp.ne.s32.totalorder %s108, %s110
      %p114 = scmp.eq.s32.totalorder %s53, 0
      %p115 = por %p113, %p114
      %p116 = scmp.ne.s32.totalorder %s108, %s110
      %p117 = scmp.eq.s32.totalorder %s58, 1
      %p118 = por %p116, %p117
      %p119 = scmp.ne.s32.totalorder %s110, %s111
      %p120 = scmp.eq.s32.totalorder %s58, 0
      %p121 = por %p119, %p120
      %p122 = scmp.ne.s32.totalorder %s110, %s111
      %p123 = scmp.eq.s32.totalorder %s59, 1
      %p124 = por %p122, %p123
      %p126 = scmp.ne.s32.totalorder %s111, %s125
      %p127 = scmp.eq.s32.totalorder %s59, 0
      %p128 = por %p126, %p127
      %s130 = sadd.s32 %s129, 1
      %p133 = scmp.eq.s32.totalorder %s53, 1
      %p134 = scmp.ne.s32.totalorder %s129, %s131
      %p135 = scmp.eq.s32.totalorder %s53, 0
      %p136 = por %p134, %p135
      %p137 = scmp.ne.s32.totalorder %s129, %s131
      %p138 = scmp.eq.s32.totalorder %s58, 1
      %p139 = por %p137, %p138
      %p140 = scmp.ne.s32.totalorder %s131, %s132
      %p141 = scmp.eq.s32.totalorder %s58, 0
      %p142 = por %p140, %p141
      %p143 = scmp.ne.s32.totalorder %s131, %s132
      %p144 = scmp.eq.s32.totalorder %s59, 1
      %p145 = por %p143, %p144
      %p147 = scmp.ne.s32.totalorder %s132, %s146
      %p148 = scmp.eq.s32.totalorder %s59, 0
      %p149 = por %p147, %p148
      %s151 = sadd.s32 %s150, 1
      %p154 = scmp.eq.s32.totalorder %s53, 1
      %p155 = scmp.ne.s32.totalorder %s150, %s152
      %p156 = scmp.eq.s32.totalorder %s53, 0
      %p157 = por %p155, %p156
      %p158 = scmp.ne.s32.totalorder %s150, %s152
      %p159 = scmp.eq.s32.totalorder %s58, 1
      %p160 = por %p158, %p159
      %p161 = scmp.ne.s32.totalorder %s152, %s153
      %p162 = scmp.eq.s32.totalorder %s58, 0
      %p163 = por %p161, %p162
      %p164 = scmp.ne.s32.totalorder %s152, %s153
      %p165 = scmp.eq.s32.totalorder %s59, 1
      %p166 = por %p164, %p165
      %p168 = scmp.ne.s32.totalorder %s153, %s167
      %p169 = scmp.eq.s32.totalorder %s59, 0
      %p170 = por %p168, %p169
      %s172 = sadd.s32 %s171, 1
      %p175 = scmp.eq.s32.totalorder %s53, 1
      %p176 = scmp.ne.s32.totalorder %s171, %s173
      %p177 = scmp.eq.s32.totalorder %s53, 0
      %p178 = por %p176, %p177
      %p179 = scmp.ne.s32.totalorder %s171, %s173
      %p180 = scmp.eq.s32.totalorder %s58, 1
      %p181 = por %p179, %p180
      %p182 = scmp.ne.s32.totalorder %s173, %s174
      %p183 = scmp.eq.s32.totalorder %s58, 0
      %p184 = por %p182, %p183
      %p185 = scmp.ne.s32.totalorder %s173, %s174
      %p186 = scmp.eq.s32.totalorder %s59, 1
      %p187 = por %p185, %p186
      %p189 = scmp.ne.s32.totalorder %s174, %s188
      %p190 = scmp.eq.s32.totalorder %s59, 0
      %p191 = por %p189, %p190
      %s193 = sadd.s32 %s192, 1
      %p196 = scmp.eq.s32.totalorder %s53, 1
      %p197 = scmp.ne.s32.totalorder %s192, %s194
      %p198 = scmp.eq.s32.totalorder %s53, 0
      %p199 = por %p197, %p198
      %p200 = scmp.ne.s32.totalorder %s192, %s194
      %p201 = scmp.eq.s32.totalorder %s58, 1
      %p202 = por %p200, %p201
      %p203 = scmp.ne.s32.totalorder %s194, %s195
      %p204 = scmp.eq.s32.totalorder %s58, 0
      %p205 = por %p203, %p204
      %p206 = scmp.ne.s32.totalorder %s194, %s195
      %p207 = scmp.eq.s32.totalorder %s59, 1
      %p208 = por %p206, %p207
      %p210 = scmp.ne.s32.totalorder %s195, %s209
      %p211 = scmp.eq.s32.totalorder %s59, 0
      %p212 = por %p210, %p211
      %s214 = sadd.s32 %s213, 1
      %p217 = scmp.eq.s32.totalorder %s53, 1
      %p218 = scmp.ne.s32.totalorder %s213, %s215
      %p219 = scmp.eq.s32.totalorder %s53, 0
      %p220 = por %p218, %p219
      %p221 = scmp.ne.s32.totalorder %s213, %s215
      %p222 = scmp.eq.s32.totalorder %s58, 1
      %p223 = por %p221, %p222
      %p224 = scmp.ne.s32.totalorder %s215, %s216
      %p225 = scmp.eq.s32.totalorder %s58, 0
      %p226 = por %p224, %p225
      %p227 = scmp.ne.s32.totalorder %s215, %s216
      %p228 = scmp.eq.s32.totalorder %s59, 1
      %p229 = por %p227, %p228
      %p231 = scmp.ne.s32.totalorder %s216, %s230
      %p232 = scmp.eq.s32.totalorder %s59, 0
      %p233 = por %p231, %p232
      %s235 = sadd.s32 %s234, 1
      %p238 = scmp.eq.s32.totalorder %s53, 1
      %p239 = scmp.ne.s32.totalorder %s234, %s236
      %p240 = scmp.eq.s32.totalorder %s53, 0
      %p241 = por %p239, %p240
      %p242 = scmp.ne.s32.totalorder %s234, %s236
      %p243 = scmp.eq.s32.totalorder %s58, 1
      %p244 = por %p242, %p243
      %p245 = scmp.ne.s32.totalorder %s236, %s237
      %p246 = scmp.eq.s32.totalorder %s58, 0
      %p247 = por %p245, %p246
      %p248 = scmp.ne.s32.totalorder %s236, %s237
      %p249 = scmp.eq.s32.totalorder %s59, 1
      %p250 = por %p248, %p249
      %p252 = scmp.ne.s32.totalorder %s237, %s251
      %p253 = scmp.eq.s32.totalorder %s59, 0
      %p254 = por %p252, %p253
      %s256 = sadd.s32 %s255, 1
      %p259 = scmp.eq.s32.totalorder %s53, 1
      %p260 = scmp.ne.s32.totalorder %s255, %s257
      %p261 = scmp.eq.s32.totalorder %s53, 0
      %p262 = por %p260, %p261
      %p263 = scmp.ne.s32.totalorder %s255, %s257
      %p264 = scmp.eq.s32.totalorder %s58, 1
      %p265 = por %p263, %p264
      %p266 = scmp.ne.s32.totalorder %s257, %s258
      %p267 = scmp.eq.s32.totalorder %s58, 0
      %p268 = por %p266, %p267
      %p269 = scmp.ne.s32.totalorder %s257, %s258
      %p270 = scmp.eq.s32.totalorder %s59, 1
      %p271 = por %p269, %p270
      %p273 = scmp.ne.s32.totalorder %s258, %s272
      %p274 = scmp.eq.s32.totalorder %s59, 0
      %p275 = por %p273, %p274
      %s277 = sadd.s32 %s276, 1
      %p280 = scmp.eq.s32.totalorder %s53, 1
      %p281 = scmp.ne.s32.totalorder %s276, %s278
      %p282 = scmp.eq.s32.totalorder %s53, 0
      %p283 = por %p281, %p282
      %p284 = scmp.ne.s32.totalorder %s276, %s278
      %p285 = scmp.eq.s32.totalorder %s58, 1
      %p286 = por %p284, %p285
      %p287 = scmp.ne.s32.totalorder %s278, %s279
      %p288 = scmp.eq.s32.totalorder %s58, 0
      %p289 = por %p287, %p288
      %p290 = scmp.ne.s32.totalorder %s278, %s279
      %p291 = scmp.eq.s32.totalorder %s59, 1
      %p292 = por %p290, %p291
      %p294 = scmp.ne.s32.totalorder %s279, %s293
      %p295 = scmp.eq.s32.totalorder %s59, 0
      %p296 = por %p294, %p295
      %s298 = sadd.s32 %s297, 1
      %p301 = scmp.eq.s32.totalorder %s53, 1
      %p302 = scmp.ne.s32.totalorder %s297, %s299
      %p303 = scmp.eq.s32.totalorder %s53, 0
      %p304 = por %p302, %p303
      %p305 = scmp.ne.s32.totalorder %s297, %s299
      %p306 = scmp.eq.s32.totalorder %s58, 1
      %p307 = por %p305, %p306
      %p308 = scmp.ne.s32.totalorder %s299, %s300
      %p309 = scmp.eq.s32.totalorder %s58, 0
      %p310 = por %p308, %p309
      %p311 = scmp.ne.s32.totalorder %s299, %s300
      %p312 = scmp.eq.s32.totalorder %s59, 1
      %p313 = por %p311, %p312
      %p315 = scmp.ne.s32.totalorder %s300, %s314
      %p316 = scmp.eq.s32.totalorder %s59, 0
      %p317 = por %p315, %p316
      %s319 = sadd.s32 %s318, 1
      %p322 = scmp.eq.s32.totalorder %s53, 1
      %p323 = scmp.ne.s32.totalorder %s318, %s320
      %p324 = scmp.eq.s32.totalorder %s53, 0
      %p325 = por %p323, %p324
      %p326 = scmp.ne.s32.totalorder %s318, %s320
      %p327 = scmp.eq.s32.totalorder %s58, 1
      %p328 = por %p326, %p327
      %p329 = scmp.ne.s32.totalorder %s320, %s321
      %p330 = scmp.eq.s32.totalorder %s58, 0
      %p331 = por %p329, %p330
      %p332 = scmp.ne.s32.totalorder %s320, %s321
      %p333 = scmp.eq.s32.totalorder %s59, 1
      %p334 = por %p332, %p333
      %p336 = scmp.ne.s32.totalorder %s321, %s335
      %p337 = scmp.eq.s32.totalorder %s59, 0
      %p338 = por %p336, %p337
      %s340 = sadd.s32 %s339, 1
      %p343 = scmp.eq.s32.totalorder %s53, 1
      %p344 = scmp.ne.s32.totalorder %s339, %s341
      %p345 = scmp.eq.s32.totalorder %s53, 0
      %p346 = por %p344, %p345
      %p347 = scmp.ne.s32.totalorder %s339, %s341
      %p348 = scmp.eq.s32.totalorder %s58, 1
      %p349 = por %p347, %p348
      %p350 = scmp.ne.s32.totalorder %s341, %s342
      %p351 = scmp.eq.s32.totalorder %s58, 0
      %p352 = por %p350, %p351
      %p353 = scmp.ne.s32.totalorder %s341, %s342
      %p354 = scmp.eq.s32.totalorder %s59, 1
      %p355 = por %p353, %p354
      %p357 = scmp.ne.s32.totalorder %s342, %s356
      %p358 = scmp.eq.s32.totalorder %s59, 0
      %p359 = por %p357, %p358
      %s361 = sadd.s32 %s360, 1
      %p364 = scmp.eq.s32.totalorder %s53, 1
      %p365 = scmp.ne.s32.totalorder %s360, %s362
      %p366 = scmp.eq.s32.totalorder %s53, 0
      %p367 = por %p365, %p366
      %p368 = scmp.ne.s32.totalorder %s360, %s362
      %p369 = scmp.eq.s32.totalorder %s58, 1
      %p370 = por %p368, %p369
      %p371 = scmp.ne.s32.totalorder %s362, %s363
      %p372 = scmp.eq.s32.totalorder %s58, 0
      %p373 = por %p371, %p372
      %p374 = scmp.ne.s32.totalorder %s362, %s363
      %p375 = scmp.eq.s32.totalorder %s59, 1
      %p376 = por %p374, %p375
      %p378 = scmp.ne.s32.totalorder %s363, %s377
      %p379 = scmp.eq.s32.totalorder %s59, 0
      %p380 = por %p378, %p379
      %s382 = sadd.s32 %s381, 1
      %p385 = scmp.eq.s32.totalorder %s53, 1
      %p386 = scmp.ne.s32.totalorder %s381, %s383
      %p387 = scmp.eq.s32.totalorder %s53, 0
      %p388 = por %p386, %p387
      %p389 = scmp.ne.s32.totalorder %s381, %s383
      %p390 = scmp.eq.s32.totalorder %s58, 1
      %p391 = por %p389, %p390
      %p392 = scmp.ne.s32.totalorder %s383, %s384
      %p393 = scmp.eq.s32.totalorder %s58, 0
      %p394 = por %p392, %p393
      %p395 = scmp.ne.s32.totalorder %s383, %s384
      %p396 = scmp.eq.s32.totalorder %s59, 1
      %p397 = por %p395, %p396
      %p399 = scmp.ne.s32.totalorder %s384, %s398
      %p400 = scmp.eq.s32.totalorder %s59, 0
      %p401 = por %p399, %p400
      %s403 = sadd.s32 %s402, 1
      %p406 = scmp.eq.s32.totalorder %s53, 1
      %p407 = scmp.ne.s32.totalorder %s402, %s404
      %p408 = scmp.eq.s32.totalorder %s53, 0
      %p409 = por %p407, %p408
      %p410 = scmp.ne.s32.totalorder %s402, %s404
      %p411 = scmp.eq.s32.totalorder %s58, 1
      %p412 = por %p410, %p411
      %p413 = scmp.ne.s32.totalorder %s404, %s405
      %p414 = scmp.eq.s32.totalorder %s58, 0
      %p415 = por %p413, %p414
      %p416 = scmp.ne.s32.totalorder %s404, %s405
      %p417 = scmp.eq.s32.totalorder %s59, 1
      %p418 = por %p416, %p417
      %p420 = scmp.ne.s32.totalorder %s405, %s419
      %p421 = scmp.eq.s32.totalorder %s59, 0
      %p422 = por %p420, %p421
      %s423 = ssub.s32 %s53, %s60
      %p424 = scmp.eq.s32.totalorder %s423, 0
      %s426 = sadd.s32 %s425, 1
      %s427 = scalar_select %p424, %s425, %s426
      %p430 = pneg %p424
      %p431 = scmp.eq.s32.totalorder %s53, 1
      %p432 = por %p430, %p431
      %p433 = scmp.ne.s32.totalorder %s425, %s428
      %p434 = scmp.eq.s32.totalorder %s53, 0
      %p435 = por %p433, %p434
      %p436 = scmp.ne.s32.totalorder %s425, %s428
      %p437 = scmp.eq.s32.totalorder %s58, 1
      %p438 = por %p436, %p437
      %p439 = scmp.ne.s32.totalorder %s428, %s429
      %p440 = scmp.eq.s32.totalorder %s58, 0
      %p441 = por %p439, %p440
      %p442 = scmp.ne.s32.totalorder %s428, %s429
      %p443 = scmp.eq.s32.totalorder %s59, 1
      %p444 = por %p442, %p443
      %p446 = scmp.ne.s32.totalorder %s429, %s445
      %p447 = scmp.eq.s32.totalorder %s59, 0
      %p448 = por %p446, %p447
      %s449 = ssub.s32 %s53, %s60
      %p450 = scmp.eq.s32.totalorder %s449, 0
      %s452 = sadd.s32 %s451, 1
      %s453 = scalar_select %p450, %s451, %s452
      %p456 = pneg %p450
      %p457 = scmp.eq.s32.totalorder %s53, 1
      %p458 = por %p456, %p457
      %p459 = scmp.ne.s32.totalorder %s451, %s454
      %p460 = scmp.eq.s32.totalorder %s53, 0
      %p461 = por %p459, %p460
      %p462 = scmp.ne.s32.totalorder %s451, %s454
      %p463 = scmp.eq.s32.totalorder %s58, 1
      %p464 = por %p462, %p463
      %p465 = scmp.ne.s32.totalorder %s454, %s455
      %p466 = scmp.eq.s32.totalorder %s58, 0
      %p467 = por %p465, %p466
      %p468 = scmp.ne.s32.totalorder %s454, %s455
      %p469 = scmp.eq.s32.totalorder %s59, 1
      %p470 = por %p468, %p469
      %p472 = scmp.ne.s32.totalorder %s455, %s471
      %p473 = scmp.eq.s32.totalorder %s59, 0
      %p474 = por %p472, %p473
      %s475 = ssub.s32 %s53, %s60
      %p476 = scmp.eq.s32.totalorder %s475, 0
      %s478 = sadd.s32 %s477, 1
      %s479 = scalar_select %p476, %s477, %s478
      %p482 = pneg %p476
      %p483 = scmp.eq.s32.totalorder %s53, 1
      %p484 = por %p482, %p483
      %p485 = scmp.ne.s32.totalorder %s477, %s480
      %p486 = scmp.eq.s32.totalorder %s53, 0
      %p487 = por %p485, %p486
      %p488 = scmp.ne.s32.totalorder %s477, %s480
      %p489 = scmp.eq.s32.totalorder %s58, 1
      %p490 = por %p488, %p489
      %p491 = scmp.ne.s32.totalorder %s480, %s481
      %p492 = scmp.eq.s32.totalorder %s58, 0
      %p493 = por %p491, %p492
      %p494 = scmp.ne.s32.totalorder %s480, %s481
      %p495 = scmp.eq.s32.totalorder %s59, 1
      %p496 = por %p494, %p495
      %p498 = scmp.ne.s32.totalorder %s481, %s497
      %p499 = scmp.eq.s32.totalorder %s59, 0
      %p500 = por %p498, %p499
      %p501 = scmp.le.s32.totalorder 1, %s53
      %p502 = scmp.lt.s32.totalorder %s53, 3
      %p503 = pnand %p501, %p502
      %p504 = pneg %p503
      // Predicated region
      $region9: #{_lambda_.1} parent=5 // pred_check
        _
      $region10: #{_lambda_.1} parent=5 // pred_check_branch
        %506 = sbr.rel (%p503) target = $region12
      $region11: #{_lambda_.1} parent=5 // pred_region
        %s507 = ssub.s32 %s53, 1
        // Predicated region
        $region13: #{_lambda_.1} parent=11 // pred_check
          %p508 = pneg %p100
        $region14: #{_lambda_.1} parent=11 // pred_check_branch
          %510 = sbr.rel (%p508) target = $region16
        $region15: #{_lambda_.1} parent=11 // pred_region
          _
        $region16: #{_lambda_.1} parent=11 // pred_fallthru
          _
        // Predicated region
        $region17: #{_lambda_.1} parent=11 // pred_check
          %p511 = pneg %p121
        $region18: #{_lambda_.1} parent=11 // pred_check_branch
          %513 = sbr.rel (%p511) target = $region20
        $region19: #{_lambda_.1} parent=11 // pred_region
          _
        $region20: #{_lambda_.1} parent=11 // pred_fallthru
          _
        // Predicated region
        $region21: #{_lambda_.1} parent=11 // pred_check
          %p514 = pneg %p142
        $region22: #{_lambda_.1} parent=11 // pred_check_branch
          %516 = sbr.rel (%p514) target = $region24
        $region23: #{_lambda_.1} parent=11 // pred_region
          _
        $region24: #{_lambda_.1} parent=11 // pred_fallthru
          _
        // Predicated region
        $region25: #{_lambda_.1} parent=11 // pred_check
          %p517 = pneg %p163
        $region26: #{_lambda_.1} parent=11 // pred_check_branch
          %519 = sbr.rel (%p517) target = $region28
        $region27: #{_lambda_.1} parent=11 // pred_region
          %521 = vsyncadd [#allocation8], 0
          %s522 = sshll.u32 %s7, 4
          %s523 = int_to_ptr.hbm [resolvable:$true] %s522
          %s524 = sshll.u32 [#allocation7], 4
          %s525 = int_to_ptr.vmem [resolvable:$true] %s524
          %530 = dma.hbm_to_vmem [thread:$0]  %s523, 384, %s525, [#allocation8], 64, 64, 4
        $region28: #{_lambda_.1} parent=11 // pred_fallthru
          _
        // Predicated region
        $region29: #{_lambda_.1} parent=11 // pred_check
          %p531 = pneg %p184
        $region30: #{_lambda_.1} parent=11 // pred_check_branch
          %533 = sbr.rel (%p531) target = $region32
        $region31: #{_lambda_.1} parent=11 // pred_region
          _
        $region32: #{_lambda_.1} parent=11 // pred_fallthru
          _
        // Predicated region
        $region33: #{_lambda_.1} parent=11 // pred_check
          %p534 = pneg %p205
        $region34: #{_lambda_.1} parent=11 // pred_check_branch
          %536 = sbr.rel (%p534) target = $region36
        $region35: #{_lambda_.1} parent=11 // pred_region
          _
        $region36: #{_lambda_.1} parent=11 // pred_fallthru
          _
        // Predicated region
        $region37: #{_lambda_.1} parent=11 // pred_check
          %p537 = pneg %p226
        $region38: #{_lambda_.1} parent=11 // pred_check_branch
          %539 = sbr.rel (%p537) target = $region40
        $region39: #{_lambda_.1} parent=11 // pred_region
          _
        $region40: #{_lambda_.1} parent=11 // pred_fallthru
          _
        // Predicated region
        $region41: #{_lambda_.1} parent=11 // pred_check
          %p540 = pneg %p247
        $region42: #{_lambda_.1} parent=11 // pred_check_branch
          %542 = sbr.rel (%p540) target = $region44
        $region43: #{_lambda_.1} parent=11 // pred_region
          _
        $region44: #{_lambda_.1} parent=11 // pred_fallthru
          _
        // Predicated region
        $region45: #{_lambda_.1} parent=11 // pred_check
          %p543 = pneg %p268
        $region46: #{_lambda_.1} parent=11 // pred_check_branch
          %545 = sbr.rel (%p543) target = $region48
        $region47: #{_lambda_.1} parent=11 // pred_region
          _
        $region48: #{_lambda_.1} parent=11 // pred_fallthru
          _
        // Predicated region
        $region49: #{_lambda_.1} parent=11 // pred_check
          %p546 = pneg %p289
        $region50: #{_lambda_.1} parent=11 // pred_check_branch
          %548 = sbr.rel (%p546) target = $region52
        $region51: #{_lambda_.1} parent=11 // pred_region
          _
        $region52: #{_lambda_.1} parent=11 // pred_fallthru
          _
        // Predicated region
        $region53: #{_lambda_.1} parent=11 // pred_check
          %p549 = pneg %p310
        $region54: #{_lambda_.1} parent=11 // pred_check_branch
          %551 = sbr.rel (%p549) target = $region56
        $region55: #{_lambda_.1} parent=11 // pred_region
          _
        $region56: #{_lambda_.1} parent=11 // pred_fallthru
          _
        // Predicated region
        $region57: #{_lambda_.1} parent=11 // pred_check
          %p552 = pneg %p331
        $region58: #{_lambda_.1} parent=11 // pred_check_branch
          %554 = sbr.rel (%p552) target = $region60
        $region59: #{_lambda_.1} parent=11 // pred_region
          _
        $region60: #{_lambda_.1} parent=11 // pred_fallthru
          _
        // Predicated region
        $region61: #{_lambda_.1} parent=11 // pred_check
          %p555 = pneg %p352
        $region62: #{_lambda_.1} parent=11 // pred_check_branch
          %557 = sbr.rel (%p555) target = $region64
        $region63: #{_lambda_.1} parent=11 // pred_region
          %559 = vsyncadd [#allocation11], 0
          %s560 = sshll.u32 %s16, 4
          %s561 = int_to_ptr.hbm [resolvable:$true] %s560
          %s562 = sshll.u32 [#allocation10], 4
          %s563 = int_to_ptr.vmem [resolvable:$true] %s562
          %568 = dma.hbm_to_vmem [thread:$0]  %s561, 1792, %s563, [#allocation11], 448, 448, 28
        $region64: #{_lambda_.1} parent=11 // pred_fallthru
          _
        // Predicated region
        $region65: #{_lambda_.1} parent=11 // pred_check
          %p569 = pneg %p373
        $region66: #{_lambda_.1} parent=11 // pred_check_branch
          %571 = sbr.rel (%p569) target = $region68
        $region67: #{_lambda_.1} parent=11 // pred_region
          _
        $region68: #{_lambda_.1} parent=11 // pred_fallthru
          _
        // Predicated region
        $region69: #{_lambda_.1} parent=11 // pred_check
          %p572 = pneg %p394
        $region70: #{_lambda_.1} parent=11 // pred_check_branch
          %574 = sbr.rel (%p572) target = $region72
        $region71: #{_lambda_.1} parent=11 // pred_region
          %576 = vsyncadd [#allocation11], 0
          %s577 = sshll.u32 %s18, 4
          %s578 = int_to_ptr.hbm [resolvable:$true] %s577
          %s579 = sshll.u32 [#allocation12], 4
          %s580 = int_to_ptr.vmem [resolvable:$true] %s579
          %585 = dma.hbm_to_vmem [thread:$0]  %s578, 512, %s580, [#allocation11], 256, 256, 16
        $region72: #{_lambda_.1} parent=11 // pred_fallthru
          _
        // Predicated region
        $region73: #{_lambda_.1} parent=11 // pred_check
          %p586 = pneg %p415
        $region74: #{_lambda_.1} parent=11 // pred_check_branch
          %588 = sbr.rel (%p586) target = $region76
        $region75: #{_lambda_.1} parent=11 // pred_region
          %590 = vsyncadd [#allocation14], 0
          %s591 = sshll.u32 %s19, 4
          %s592 = int_to_ptr.hbm [resolvable:$true] %s591
          %s593 = sshll.u32 [#allocation13], 4
          %s594 = int_to_ptr.vmem [resolvable:$true] %s593
          %599 = dma.hbm_to_vmem [thread:$0]  %s592, 512, %s594, [#allocation14], 256, 256, 16
        $region76: #{_lambda_.1} parent=11 // pred_fallthru
          _
      $region12: #{_lambda_.1} parent=5 // pred_fallthru
        _
      %p600 = scmp.lt.s32.totalorder %s53, 2
      // Predicated region
      $region77: #{_lambda_.1} parent=5 // pred_check
        %p601 = pneg %p600
      $region78: #{_lambda_.1} parent=5 // pred_check_branch
        %603 = sbr.rel (%p601) target = $region80
      $region79: #{_lambda_.1} parent=5 // pred_region
        // Predicated region
        $region81: #{_lambda_.1} parent=79 // pred_check
          %p604 = pneg %p73
        $region82: #{_lambda_.1} parent=79 // pred_check_branch
          %606 = sbr.rel (%p604) target = $region84
        $region83: #{_lambda_.1} parent=79 // pred_region
          %p607 = scmp.lt.s32.totalorder %s53, 1
          %s608 = scalar_select %p607, %s53, 1
          %s609 = smul.addr %s608, 8
          %s610 = smul.addr %s609, 8
          %s611 = scalar_lea.vmem %s3, %s610
        $region84: #{_lambda_.1} parent=79 // pred_fallthru
          _
      $region80: #{_lambda_.1} parent=5 // pred_fallthru
        _
      %p612 = scmp.le.s32.totalorder 1, %s53
      %p613 = scmp.lt.s32.totalorder %s53, 3
      %p614 = pnand %p612, %p613
      %p615 = pneg %p614
      // Predicated region
      $region85: #{_lambda_.1} parent=5 // pred_check
        _
      $region86: #{_lambda_.1} parent=5 // pred_check_branch
        %617 = sbr.rel (%p614) target = $region88
      $region87: #{_lambda_.1} parent=5 // pred_region
        %s618 = ssub.s32 %s53, 1
        // Predicated region
        $region89: #{_lambda_.1} parent=87 // pred_check
          %p619 = pneg %p163
        $region90: #{_lambda_.1} parent=87 // pred_check_branch
          %621 = sbr.rel (%p619) target = $region92
        $region91: #{_lambda_.1} parent=87 // pred_region
          %623 = dma.done [#allocation8], 384
        $region92: #{_lambda_.1} parent=87 // pred_fallthru
          _
        // Predicated region
        $region93: #{_lambda_.1} parent=87 // pred_check
          %p624 = pneg %p352
        $region94: #{_lambda_.1} parent=87 // pred_check_branch
          %626 = sbr.rel (%p624) target = $region96
        $region95: #{_lambda_.1} parent=87 // pred_region
          %628 = dma.done [#allocation11], 1792
        $region96: #{_lambda_.1} parent=87 // pred_fallthru
          _
        // Predicated region
        $region97: #{_lambda_.1} parent=87 // pred_check
          %p629 = pneg %p394
        $region98: #{_lambda_.1} parent=87 // pred_check_branch
          %631 = sbr.rel (%p629) target = $region100
        $region99: #{_lambda_.1} parent=87 // pred_region
          %633 = dma.done [#allocation11], 512
        $region100: #{_lambda_.1} parent=87 // pred_fallthru
          _
        // Predicated region
        $region101: #{_lambda_.1} parent=87 // pred_check
          %p634 = pneg %p415
        $region102: #{_lambda_.1} parent=87 // pred_check_branch
          %636 = sbr.rel (%p634) target = $region104
        $region103: #{_lambda_.1} parent=87 // pred_region
          %638 = dma.done [#allocation14], 512
        $region104: #{_lambda_.1} parent=87 // pred_fallthru
          _
        %p639 = scmp.lt.s32.totalorder %s58, 1
        %s640 = scalar_select %p639, %s58, 1
        %s641 = smul.addr %s640, 8
        %s642 = smul.addr %s641, 8
        %s643 = scalar_lea.vmem %s3, %s642
        %p644 = pneg %p79
        %p645 = pneg %p76
        %p646 = pneg %p100
        %p647 = pneg %p97
        %p648 = pneg %p121
        %p649 = pneg %p118
        %p650 = pneg %p142
        %p651 = pneg %p139
        %p652 = pneg %p163
        %p653 = pneg %p160
        %p654 = pneg %p184
        %p655 = pneg %p181
        %p656 = pneg %p205
        %p657 = pneg %p202
        %p658 = pneg %p226
        %p659 = pneg %p223
        %p660 = pneg %p247
        %p661 = pneg %p244
        %p662 = pneg %p268
        %p663 = pneg %p265
        %p664 = pneg %p289
        %p665 = pneg %p286
        %p666 = pneg %p310
        %p667 = pneg %p307
        %p668 = pneg %p331
        %p669 = pneg %p328
        %p670 = pneg %p352
        %p671 = pneg %p349
        %p672 = pneg %p373
        %p673 = pneg %p370
        %p674 = pneg %p394
        %p675 = pneg %p391
        %p676 = pneg %p415
        %p677 = pneg %p412
        %p678 = pneg %p441
        %p679 = pneg %p438
        %s680 = sand.u32 %s428, 1
        %s681 = scalar_lea.sflag [#allocation9], %s680
        %s682 = sand.u32 %s428, 1
        %s683 = smul.addr %s682, 64
        %s684 = scalar_lea.vmem [#allocation15], %s683
        %p685 = pneg %p467
        %p686 = pneg %p464
        %p687 = scmp.lt.s32.totalorder %s58, 1
        %s688 = scalar_select %p687, %s58, 1
        %s689 = smul.addr %s688, 14
        %s690 = smul.addr %s689, 8
        %s691 = scalar_lea.vmem %s21, %s690
        %p692 = pneg %p493
        %p693 = pneg %p490
        %p694 = scmp.lt.s32.totalorder %s58, 1
        %s695 = scalar_select %p694, %s58, 1
        %s696 = smul.addr %s695, 8
        %s697 = scalar_lea.vmem %s22, %s696
        %p698 = scmp.lt.s32.totalorder %s58, 1
        %s699 = scalar_select %p698, %s58, 1
        %s700 = smul.addr %s699, 8
        %s701 = smul.addr %s700, 8
        %s702 = scalar_lea.vmem %s3, %s701
        %p703 = scmp.lt.s32.totalorder %s58, 1
        %s704 = scalar_select %p703, %s58, 1
        %s705 = smul.addr %s704, 14
        %s706 = smul.addr %s705, 8
        %s707 = scalar_lea.vmem %s21, %s706
        %p708 = scmp.lt.s32.totalorder %s58, 1
        %s709 = scalar_select %p708, %s58, 1
        %s710 = smul.addr %s709, 8
        %s711 = scalar_lea.vmem %s22, %s710
        %v713 = vld [vmem:[%s702] sm:$0xff]
        %v714 = vld [vmem:[%s702 + $0x8] sm:$0xff]
        %v715 = vld [vmem:[%s702 + $0x10] sm:$0xff]
        %v716 = vld [vmem:[%s702 + $0x18] sm:$0xff]
        %v717 = vld [vmem:[%s702 + $0x20] sm:$0xff]
        %v718 = vld [vmem:[%s702 + $0x28] sm:$0xff]
        %v719 = vld [vmem:[%s702 + $0x30] sm:$0xff]
        %v720 = vld [vmem:[%s702 + $0x38] sm:$0xff]
        %s721 = sld [smem:[#allocation5 + %s58]]
        %v722 = vstv %s721
        %v723 = vrcp.pop %v722
        %v724 = vmul.f32 %v722, %v723
        %v725 = vsub.f32 1.0, %v724
        %v726 = vmul.f32 %v723, %v725
        %v727 = vadd.f32 %v723, %v726
        %vm728 = vweird.f32 %v722
        %vm729 = vweird.f32 %v723
        %vm730 = vmor %vm728, %vm729
        %v731 = vsel %vm730, %v723, %v727
        %v732 = vand.u32 2147483647, %v722
        %vm733 = vcmp.eq.f32.partialorder %v732, 8.507059e+37
        %v734 = vand.u32 %v722, 2147483648
        %v735 = vor.u32 1.1754944e-38, %v734
        %v736 = vsel %vm733, %v735, %v731
        %s737 = vtos %v736
        %s738 = smul.f32 2.0, %s737
        %s739 = sld [smem:[#allocation4 + %s58]]
        %v740 = vstv %s739
        %v741 = vsub.f32 %v713, %v740
        %v742 = vsub.f32 %v714, %v740
        %v743 = vsub.f32 %v715, %v740
        %v744 = vsub.f32 %v716, %v740
        %v745 = vsub.f32 %v717, %v740
        %v746 = vsub.f32 %v718, %v740
        %v747 = vsub.f32 %v719, %v740
        %v748 = vsub.f32 %v720, %v740
        %v749 = vstv %s738
        %v750 = vmul.f32 %v741, %v749
        %v751 = vmul.f32 %v742, %v749
        %v752 = vmul.f32 %v743, %v749
        %v753 = vmul.f32 %v744, %v749
        %v754 = vmul.f32 %v745, %v749
        %v755 = vmul.f32 %v746, %v749
        %v756 = vmul.f32 %v747, %v749
        %v757 = vmul.f32 %v748, %v749
        %v758 = vmax.f32 %v750, -1.0
        %v759 = vmax.f32 %v751, -1.0
        %v760 = vmax.f32 %v752, -1.0
        %v761 = vmax.f32 %v753, -1.0
        %v762 = vmax.f32 %v754, -1.0
        %v763 = vmax.f32 %v755, -1.0
        %v764 = vmax.f32 %v756, -1.0
        %v765 = vmax.f32 %v757, -1.0
        %v766 = vmin.f32 %v758, 1.0
        %v767 = vmin.f32 %v759, 1.0
        %v768 = vmin.f32 %v760, 1.0
        %v769 = vmin.f32 %v761, 1.0
        %v770 = vmin.f32 %v762, 1.0
        %v771 = vmin.f32 %v763, 1.0
        %v772 = vmin.f32 %v764, 1.0
        %v773 = vmin.f32 %v765, 1.0
        %vm774 = vcmp.gt.f32.partialorder %v713, 0.0
        %vm775 = vcmp.gt.f32.partialorder %v714, 0.0
        %vm776 = vcmp.gt.f32.partialorder %v715, 0.0
        %vm777 = vcmp.gt.f32.partialorder %v716, 0.0
        %vm778 = vcmp.gt.f32.partialorder %v717, 0.0
        %vm779 = vcmp.gt.f32.partialorder %v718, 0.0
        %vm780 = vcmp.gt.f32.partialorder %v719, 0.0
        %vm781 = vcmp.gt.f32.partialorder %v720, 0.0
        %v782 = vsel %vm774, %v766, 1.0
        %v783 = vsel %vm775, %v767, 1.0
        %v784 = vsel %vm776, %v768, 1.0
        %v785 = vsel %vm777, %v769, 1.0
        %v786 = vsel %vm778, %v770, 1.0
        %v787 = vsel %vm779, %v771, 1.0
        %v788 = vsel %vm780, %v772, 1.0
        %v789 = vsel %vm781, %v773, 1.0
        %vm790 = vcmask 523264
        %791 = vst.msk [vmem:[%s684] sm:$0xff] %vm790, %v782
        %792 = vst.msk [vmem:[%s684 + $0x8] sm:$0xff] %vm790, %v783
        %793 = vst.msk [vmem:[%s684 + $0x10] sm:$0xff] %vm790, %v784
        %794 = vst.msk [vmem:[%s684 + $0x18] sm:$0xff] %vm790, %v785
        %795 = vst.msk [vmem:[%s684 + $0x20] sm:$0xff] %vm790, %v786
        %796 = vst.msk [vmem:[%s684 + $0x28] sm:$0xff] %vm790, %v787
        %797 = vst.msk [vmem:[%s684 + $0x30] sm:$0xff] %vm790, %v788
        %798 = vst.msk [vmem:[%s684 + $0x38] sm:$0xff] %vm790, %v789
        %v799 = vpack.c.bf16 %v783, %v782
        %v800 = vpack.c.bf16 %v785, %v784
        %v801 = vpack.c.bf16 %v787, %v786
        %v802 = vpack.c.bf16 %v789, %v788
        %v803 = vld [vmem:[%s4] sm:$0xf]
        %v804 = vld [vmem:[%s4 + $0x4] sm:$0xf]
        %v805 = vld [vmem:[%s4 + $0x8] sm:$0xf]
        %v806 = vld [vmem:[%s4 + $0xc] sm:$0xf]
        %v811 = vunpack.c.l.b16 %v803
        %v812 = vunpack.c.l.b16 %v804
        %v813 = vunpack.c.l.b16 %v805
        %v814 = vunpack.c.l.b16 %v806
        %v815 = vpack.c.b16 %v812, %v811
        %v816 = vpack.c.b16 %v814, %v813
        %v818 = vsel %vm790, %v815, 0
        %v821 = vsel %vm790, %v816, 0
        %823 = vmatpush.bf16.msra.mxu0 0
        %824 = vmatpush.bf16.msra.mxu0 0
        %825 = vmatpush.bf16.msra.mxu0 0
        %826 = vmatpush.bf16.msra.mxu0 0
        %827 = vmatpush.bf16.msra.mxu0 %v802
        %828 = vmatpush.bf16.msra.mxu0 %v801
        %829 = vmatpush.bf16.msra.mxu0 %v800
        %830 = vmatpush.bf16.msra.mxu0 %v799
        %831 = vmatmul.bf16.gmra.mxu0 %v818
        %v832 = vpop.f32.mrf.mxu0
        %v833 = vadd.f32 0.0, %v832
        %v834 = vpop.f32.mrf.mxu0
        %v835 = vadd.f32 0.0, %v834
        %836 = vmatmul.bf16.gmra.mxu0 %v821
        %v837 = vpop.f32.mrf.mxu0
        %v838 = vadd.f32 0.0, %v837
        %v839 = vpop.f32.mrf.mxu0
        %v840 = vadd.f32 0.0, %v839
        %841 = vdwg.mxu0
        %v842 = vpack.c.bf16 %v835, %v833
        %v843 = vpack.c.bf16 %v840, %v838
        %v844 = vld [vmem:[%s5] sm:$0xff]
        %v845 = vld [vmem:[%s5 + $0x8] sm:$0xff]
        %v846 = vld [vmem:[%s5 + $0x10] sm:$0xff]
        %v847 = vld [vmem:[%s5 + $0x18] sm:$0xff]
        %v848 = vld [vmem:[%s5 + $0x20] sm:$0xff]
        %v849 = vld [vmem:[%s5 + $0x28] sm:$0xff]
        %v850 = vld [vmem:[%s5 + $0x30] sm:$0xff]
        %v851 = vld [vmem:[%s5 + $0x38] sm:$0xff]
        %s852 = scalar_lea.vmem %s4, 16
        %v853 = vld [vmem:[%s852] sm:$0xf]
        %v854 = vld [vmem:[%s852 + $0x4] sm:$0xf]
        %v855 = vld [vmem:[%s852 + $0x8] sm:$0xf]
        %v856 = vld [vmem:[%s852 + $0xc] sm:$0xf]
        %v861 = vunpack.c.l.b16 %v853
        %v862 = vunpack.c.l.b16 %v854
        %v863 = vunpack.c.l.b16 %v855
        %v864 = vunpack.c.l.b16 %v856
        %v865 = vpack.c.b16 %v862, %v861
        %v866 = vpack.c.b16 %v864, %v863
        %v868 = vsel %vm790, %v865, 0
        %v871 = vsel %vm790, %v866, 0
        %873 = vmatpush.bf16.msra.mxu0 0
        %874 = vmatpush.bf16.msra.mxu0 0
        %875 = vmatpush.bf16.msra.mxu0 0
        %876 = vmatpush.bf16.msra.mxu0 0
        %877 = vmatpush.bf16.msra.mxu0 %v802
        %878 = vmatpush.bf16.msra.mxu0 %v801
        %879 = vmatpush.bf16.msra.mxu0 %v800
        %880 = vmatpush.bf16.msra.mxu0 %v799
        %881 = vmatmul.bf16.gmra.mxu0 %v868
        %v882 = vpop.f32.mrf.mxu0
        %v883 = vadd.f32 0.0, %v882
        %v884 = vpop.f32.mrf.mxu0
        %v885 = vadd.f32 0.0, %v884
        %886 = vmatmul.bf16.gmra.mxu0 %v871
        %v887 = vpop.f32.mrf.mxu0
        %v888 = vadd.f32 0.0, %v887
        %v889 = vpop.f32.mrf.mxu0
        %v890 = vadd.f32 0.0, %v889
        %891 = vdwg.mxu0
        %v892 = vpack.c.bf16 %v885, %v883
        %v893 = vpack.c.bf16 %v890, %v888
        %s894 = scalar_lea.vmem %s5, 64
        %v895 = vld [vmem:[%s894] sm:$0xff]
        %v896 = vld [vmem:[%s894 + $0x8] sm:$0xff]
        %v897 = vld [vmem:[%s894 + $0x10] sm:$0xff]
        %v898 = vld [vmem:[%s894 + $0x18] sm:$0xff]
        %v899 = vld [vmem:[%s894 + $0x20] sm:$0xff]
        %v900 = vld [vmem:[%s894 + $0x28] sm:$0xff]
        %v901 = vld [vmem:[%s894 + $0x30] sm:$0xff]
        %v902 = vld [vmem:[%s894 + $0x38] sm:$0xff]
        %v911 = vunpack.c.l.b16 %v895
        %v912 = vunpack.c.h.b16 %v895
        %v913 = vunpack.c.l.b16 %v896
        %v914 = vunpack.c.h.b16 %v896
        %v915 = vunpack.c.l.b16 %v897
        %v916 = vunpack.c.h.b16 %v897
        %v917 = vunpack.c.l.b16 %v898
        %v918 = vunpack.c.h.b16 %v898
        %v919 = vunpack.c.l.b16 %v899
        %v920 = vunpack.c.h.b16 %v899
        %v921 = vunpack.c.l.b16 %v900
        %v922 = vunpack.c.h.b16 %v900
        %v923 = vunpack.c.l.b16 %v901
        %v924 = vunpack.c.h.b16 %v901
        %v925 = vunpack.c.l.b16 %v902
        %v926 = vunpack.c.h.b16 %v902
        %v927 = vpack.c.b16 %v913, %v911
        %v928 = vpack.c.b16 %v914, %v912
        %v929 = vpack.c.b16 %v917, %v915
        %v930 = vpack.c.b16 %v918, %v916
        %v931 = vpack.c.b16 %v921, %v919
        %v932 = vpack.c.b16 %v922, %v920
        %v933 = vpack.c.b16 %v925, %v923
        %v934 = vpack.c.b16 %v926, %v924
        %v944 = vsel %vm790, %v892, 0
        %v947 = vsel %vm790, %v893, 0
        %949 = vmatpush.bf16.msra.mxu0 0
        %950 = vmatpush.bf16.msra.mxu0 0
        %951 = vmatpush.bf16.msra.mxu0 0
        %952 = vmatpush.bf16.msra.mxu0 0
        %953 = vmatpush.bf16.msra.mxu0 %v933
        %954 = vmatpush.bf16.msra.mxu0 %v931
        %955 = vmatpush.bf16.msra.mxu0 %v929
        %956 = vmatpush.bf16.msra.mxu0 %v927
        %957 = vmatmul.bf16.gmra.mxu0 %v944
        %v958 = vpop.f32.mrf.mxu0
        %v959 = vadd.f32 0.0, %v958
        %v960 = vpop.f32.mrf.mxu0
        %v961 = vadd.f32 0.0, %v960
        %962 = vmatmul.bf16.gmra.mxu0 %v947
        %v963 = vpop.f32.mrf.mxu0
        %v964 = vadd.f32 0.0, %v963
        %v965 = vpop.f32.mrf.mxu0
        %v966 = vadd.f32 0.0, %v965
        %967 = vdwg.mxu0
        %968 = vmatpush.bf16.msra.mxu0 0
        %969 = vmatpush.bf16.msra.mxu0 0
        %970 = vmatpush.bf16.msra.mxu0 0
        %971 = vmatpush.bf16.msra.mxu0 0
        %972 = vmatpush.bf16.msra.mxu0 %v934
        %973 = vmatpush.bf16.msra.mxu0 %v932
        %974 = vmatpush.bf16.msra.mxu0 %v930
        %975 = vmatpush.bf16.msra.mxu0 %v928
        %976 = vmatmul.bf16.gmra.mxu0 %v944
        %v977 = vpop.f32.mrf.mxu0
        %v978 = vadd.f32 0.0, %v977
        %v979 = vpop.f32.mrf.mxu0
        %v980 = vadd.f32 0.0, %v979
        %981 = vmatmul.bf16.gmra.mxu0 %v947
        %v982 = vpop.f32.mrf.mxu0
        %v983 = vadd.f32 0.0, %v982
        %v984 = vpop.f32.mrf.mxu0
        %v985 = vadd.f32 0.0, %v984
        %986 = vdwg.mxu0
        %v995 = vunpack.c.l.b16 %v844
        %v996 = vunpack.c.h.b16 %v844
        %v997 = vunpack.c.l.b16 %v845
        %v998 = vunpack.c.h.b16 %v845
        %v999 = vunpack.c.l.b16 %v846
        %v1000 = vunpack.c.h.b16 %v846
        %v1001 = vunpack.c.l.b16 %v847
        %v1002 = vunpack.c.h.b16 %v847
        %v1003 = vunpack.c.l.b16 %v848
        %v1004 = vunpack.c.h.b16 %v848
        %v1005 = vunpack.c.l.b16 %v849
        %v1006 = vunpack.c.h.b16 %v849
        %v1007 = vunpack.c.l.b16 %v850
        %v1008 = vunpack.c.h.b16 %v850
        %v1009 = vunpack.c.l.b16 %v851
        %v1010 = vunpack.c.h.b16 %v851
        %v1011 = vpack.c.b16 %v997, %v995
        %v1012 = vpack.c.b16 %v998, %v996
        %v1013 = vpack.c.b16 %v1001, %v999
        %v1014 = vpack.c.b16 %v1002, %v1000
        %v1015 = vpack.c.b16 %v1005, %v1003
        %v1016 = vpack.c.b16 %v1006, %v1004
        %v1017 = vpack.c.b16 %v1009, %v1007
        %v1018 = vpack.c.b16 %v1010, %v1008
        %v1028 = vsel %vm790, %v842, 0
        %v1031 = vsel %vm790, %v843, 0
        %1033 = vmatpush.bf16.msra.mxu0 0
        %1034 = vmatpush.bf16.msra.mxu0 0
        %1035 = vmatpush.bf16.msra.mxu0 0
        %1036 = vmatpush.bf16.msra.mxu0 0
        %1037 = vmatpush.bf16.msra.mxu0 %v1017
        %1038 = vmatpush.bf16.msra.mxu0 %v1015
        %1039 = vmatpush.bf16.msra.mxu0 %v1013
        %1040 = vmatpush.bf16.msra.mxu0 %v1011
        %1041 = vmatmul.bf16.gmra.mxu0 %v1028
        %v1042 = vpop.f32.mrf.mxu0
        %v1043 = vadd.f32 %v959, %v1042
        %v1044 = vpop.f32.mrf.mxu0
        %v1045 = vadd.f32 %v961, %v1044
        %1046 = vmatmul.bf16.gmra.mxu0 %v1031
        %v1047 = vpop.f32.mrf.mxu0
        %v1048 = vadd.f32 %v964, %v1047
        %v1049 = vpop.f32.mrf.mxu0
        %v1050 = vadd.f32 %v966, %v1049
        %1051 = vdwg.mxu0
        %1052 = vmatpush.bf16.msra.mxu0 0
        %1053 = vmatpush.bf16.msra.mxu0 0
        %1054 = vmatpush.bf16.msra.mxu0 0
        %1055 = vmatpush.bf16.msra.mxu0 0
        %1056 = vmatpush.bf16.msra.mxu0 %v1018
        %1057 = vmatpush.bf16.msra.mxu0 %v1016
        %1058 = vmatpush.bf16.msra.mxu0 %v1014
        %1059 = vmatpush.bf16.msra.mxu0 %v1012
        %1060 = vmatmul.bf16.gmra.mxu0 %v1028
        %v1061 = vpop.f32.mrf.mxu0
        %v1062 = vadd.f32 %v978, %v1061
        %v1063 = vpop.f32.mrf.mxu0
        %v1064 = vadd.f32 %v980, %v1063
        %1065 = vmatmul.bf16.gmra.mxu0 %v1031
        %v1066 = vpop.f32.mrf.mxu0
        %v1067 = vadd.f32 %v983, %v1066
        %v1068 = vpop.f32.mrf.mxu0
        %v1069 = vadd.f32 %v985, %v1068
        %1070 = vdwg.mxu0
        %s1071 = scalar_lea.vmem %s4, 32
        %v1072 = vld [vmem:[%s1071] sm:$0xf]
        %v1073 = vld [vmem:[%s1071 + $0x4] sm:$0xf]
        %v1074 = vld [vmem:[%s1071 + $0x8] sm:$0xf]
        %v1075 = vld [vmem:[%s1071 + $0xc] sm:$0xf]
        %v1080 = vunpack.c.l.b16 %v1072
        %v1081 = vunpack.c.l.b16 %v1073
        %v1082 = vunpack.c.l.b16 %v1074
        %v1083 = vunpack.c.l.b16 %v1075
        %v1084 = vpack.c.b16 %v1081, %v1080
        %v1085 = vpack.c.b16 %v1083, %v1082
        %v1087 = vsel %vm790, %v1084, 0
        %v1090 = vsel %vm790, %v1085, 0
        %1092 = vmatpush.bf16.msra.mxu0 0
        %1093 = vmatpush.bf16.msra.mxu0 0
        %1094 = vmatpush.bf16.msra.mxu0 0
        %1095 = vmatpush.bf16.msra.mxu0 0
        %1096 = vmatpush.bf16.msra.mxu0 %v802
        %1097 = vmatpush.bf16.msra.mxu0 %v801
        %1098 = vmatpush.bf16.msra.mxu0 %v800
        %1099 = vmatpush.bf16.msra.mxu0 %v799
        %1100 = vmatmul.bf16.gmra.mxu0 %v1087
        %v1101 = vpop.f32.mrf.mxu0
        %v1102 = vadd.f32 0.0, %v1101
        %v1103 = vpop.f32.mrf.mxu0
        %v1104 = vadd.f32 0.0, %v1103
        %1105 = vmatmul.bf16.gmra.mxu0 %v1090
        %v1106 = vpop.f32.mrf.mxu0
        %v1107 = vadd.f32 0.0, %v1106
        %v1108 = vpop.f32.mrf.mxu0
        %v1109 = vadd.f32 0.0, %v1108
        %1110 = vdwg.mxu0
        %v1111 = vpack.c.bf16 %v1104, %v1102
        %v1112 = vpack.c.bf16 %v1109, %v1107
        %s1113 = scalar_lea.vmem %s5, 128
        %v1114 = vld [vmem:[%s1113] sm:$0xff]
        %v1115 = vld [vmem:[%s1113 + $0x8] sm:$0xff]
        %v1116 = vld [vmem:[%s1113 + $0x10] sm:$0xff]
        %v1117 = vld [vmem:[%s1113 + $0x18] sm:$0xff]
        %v1118 = vld [vmem:[%s1113 + $0x20] sm:$0xff]
        %v1119 = vld [vmem:[%s1113 + $0x28] sm:$0xff]
        %v1120 = vld [vmem:[%s1113 + $0x30] sm:$0xff]
        %v1121 = vld [vmem:[%s1113 + $0x38] sm:$0xff]
        %v1130 = vunpack.c.l.b16 %v1114
        %v1131 = vunpack.c.h.b16 %v1114
        %v1132 = vunpack.c.l.b16 %v1115
        %v1133 = vunpack.c.h.b16 %v1115
        %v1134 = vunpack.c.l.b16 %v1116
        %v1135 = vunpack.c.h.b16 %v1116
        %v1136 = vunpack.c.l.b16 %v1117
        %v1137 = vunpack.c.h.b16 %v1117
        %v1138 = vunpack.c.l.b16 %v1118
        %v1139 = vunpack.c.h.b16 %v1118
        %v1140 = vunpack.c.l.b16 %v1119
        %v1141 = vunpack.c.h.b16 %v1119
        %v1142 = vunpack.c.l.b16 %v1120
        %v1143 = vunpack.c.h.b16 %v1120
        %v1144 = vunpack.c.l.b16 %v1121
        %v1145 = vunpack.c.h.b16 %v1121
        %v1146 = vpack.c.b16 %v1132, %v1130
        %v1147 = vpack.c.b16 %v1133, %v1131
        %v1148 = vpack.c.b16 %v1136, %v1134
        %v1149 = vpack.c.b16 %v1137, %v1135
        %v1150 = vpack.c.b16 %v1140, %v1138
        %v1151 = vpack.c.b16 %v1141, %v1139
        %v1152 = vpack.c.b16 %v1144, %v1142
        %v1153 = vpack.c.b16 %v1145, %v1143
        %v1163 = vsel %vm790, %v1111, 0
        %v1166 = vsel %vm790, %v1112, 0
        %1168 = vmatpush.bf16.msra.mxu0 0
        %1169 = vmatpush.bf16.msra.mxu0 0
        %1170 = vmatpush.bf16.msra.mxu0 0
        %1171 = vmatpush.bf16.msra.mxu0 0
        %1172 = vmatpush.bf16.msra.mxu0 %v1152
        %1173 = vmatpush.bf16.msra.mxu0 %v1150
        %1174 = vmatpush.bf16.msra.mxu0 %v1148
        %1175 = vmatpush.bf16.msra.mxu0 %v1146
        %1176 = vmatmul.bf16.gmra.mxu0 %v1163
        %v1177 = vpop.f32.mrf.mxu0
        %v1178 = vadd.f32 0.0, %v1177
        %v1179 = vpop.f32.mrf.mxu0
        %v1180 = vadd.f32 0.0, %v1179
        %1181 = vmatmul.bf16.gmra.mxu0 %v1166
        %v1182 = vpop.f32.mrf.mxu0
        %v1183 = vadd.f32 0.0, %v1182
        %v1184 = vpop.f32.mrf.mxu0
        %v1185 = vadd.f32 0.0, %v1184
        %1186 = vdwg.mxu0
        %1187 = vmatpush.bf16.msra.mxu0 0
        %1188 = vmatpush.bf16.msra.mxu0 0
        %1189 = vmatpush.bf16.msra.mxu0 0
        %1190 = vmatpush.bf16.msra.mxu0 0
        %1191 = vmatpush.bf16.msra.mxu0 %v1153
        %1192 = vmatpush.bf16.msra.mxu0 %v1151
        %1193 = vmatpush.bf16.msra.mxu0 %v1149
        %1194 = vmatpush.bf16.msra.mxu0 %v1147
        %1195 = vmatmul.bf16.gmra.mxu0 %v1163
        %v1196 = vpop.f32.mrf.mxu0
        %v1197 = vadd.f32 0.0, %v1196
        %v1198 = vpop.f32.mrf.mxu0
        %v1199 = vadd.f32 0.0, %v1198
        %1200 = vmatmul.bf16.gmra.mxu0 %v1166
        %v1201 = vpop.f32.mrf.mxu0
        %v1202 = vadd.f32 0.0, %v1201
        %v1203 = vpop.f32.mrf.mxu0
        %v1204 = vadd.f32 0.0, %v1203
        %1205 = vdwg.mxu0
        %v1206 = vadd.f32 %v1043, %v1178
        %v1207 = vadd.f32 %v1062, %v1197
        %v1208 = vadd.f32 %v1045, %v1180
        %v1209 = vadd.f32 %v1064, %v1199
        %v1210 = vadd.f32 %v1048, %v1183
        %v1211 = vadd.f32 %v1067, %v1202
        %v1212 = vadd.f32 %v1050, %v1185
        %v1213 = vadd.f32 %v1069, %v1204
        %v1214 = vld [vmem:[%s6] sm:$0x3]
        %v1216 = vperm.slane %v1214, 0
        %v1217 = vperm.slane %v1214, 1
        %v1220 = vadd.f32 %v1206, %v1216
        %v1221 = vadd.f32 %v1207, %v1217
        %v1222 = vadd.f32 %v1208, %v1216
        %v1223 = vadd.f32 %v1209, %v1217
        %v1224 = vadd.f32 %v1210, %v1216
        %v1225 = vadd.f32 %v1211, %v1217
        %v1226 = vadd.f32 %v1212, %v1216
        %v1227 = vadd.f32 %v1213, %v1217
        %v1228 = vmax.f32 %v1220, 0.0
        %v1229 = vmax.f32 %v1221, 0.0
        %v1230 = vmax.f32 %v1222, 0.0
        %v1231 = vmax.f32 %v1223, 0.0
        %v1232 = vmax.f32 %v1224, 0.0
        %v1233 = vmax.f32 %v1225, 0.0
        %v1234 = vmax.f32 %v1226, 0.0
        %v1235 = vmax.f32 %v1227, 0.0
        %v1236 = vpack.c.bf16 %v1230, %v1228
        %v1237 = vpack.c.bf16 %v1231, %v1229
        %v1238 = vpack.c.bf16 %v1234, %v1232
        %v1239 = vpack.c.bf16 %v1235, %v1233
        %v1240 = vld [vmem:[#allocation7] sm:$0xf]
        %v1241 = vld [vmem:[#allocation7 + $0x4] sm:$0xf]
        %v1244 = vunpack.c.l.b16 %v1240
        %v1245 = vunpack.c.l.b16 %v1241
        %v1246 = vpack.c.b16 %v1245, %v1244
        %vm1247 = vcmask 261120
        %v1249 = vsel %vm1247, %v1246, 0
        %1251 = vmatpush.bf16.msra.mxu0 0
        %1252 = vmatpush.bf16.msra.mxu0 0
        %1253 = vmatpush.bf16.msra.mxu0 0
        %1254 = vmatpush.bf16.msra.mxu0 0
        %1255 = vmatpush.bf16.msra.mxu0 0
        %1256 = vmatpush.bf16.msra.mxu0 0
        %1257 = vmatpush.bf16.msra.mxu0 %v1238
        %1258 = vmatpush.bf16.msra.mxu0 %v1236
        %1259 = vmatmul.bf16.gmra.mxu0 %v1249
        %v1260 = vpop.f32.mrf.mxu0
        %v1261 = vadd.f32 0.0, %v1260
        %v1262 = vpop.f32.mrf.mxu0
        %v1263 = vadd.f32 0.0, %v1262
        %1264 = vdwg.mxu0
        %1265 = vmatpush.bf16.msra.mxu0 0
        %1266 = vmatpush.bf16.msra.mxu0 0
        %1267 = vmatpush.bf16.msra.mxu0 0
        %1268 = vmatpush.bf16.msra.mxu0 0
        %1269 = vmatpush.bf16.msra.mxu0 0
        %1270 = vmatpush.bf16.msra.mxu0 0
        %1271 = vmatpush.bf16.msra.mxu0 %v1239
        %1272 = vmatpush.bf16.msra.mxu0 %v1237
        %1273 = vmatmul.bf16.gmra.mxu0 %v1249
        %v1274 = vpop.f32.mrf.mxu0
        %v1275 = vadd.f32 0.0, %v1274
        %v1276 = vpop.f32.mrf.mxu0
        %v1277 = vadd.f32 0.0, %v1276
        %1278 = vdwg.mxu0
        %v1279 = vpack.c.bf16 %v1263, %v1261
        %v1280 = vpack.c.bf16 %v1277, %v1275
        %v1281 = vld [vmem:[%s8] sm:$0xff]
        %v1282 = vld [vmem:[%s8 + $0x8] sm:$0xff]
        %v1283 = vld [vmem:[%s8 + $0x10] sm:$0xff]
        %v1284 = vld [vmem:[%s8 + $0x18] sm:$0xff]
        %v1285 = vld [vmem:[%s8 + $0x20] sm:$0xff]
        %v1286 = vld [vmem:[%s8 + $0x28] sm:$0xff]
        %v1287 = vld [vmem:[%s8 + $0x30] sm:$0xff]
        %v1288 = vld [vmem:[%s8 + $0x38] sm:$0xff]
        %v1289 = vld [vmem:[%s8 + $0x40] sm:$0xff]
        %v1290 = vld [vmem:[%s8 + $0x48] sm:$0xff]
        %v1291 = vld [vmem:[%s8 + $0x50] sm:$0xff]
        %v1292 = vld [vmem:[%s8 + $0x58] sm:$0xff]
        %v1293 = vld [vmem:[%s8 + $0x60] sm:$0xff]
        %v1294 = vld [vmem:[%s8 + $0x68] sm:$0xff]
        %v1295 = vld [vmem:[%s8 + $0x70] sm:$0xff]
        %v1296 = vld [vmem:[%s8 + $0x78] sm:$0xff]
        %v1297 = vld [vmem:[%s8 + $0x80] sm:$0xff]
        %v1298 = vld [vmem:[%s8 + $0x88] sm:$0xff]
        %v1299 = vld [vmem:[%s8 + $0x90] sm:$0xff]
        %v1300 = vld [vmem:[%s8 + $0x98] sm:$0xff]
        %v1301 = vld [vmem:[%s8 + $0xa0] sm:$0xff]
        %v1302 = vld [vmem:[%s8 + $0xa8] sm:$0xff]
        %v1303 = vld [vmem:[%s8 + $0xb0] sm:$0xff]
        %v1304 = vld [vmem:[%s8 + $0xb8] sm:$0xff]
        %v1305 = vld [vmem:[%s8 + $0xc0] sm:$0xff]
        %v1306 = vld [vmem:[%s8 + $0xc8] sm:$0xff]
        %v1307 = vld [vmem:[%s8 + $0xd0] sm:$0xff]
        %v1308 = vld [vmem:[%s8 + $0xd8] sm:$0xff]
        %v1309 = vld [vmem:[%s8 + $0xe0] sm:$0xff]
        %v1310 = vld [vmem:[%s8 + $0xe8] sm:$0xff]
        %v1311 = vld [vmem:[%s8 + $0xf0] sm:$0xff]
        %v1312 = vld [vmem:[%s8 + $0xf8] sm:$0xff]
        %s1313 = scalar_lea.vmem [#allocation7], 8
        %v1314 = vld [vmem:[%s1313] sm:$0xf]
        %v1315 = vld [vmem:[%s1313 + $0x4] sm:$0xf]
        %v1318 = vunpack.c.l.b16 %v1314
        %v1319 = vunpack.c.l.b16 %v1315
        %v1320 = vpack.c.b16 %v1319, %v1318
        %v1322 = vsel %vm1247, %v1320, 0
        %1324 = vmatpush.bf16.msra.mxu0 0
        %1325 = vmatpush.bf16.msra.mxu0 0
        %1326 = vmatpush.bf16.msra.mxu0 0
        %1327 = vmatpush.bf16.msra.mxu0 0
        %1328 = vmatpush.bf16.msra.mxu0 0
        %1329 = vmatpush.bf16.msra.mxu0 0
        %1330 = vmatpush.bf16.msra.mxu0 %v1238
        %1331 = vmatpush.bf16.msra.mxu0 %v1236
        %1332 = vmatmul.bf16.gmra.mxu0 %v1322
        %v1333 = vpop.f32.mrf.mxu0
        %v1334 = vadd.f32 0.0, %v1333
        %v1335 = vpop.f32.mrf.mxu0
        %v1336 = vadd.f32 0.0, %v1335
        %1337 = vdwg.mxu0
        %1338 = vmatpush.bf16.msra.mxu0 0
        %1339 = vmatpush.bf16.msra.mxu0 0
        %1340 = vmatpush.bf16.msra.mxu0 0
        %1341 = vmatpush.bf16.msra.mxu0 0
        %1342 = vmatpush.bf16.msra.mxu0 0
        %1343 = vmatpush.bf16.msra.mxu0 0
        %1344 = vmatpush.bf16.msra.mxu0 %v1239
        %1345 = vmatpush.bf16.msra.mxu0 %v1237
        %1346 = vmatmul.bf16.gmra.mxu0 %v1322
        %v1347 = vpop.f32.mrf.mxu0
        %v1348 = vadd.f32 0.0, %v1347
        %v1349 = vpop.f32.mrf.mxu0
        %v1350 = vadd.f32 0.0, %v1349
        %1351 = vdwg.mxu0
        %v1352 = vpack.c.bf16 %v1336, %v1334
        %v1353 = vpack.c.bf16 %v1350, %v1348
        %s1354 = scalar_lea.vmem %s8, 256
        %v1355 = vld [vmem:[%s1354] sm:$0xff]
        %v1356 = vld [vmem:[%s1354 + $0x8] sm:$0xff]
        %v1357 = vld [vmem:[%s1354 + $0x10] sm:$0xff]
        %v1358 = vld [vmem:[%s1354 + $0x18] sm:$0xff]
        %v1359 = vld [vmem:[%s1354 + $0x20] sm:$0xff]
        %v1360 = vld [vmem:[%s1354 + $0x28] sm:$0xff]
        %v1361 = vld [vmem:[%s1354 + $0x30] sm:$0xff]
        %v1362 = vld [vmem:[%s1354 + $0x38] sm:$0xff]
        %v1363 = vld [vmem:[%s1354 + $0x40] sm:$0xff]
        %v1364 = vld [vmem:[%s1354 + $0x48] sm:$0xff]
        %v1365 = vld [vmem:[%s1354 + $0x50] sm:$0xff]
        %v1366 = vld [vmem:[%s1354 + $0x58] sm:$0xff]
        %v1367 = vld [vmem:[%s1354 + $0x60] sm:$0xff]
        %v1368 = vld [vmem:[%s1354 + $0x68] sm:$0xff]
        %v1369 = vld [vmem:[%s1354 + $0x70] sm:$0xff]
        %v1370 = vld [vmem:[%s1354 + $0x78] sm:$0xff]
        %v1371 = vld [vmem:[%s1354 + $0x80] sm:$0xff]
        %v1372 = vld [vmem:[%s1354 + $0x88] sm:$0xff]
        %v1373 = vld [vmem:[%s1354 + $0x90] sm:$0xff]
        %v1374 = vld [vmem:[%s1354 + $0x98] sm:$0xff]
        %v1375 = vld [vmem:[%s1354 + $0xa0] sm:$0xff]
        %v1376 = vld [vmem:[%s1354 + $0xa8] sm:$0xff]
        %v1377 = vld [vmem:[%s1354 + $0xb0] sm:$0xff]
        %v1378 = vld [vmem:[%s1354 + $0xb8] sm:$0xff]
        %v1379 = vld [vmem:[%s1354 + $0xc0] sm:$0xff]
        %v1380 = vld [vmem:[%s1354 + $0xc8] sm:$0xff]
        %v1381 = vld [vmem:[%s1354 + $0xd0] sm:$0xff]
        %v1382 = vld [vmem:[%s1354 + $0xd8] sm:$0xff]
        %v1383 = vld [vmem:[%s1354 + $0xe0] sm:$0xff]
        %v1384 = vld [vmem:[%s1354 + $0xe8] sm:$0xff]
        %v1385 = vld [vmem:[%s1354 + $0xf0] sm:$0xff]
        %v1386 = vld [vmem:[%s1354 + $0xf8] sm:$0xff]
        %v1419 = vunpack.c.l.b16 %v1355
        %v1420 = vunpack.c.h.b16 %v1355
        %v1421 = vunpack.c.l.b16 %v1356
        %v1422 = vunpack.c.h.b16 %v1356
        %v1423 = vunpack.c.l.b16 %v1357
        %v1424 = vunpack.c.h.b16 %v1357
        %v1425 = vunpack.c.l.b16 %v1358
        %v1426 = vunpack.c.h.b16 %v1358
        %v1427 = vunpack.c.l.b16 %v1359
        %v1428 = vunpack.c.h.b16 %v1359
        %v1429 = vunpack.c.l.b16 %v1360
        %v1430 = vunpack.c.h.b16 %v1360
        %v1431 = vunpack.c.l.b16 %v1361
        %v1432 = vunpack.c.h.b16 %v1361
        %v1433 = vunpack.c.l.b16 %v1362
        %v1434 = vunpack.c.h.b16 %v1362
        %v1435 = vunpack.c.l.b16 %v1363
        %v1436 = vunpack.c.h.b16 %v1363
        %v1437 = vunpack.c.l.b16 %v1364
        %v1438 = vunpack.c.h.b16 %v1364
        %v1439 = vunpack.c.l.b16 %v1365
        %v1440 = vunpack.c.h.b16 %v1365
        %v1441 = vunpack.c.l.b16 %v1366
        %v1442 = vunpack.c.h.b16 %v1366
        %v1443 = vunpack.c.l.b16 %v1367
        %v1444 = vunpack.c.h.b16 %v1367
        %v1445 = vunpack.c.l.b16 %v1368
        %v1446 = vunpack.c.h.b16 %v1368
        %v1447 = vunpack.c.l.b16 %v1369
        %v1448 = vunpack.c.h.b16 %v1369
        %v1449 = vunpack.c.l.b16 %v1370
        %v1450 = vunpack.c.h.b16 %v1370
        %v1451 = vunpack.c.l.b16 %v1371
        %v1452 = vunpack.c.h.b16 %v1371
        %v1453 = vunpack.c.l.b16 %v1372
        %v1454 = vunpack.c.h.b16 %v1372
        %v1455 = vunpack.c.l.b16 %v1373
        %v1456 = vunpack.c.h.b16 %v1373
        %v1457 = vunpack.c.l.b16 %v1374
        %v1458 = vunpack.c.h.b16 %v1374
        %v1459 = vunpack.c.l.b16 %v1375
        %v1460 = vunpack.c.h.b16 %v1375
        %v1461 = vunpack.c.l.b16 %v1376
        %v1462 = vunpack.c.h.b16 %v1376
        %v1463 = vunpack.c.l.b16 %v1377
        %v1464 = vunpack.c.h.b16 %v1377
        %v1465 = vunpack.c.l.b16 %v1378
        %v1466 = vunpack.c.h.b16 %v1378
        %v1467 = vunpack.c.l.b16 %v1379
        %v1468 = vunpack.c.h.b16 %v1379
        %v1469 = vunpack.c.l.b16 %v1380
        %v1470 = vunpack.c.h.b16 %v1380
        %v1471 = vunpack.c.l.b16 %v1381
        %v1472 = vunpack.c.h.b16 %v1381
        %v1473 = vunpack.c.l.b16 %v1382
        %v1474 = vunpack.c.h.b16 %v1382
        %v1475 = vunpack.c.l.b16 %v1383
        %v1476 = vunpack.c.h.b16 %v1383
        %v1477 = vunpack.c.l.b16 %v1384
        %v1478 = vunpack.c.h.b16 %v1384
        %v1479 = vunpack.c.l.b16 %v1385
        %v1480 = vunpack.c.h.b16 %v1385
        %v1481 = vunpack.c.l.b16 %v1386
        %v1482 = vunpack.c.h.b16 %v1386
        %v1483 = vpack.c.b16 %v1421, %v1419
        %v1484 = vpack.c.b16 %v1422, %v1420
        %v1485 = vpack.c.b16 %v1425, %v1423
        %v1486 = vpack.c.b16 %v1426, %v1424
        %v1487 = vpack.c.b16 %v1429, %v1427
        %v1488 = vpack.c.b16 %v1430, %v1428
        %v1489 = vpack.c.b16 %v1433, %v1431
        %v1490 = vpack.c.b16 %v1434, %v1432
        %v1491 = vpack.c.b16 %v1437, %v1435
        %v1492 = vpack.c.b16 %v1438, %v1436
        %v1493 = vpack.c.b16 %v1441, %v1439
        %v1494 = vpack.c.b16 %v1442, %v1440
        %v1495 = vpack.c.b16 %v1445, %v1443
        %v1496 = vpack.c.b16 %v1446, %v1444
        %v1497 = vpack.c.b16 %v1449, %v1447
        %v1498 = vpack.c.b16 %v1450, %v1448
        %v1499 = vpack.c.b16 %v1453, %v1451
        %v1500 = vpack.c.b16 %v1454, %v1452
        %v1501 = vpack.c.b16 %v1457, %v1455
        %v1502 = vpack.c.b16 %v1458, %v1456
        %v1503 = vpack.c.b16 %v1461, %v1459
        %v1504 = vpack.c.b16 %v1462, %v1460
        %v1505 = vpack.c.b16 %v1465, %v1463
        %v1506 = vpack.c.b16 %v1466, %v1464
        %v1507 = vpack.c.b16 %v1469, %v1467
        %v1508 = vpack.c.b16 %v1470, %v1468
        %v1509 = vpack.c.b16 %v1473, %v1471
        %v1510 = vpack.c.b16 %v1474, %v1472
        %v1511 = vpack.c.b16 %v1477, %v1475
        %v1512 = vpack.c.b16 %v1478, %v1476
        %v1513 = vpack.c.b16 %v1481, %v1479
        %v1514 = vpack.c.b16 %v1482, %v1480
        %1547 = vmatpush.bf16.msra.mxu0 %v1497
        %1548 = vmatpush.bf16.msra.mxu0 %v1495
        %1549 = vmatpush.bf16.msra.mxu0 %v1493
        %1550 = vmatpush.bf16.msra.mxu0 %v1491
        %1551 = vmatpush.bf16.msra.mxu0 %v1489
        %1552 = vmatpush.bf16.msra.mxu0 %v1487
        %1553 = vmatpush.bf16.msra.mxu0 %v1485
        %1554 = vmatpush.bf16.msra.mxu0 %v1483
        %1555 = vmatmul.bf16.gmra.mxu0 %v1352
        %v1556 = vpop.f32.mrf.mxu0
        %v1557 = vadd.f32 0.0, %v1556
        %v1558 = vpop.f32.mrf.mxu0
        %v1559 = vadd.f32 0.0, %v1558
        %1560 = vdwg.mxu0
        %1561 = vmatpush.bf16.msra.mxu0 %v1513
        %1562 = vmatpush.bf16.msra.mxu0 %v1511
        %1563 = vmatpush.bf16.msra.mxu0 %v1509
        %1564 = vmatpush.bf16.msra.mxu0 %v1507
        %1565 = vmatpush.bf16.msra.mxu0 %v1505
        %1566 = vmatpush.bf16.msra.mxu0 %v1503
        %1567 = vmatpush.bf16.msra.mxu0 %v1501
        %1568 = vmatpush.bf16.msra.mxu0 %v1499
        %1569 = vmatmul.bf16.gmra.mxu0 %v1353
        %v1570 = vpop.f32.mrf.mxu0
        %v1571 = vadd.f32 %v1557, %v1570
        %v1572 = vpop.f32.mrf.mxu0
        %v1573 = vadd.f32 %v1559, %v1572
        %1574 = vdwg.mxu0
        %1575 = vmatpush.bf16.msra.mxu0 %v1498
        %1576 = vmatpush.bf16.msra.mxu0 %v1496
        %1577 = vmatpush.bf16.msra.mxu0 %v1494
        %1578 = vmatpush.bf16.msra.mxu0 %v1492
        %1579 = vmatpush.bf16.msra.mxu0 %v1490
        %1580 = vmatpush.bf16.msra.mxu0 %v1488
        %1581 = vmatpush.bf16.msra.mxu0 %v1486
        %1582 = vmatpush.bf16.msra.mxu0 %v1484
        %1583 = vmatmul.bf16.gmra.mxu0 %v1352
        %v1584 = vpop.f32.mrf.mxu0
        %v1585 = vadd.f32 0.0, %v1584
        %v1586 = vpop.f32.mrf.mxu0
        %v1587 = vadd.f32 0.0, %v1586
        %1588 = vdwg.mxu0
        %1589 = vmatpush.bf16.msra.mxu0 %v1514
        %1590 = vmatpush.bf16.msra.mxu0 %v1512
        %1591 = vmatpush.bf16.msra.mxu0 %v1510
        %1592 = vmatpush.bf16.msra.mxu0 %v1508
        %1593 = vmatpush.bf16.msra.mxu0 %v1506
        %1594 = vmatpush.bf16.msra.mxu0 %v1504
        %1595 = vmatpush.bf16.msra.mxu0 %v1502
        %1596 = vmatpush.bf16.msra.mxu0 %v1500
        %1597 = vmatmul.bf16.gmra.mxu0 %v1353
        %v1598 = vpop.f32.mrf.mxu0
        %v1599 = vadd.f32 %v1585, %v1598
        %v1600 = vpop.f32.mrf.mxu0
        %v1601 = vadd.f32 %v1587, %v1600
        %1602 = vdwg.mxu0
        %v1635 = vunpack.c.l.b16 %v1281
        %v1636 = vunpack.c.h.b16 %v1281
        %v1637 = vunpack.c.l.b16 %v1282
        %v1638 = vunpack.c.h.b16 %v1282
        %v1639 = vunpack.c.l.b16 %v1283
        %v1640 = vunpack.c.h.b16 %v1283
        %v1641 = vunpack.c.l.b16 %v1284
        %v1642 = vunpack.c.h.b16 %v1284
        %v1643 = vunpack.c.l.b16 %v1285
        %v1644 = vunpack.c.h.b16 %v1285
        %v1645 = vunpack.c.l.b16 %v1286
        %v1646 = vunpack.c.h.b16 %v1286
        %v1647 = vunpack.c.l.b16 %v1287
        %v1648 = vunpack.c.h.b16 %v1287
        %v1649 = vunpack.c.l.b16 %v1288
        %v1650 = vunpack.c.h.b16 %v1288
        %v1651 = vunpack.c.l.b16 %v1289
        %v1652 = vunpack.c.h.b16 %v1289
        %v1653 = vunpack.c.l.b16 %v1290
        %v1654 = vunpack.c.h.b16 %v1290
        %v1655 = vunpack.c.l.b16 %v1291
        %v1656 = vunpack.c.h.b16 %v1291
        %v1657 = vunpack.c.l.b16 %v1292
        %v1658 = vunpack.c.h.b16 %v1292
        %v1659 = vunpack.c.l.b16 %v1293
        %v1660 = vunpack.c.h.b16 %v1293
        %v1661 = vunpack.c.l.b16 %v1294
        %v1662 = vunpack.c.h.b16 %v1294
        %v1663 = vunpack.c.l.b16 %v1295
        %v1664 = vunpack.c.h.b16 %v1295
        %v1665 = vunpack.c.l.b16 %v1296
        %v1666 = vunpack.c.h.b16 %v1296
        %v1667 = vunpack.c.l.b16 %v1297
        %v1668 = vunpack.c.h.b16 %v1297
        %v1669 = vunpack.c.l.b16 %v1298
        %v1670 = vunpack.c.h.b16 %v1298
        %v1671 = vunpack.c.l.b16 %v1299
        %v1672 = vunpack.c.h.b16 %v1299
        %v1673 = vunpack.c.l.b16 %v1300
        %v1674 = vunpack.c.h.b16 %v1300
        %v1675 = vunpack.c.l.b16 %v1301
        %v1676 = vunpack.c.h.b16 %v1301
        %v1677 = vunpack.c.l.b16 %v1302
        %v1678 = vunpack.c.h.b16 %v1302
        %v1679 = vunpack.c.l.b16 %v1303
        %v1680 = vunpack.c.h.b16 %v1303
        %v1681 = vunpack.c.l.b16 %v1304
        %v1682 = vunpack.c.h.b16 %v1304
        %v1683 = vunpack.c.l.b16 %v1305
        %v1684 = vunpack.c.h.b16 %v1305
        %v1685 = vunpack.c.l.b16 %v1306
        %v1686 = vunpack.c.h.b16 %v1306
        %v1687 = vunpack.c.l.b16 %v1307
        %v1688 = vunpack.c.h.b16 %v1307
        %v1689 = vunpack.c.l.b16 %v1308
        %v1690 = vunpack.c.h.b16 %v1308
        %v1691 = vunpack.c.l.b16 %v1309
        %v1692 = vunpack.c.h.b16 %v1309
        %v1693 = vunpack.c.l.b16 %v1310
        %v1694 = vunpack.c.h.b16 %v1310
        %v1695 = vunpack.c.l.b16 %v1311
        %v1696 = vunpack.c.h.b16 %v1311
        %v1697 = vunpack.c.l.b16 %v1312
        %v1698 = vunpack.c.h.b16 %v1312
        %v1699 = vpack.c.b16 %v1637, %v1635
        %v1700 = vpack.c.b16 %v1638, %v1636
        %v1701 = vpack.c.b16 %v1641, %v1639
        %v1702 = vpack.c.b16 %v1642, %v1640
        %v1703 = vpack.c.b16 %v1645, %v1643
        %v1704 = vpack.c.b16 %v1646, %v1644
        %v1705 = vpack.c.b16 %v1649, %v1647
        %v1706 = vpack.c.b16 %v1650, %v1648
        %v1707 = vpack.c.b16 %v1653, %v1651
        %v1708 = vpack.c.b16 %v1654, %v1652
        %v1709 = vpack.c.b16 %v1657, %v1655
        %v1710 = vpack.c.b16 %v1658, %v1656
        %v1711 = vpack.c.b16 %v1661, %v1659
        %v1712 = vpack.c.b16 %v1662, %v1660
        %v1713 = vpack.c.b16 %v1665, %v1663
        %v1714 = vpack.c.b16 %v1666, %v1664
        %v1715 = vpack.c.b16 %v1669, %v1667
        %v1716 = vpack.c.b16 %v1670, %v1668
        %v1717 = vpack.c.b16 %v1673, %v1671
        %v1718 = vpack.c.b16 %v1674, %v1672
        %v1719 = vpack.c.b16 %v1677, %v1675
        %v1720 = vpack.c.b16 %v1678, %v1676
        %v1721 = vpack.c.b16 %v1681, %v1679
        %v1722 = vpack.c.b16 %v1682, %v1680
        %v1723 = vpack.c.b16 %v1685, %v1683
        %v1724 = vpack.c.b16 %v1686, %v1684
        %v1725 = vpack.c.b16 %v1689, %v1687
        %v1726 = vpack.c.b16 %v1690, %v1688
        %v1727 = vpack.c.b16 %v1693, %v1691
        %v1728 = vpack.c.b16 %v1694, %v1692
        %v1729 = vpack.c.b16 %v1697, %v1695
        %v1730 = vpack.c.b16 %v1698, %v1696
        %1763 = vmatpush.bf16.msra.mxu0 %v1713
        %1764 = vmatpush.bf16.msra.mxu0 %v1711
        %1765 = vmatpush.bf16.msra.mxu0 %v1709
        %1766 = vmatpush.bf16.msra.mxu0 %v1707
        %1767 = vmatpush.bf16.msra.mxu0 %v1705
        %1768 = vmatpush.bf16.msra.mxu0 %v1703
        %1769 = vmatpush.bf16.msra.mxu0 %v1701
        %1770 = vmatpush.bf16.msra.mxu0 %v1699
        %1771 = vmatmul.bf16.gmra.mxu0 %v1279
        %v1772 = vpop.f32.mrf.mxu0
        %v1773 = vadd.f32 %v1571, %v1772
        %v1774 = vpop.f32.mrf.mxu0
        %v1775 = vadd.f32 %v1573, %v1774
        %1776 = vdwg.mxu0
        %1777 = vmatpush.bf16.msra.mxu0 %v1729
        %1778 = vmatpush.bf16.msra.mxu0 %v1727
        %1779 = vmatpush.bf16.msra.mxu0 %v1725
        %1780 = vmatpush.bf16.msra.mxu0 %v1723
        %1781 = vmatpush.bf16.msra.mxu0 %v1721
        %1782 = vmatpush.bf16.msra.mxu0 %v1719
        %1783 = vmatpush.bf16.msra.mxu0 %v1717
        %1784 = vmatpush.bf16.msra.mxu0 %v1715
        %1785 = vmatmul.bf16.gmra.mxu0 %v1280
        %v1786 = vpop.f32.mrf.mxu0
        %v1787 = vadd.f32 %v1773, %v1786
        %v1788 = vpop.f32.mrf.mxu0
        %v1789 = vadd.f32 %v1775, %v1788
        %1790 = vdwg.mxu0
        %1791 = vmatpush.bf16.msra.mxu0 %v1714
        %1792 = vmatpush.bf16.msra.mxu0 %v1712
        %1793 = vmatpush.bf16.msra.mxu0 %v1710
        %1794 = vmatpush.bf16.msra.mxu0 %v1708
        %1795 = vmatpush.bf16.msra.mxu0 %v1706
        %1796 = vmatpush.bf16.msra.mxu0 %v1704
        %1797 = vmatpush.bf16.msra.mxu0 %v1702
        %1798 = vmatpush.bf16.msra.mxu0 %v1700
        %1799 = vmatmul.bf16.gmra.mxu0 %v1279
        %v1800 = vpop.f32.mrf.mxu0
        %v1801 = vadd.f32 %v1599, %v1800
        %v1802 = vpop.f32.mrf.mxu0
        %v1803 = vadd.f32 %v1601, %v1802
        %1804 = vdwg.mxu0
        %1805 = vmatpush.bf16.msra.mxu0 %v1730
        %1806 = vmatpush.bf16.msra.mxu0 %v1728
        %1807 = vmatpush.bf16.msra.mxu0 %v1726
        %1808 = vmatpush.bf16.msra.mxu0 %v1724
        %1809 = vmatpush.bf16.msra.mxu0 %v1722
        %1810 = vmatpush.bf16.msra.mxu0 %v1720
        %1811 = vmatpush.bf16.msra.mxu0 %v1718
        %1812 = vmatpush.bf16.msra.mxu0 %v1716
        %1813 = vmatmul.bf16.gmra.mxu0 %v1280
        %v1814 = vpop.f32.mrf.mxu0
        %v1815 = vadd.f32 %v1801, %v1814
        %v1816 = vpop.f32.mrf.mxu0
        %v1817 = vadd.f32 %v1803, %v1816
        %1818 = vdwg.mxu0
        %s1819 = scalar_lea.vmem [#allocation7], 16
        %v1820 = vld [vmem:[%s1819] sm:$0xf]
        %v1821 = vld [vmem:[%s1819 + $0x4] sm:$0xf]
        %v1824 = vunpack.c.l.b16 %v1820
        %v1825 = vunpack.c.l.b16 %v1821
        %v1826 = vpack.c.b16 %v1825, %v1824
        %v1828 = vsel %vm1247, %v1826, 0
        %1830 = vmatpush.bf16.msra.mxu0 0
        %1831 = vmatpush.bf16.msra.mxu0 0
        %1832 = vmatpush.bf16.msra.mxu0 0
        %1833 = vmatpush.bf16.msra.mxu0 0
        %1834 = vmatpush.bf16.msra.mxu0 0
        %1835 = vmatpush.bf16.msra.mxu0 0
        %1836 = vmatpush.bf16.msra.mxu0 %v1238
        %1837 = vmatpush.bf16.msra.mxu0 %v1236
        %1838 = vmatmul.bf16.gmra.mxu0 %v1828
        %v1839 = vpop.f32.mrf.mxu0
        %v1840 = vadd.f32 0.0, %v1839
        %v1841 = vpop.f32.mrf.mxu0
        %v1842 = vadd.f32 0.0, %v1841
        %1843 = vdwg.mxu0
        %1844 = vmatpush.bf16.msra.mxu0 0
        %1845 = vmatpush.bf16.msra.mxu0 0
        %1846 = vmatpush.bf16.msra.mxu0 0
        %1847 = vmatpush.bf16.msra.mxu0 0
        %1848 = vmatpush.bf16.msra.mxu0 0
        %1849 = vmatpush.bf16.msra.mxu0 0
        %1850 = vmatpush.bf16.msra.mxu0 %v1239
        %1851 = vmatpush.bf16.msra.mxu0 %v1237
        %1852 = vmatmul.bf16.gmra.mxu0 %v1828
        %v1853 = vpop.f32.mrf.mxu0
        %v1854 = vadd.f32 0.0, %v1853
        %v1855 = vpop.f32.mrf.mxu0
        %v1856 = vadd.f32 0.0, %v1855
        %1857 = vdwg.mxu0
        %v1858 = vpack.c.bf16 %v1842, %v1840
        %v1859 = vpack.c.bf16 %v1856, %v1854
        %s1860 = scalar_lea.vmem %s8, 512
        %v1861 = vld [vmem:[%s1860] sm:$0xff]
        %v1862 = vld [vmem:[%s1860 + $0x8] sm:$0xff]
        %v1863 = vld [vmem:[%s1860 + $0x10] sm:$0xff]
        %v1864 = vld [vmem:[%s1860 + $0x18] sm:$0xff]
        %v1865 = vld [vmem:[%s1860 + $0x20] sm:$0xff]
        %v1866 = vld [vmem:[%s1860 + $0x28] sm:$0xff]
        %v1867 = vld [vmem:[%s1860 + $0x30] sm:$0xff]
        %v1868 = vld [vmem:[%s1860 + $0x38] sm:$0xff]
        %v1869 = vld [vmem:[%s1860 + $0x40] sm:$0xff]
        %v1870 = vld [vmem:[%s1860 + $0x48] sm:$0xff]
        %v1871 = vld [vmem:[%s1860 + $0x50] sm:$0xff]
        %v1872 = vld [vmem:[%s1860 + $0x58] sm:$0xff]
        %v1873 = vld [vmem:[%s1860 + $0x60] sm:$0xff]
        %v1874 = vld [vmem:[%s1860 + $0x68] sm:$0xff]
        %v1875 = vld [vmem:[%s1860 + $0x70] sm:$0xff]
        %v1876 = vld [vmem:[%s1860 + $0x78] sm:$0xff]
        %v1877 = vld [vmem:[%s1860 + $0x80] sm:$0xff]
        %v1878 = vld [vmem:[%s1860 + $0x88] sm:$0xff]
        %v1879 = vld [vmem:[%s1860 + $0x90] sm:$0xff]
        %v1880 = vld [vmem:[%s1860 + $0x98] sm:$0xff]
        %v1881 = vld [vmem:[%s1860 + $0xa0] sm:$0xff]
        %v1882 = vld [vmem:[%s1860 + $0xa8] sm:$0xff]
        %v1883 = vld [vmem:[%s1860 + $0xb0] sm:$0xff]
        %v1884 = vld [vmem:[%s1860 + $0xb8] sm:$0xff]
        %v1885 = vld [vmem:[%s1860 + $0xc0] sm:$0xff]
        %v1886 = vld [vmem:[%s1860 + $0xc8] sm:$0xff]
        %v1887 = vld [vmem:[%s1860 + $0xd0] sm:$0xff]
        %v1888 = vld [vmem:[%s1860 + $0xd8] sm:$0xff]
        %v1889 = vld [vmem:[%s1860 + $0xe0] sm:$0xff]
        %v1890 = vld [vmem:[%s1860 + $0xe8] sm:$0xff]
        %v1891 = vld [vmem:[%s1860 + $0xf0] sm:$0xff]
        %v1892 = vld [vmem:[%s1860 + $0xf8] sm:$0xff]
        %v1925 = vunpack.c.l.b16 %v1861
        %v1926 = vunpack.c.h.b16 %v1861
        %v1927 = vunpack.c.l.b16 %v1862
        %v1928 = vunpack.c.h.b16 %v1862
        %v1929 = vunpack.c.l.b16 %v1863
        %v1930 = vunpack.c.h.b16 %v1863
        %v1931 = vunpack.c.l.b16 %v1864
        %v1932 = vunpack.c.h.b16 %v1864
        %v1933 = vunpack.c.l.b16 %v1865
        %v1934 = vunpack.c.h.b16 %v1865
        %v1935 = vunpack.c.l.b16 %v1866
        %v1936 = vunpack.c.h.b16 %v1866
        %v1937 = vunpack.c.l.b16 %v1867
        %v1938 = vunpack.c.h.b16 %v1867
        %v1939 = vunpack.c.l.b16 %v1868
        %v1940 = vunpack.c.h.b16 %v1868
        %v1941 = vunpack.c.l.b16 %v1869
        %v1942 = vunpack.c.h.b16 %v1869
        %v1943 = vunpack.c.l.b16 %v1870
        %v1944 = vunpack.c.h.b16 %v1870
        %v1945 = vunpack.c.l.b16 %v1871
        %v1946 = vunpack.c.h.b16 %v1871
        %v1947 = vunpack.c.l.b16 %v1872
        %v1948 = vunpack.c.h.b16 %v1872
        %v1949 = vunpack.c.l.b16 %v1873
        %v1950 = vunpack.c.h.b16 %v1873
        %v1951 = vunpack.c.l.b16 %v1874
        %v1952 = vunpack.c.h.b16 %v1874
        %v1953 = vunpack.c.l.b16 %v1875
        %v1954 = vunpack.c.h.b16 %v1875
        %v1955 = vunpack.c.l.b16 %v1876
        %v1956 = vunpack.c.h.b16 %v1876
        %v1957 = vunpack.c.l.b16 %v1877
        %v1958 = vunpack.c.h.b16 %v1877
        %v1959 = vunpack.c.l.b16 %v1878
        %v1960 = vunpack.c.h.b16 %v1878
        %v1961 = vunpack.c.l.b16 %v1879
        %v1962 = vunpack.c.h.b16 %v1879
        %v1963 = vunpack.c.l.b16 %v1880
        %v1964 = vunpack.c.h.b16 %v1880
        %v1965 = vunpack.c.l.b16 %v1881
        %v1966 = vunpack.c.h.b16 %v1881
        %v1967 = vunpack.c.l.b16 %v1882
        %v1968 = vunpack.c.h.b16 %v1882
        %v1969 = vunpack.c.l.b16 %v1883
        %v1970 = vunpack.c.h.b16 %v1883
        %v1971 = vunpack.c.l.b16 %v1884
        %v1972 = vunpack.c.h.b16 %v1884
        %v1973 = vunpack.c.l.b16 %v1885
        %v1974 = vunpack.c.h.b16 %v1885
        %v1975 = vunpack.c.l.b16 %v1886
        %v1976 = vunpack.c.h.b16 %v1886
        %v1977 = vunpack.c.l.b16 %v1887
        %v1978 = vunpack.c.h.b16 %v1887
        %v1979 = vunpack.c.l.b16 %v1888
        %v1980 = vunpack.c.h.b16 %v1888
        %v1981 = vunpack.c.l.b16 %v1889
        %v1982 = vunpack.c.h.b16 %v1889
        %v1983 = vunpack.c.l.b16 %v1890
        %v1984 = vunpack.c.h.b16 %v1890
        %v1985 = vunpack.c.l.b16 %v1891
        %v1986 = vunpack.c.h.b16 %v1891
        %v1987 = vunpack.c.l.b16 %v1892
        %v1988 = vunpack.c.h.b16 %v1892
        %v1989 = vpack.c.b16 %v1927, %v1925
        %v1990 = vpack.c.b16 %v1928, %v1926
        %v1991 = vpack.c.b16 %v1931, %v1929
        %v1992 = vpack.c.b16 %v1932, %v1930
        %v1993 = vpack.c.b16 %v1935, %v1933
        %v1994 = vpack.c.b16 %v1936, %v1934
        %v1995 = vpack.c.b16 %v1939, %v1937
        %v1996 = vpack.c.b16 %v1940, %v1938
        %v1997 = vpack.c.b16 %v1943, %v1941
        %v1998 = vpack.c.b16 %v1944, %v1942
        %v1999 = vpack.c.b16 %v1947, %v1945
        %v2000 = vpack.c.b16 %v1948, %v1946
        %v2001 = vpack.c.b16 %v1951, %v1949
        %v2002 = vpack.c.b16 %v1952, %v1950
        %v2003 = vpack.c.b16 %v1955, %v1953
        %v2004 = vpack.c.b16 %v1956, %v1954
        %v2005 = vpack.c.b16 %v1959, %v1957
        %v2006 = vpack.c.b16 %v1960, %v1958
        %v2007 = vpack.c.b16 %v1963, %v1961
        %v2008 = vpack.c.b16 %v1964, %v1962
        %v2009 = vpack.c.b16 %v1967, %v1965
        %v2010 = vpack.c.b16 %v1968, %v1966
        %v2011 = vpack.c.b16 %v1971, %v1969
        %v2012 = vpack.c.b16 %v1972, %v1970
        %v2013 = vpack.c.b16 %v1975, %v1973
        %v2014 = vpack.c.b16 %v1976, %v1974
        %v2015 = vpack.c.b16 %v1979, %v1977
        %v2016 = vpack.c.b16 %v1980, %v1978
        %v2017 = vpack.c.b16 %v1983, %v1981
        %v2018 = vpack.c.b16 %v1984, %v1982
        %v2019 = vpack.c.b16 %v1987, %v1985
        %v2020 = vpack.c.b16 %v1988, %v1986
        %2053 = vmatpush.bf16.msra.mxu0 %v2003
        %2054 = vmatpush.bf16.msra.mxu0 %v2001
        %2055 = vmatpush.bf16.msra.mxu0 %v1999
        %2056 = vmatpush.bf16.msra.mxu0 %v1997
        %2057 = vmatpush.bf16.msra.mxu0 %v1995
        %2058 = vmatpush.bf16.msra.mxu0 %v1993
        %2059 = vmatpush.bf16.msra.mxu0 %v1991
        %2060 = vmatpush.bf16.msra.mxu0 %v1989
        %2061 = vmatmul.bf16.gmra.mxu0 %v1858
        %v2062 = vpop.f32.mrf.mxu0
        %v2063 = vadd.f32 0.0, %v2062
        %v2064 = vpop.f32.mrf.mxu0
        %v2065 = vadd.f32 0.0, %v2064
        %2066 = vdwg.mxu0
        %2067 = vmatpush.bf16.msra.mxu0 %v2019
        %2068 = vmatpush.bf16.msra.mxu0 %v2017
        %2069 = vmatpush.bf16.msra.mxu0 %v2015
        %2070 = vmatpush.bf16.msra.mxu0 %v2013
        %2071 = vmatpush.bf16.msra.mxu0 %v2011
        %2072 = vmatpush.bf16.msra.mxu0 %v2009
        %2073 = vmatpush.bf16.msra.mxu0 %v2007
        %2074 = vmatpush.bf16.msra.mxu0 %v2005
        %2075 = vmatmul.bf16.gmra.mxu0 %v1859
        %v2076 = vpop.f32.mrf.mxu0
        %v2077 = vadd.f32 %v2063, %v2076
        %v2078 = vpop.f32.mrf.mxu0
        %v2079 = vadd.f32 %v2065, %v2078
        %2080 = vdwg.mxu0
        %2081 = vmatpush.bf16.msra.mxu0 %v2004
        %2082 = vmatpush.bf16.msra.mxu0 %v2002
        %2083 = vmatpush.bf16.msra.mxu0 %v2000
        %2084 = vmatpush.bf16.msra.mxu0 %v1998
        %2085 = vmatpush.bf16.msra.mxu0 %v1996
        %2086 = vmatpush.bf16.msra.mxu0 %v1994
        %2087 = vmatpush.bf16.msra.mxu0 %v1992
        %2088 = vmatpush.bf16.msra.mxu0 %v1990
        %2089 = vmatmul.bf16.gmra.mxu0 %v1858
        %v2090 = vpop.f32.mrf.mxu0
        %v2091 = vadd.f32 0.0, %v2090
        %v2092 = vpop.f32.mrf.mxu0
        %v2093 = vadd.f32 0.0, %v2092
        %2094 = vdwg.mxu0
        %2095 = vmatpush.bf16.msra.mxu0 %v2020
        %2096 = vmatpush.bf16.msra.mxu0 %v2018
        %2097 = vmatpush.bf16.msra.mxu0 %v2016
        %2098 = vmatpush.bf16.msra.mxu0 %v2014
        %2099 = vmatpush.bf16.msra.mxu0 %v2012
        %2100 = vmatpush.bf16.msra.mxu0 %v2010
        %2101 = vmatpush.bf16.msra.mxu0 %v2008
        %2102 = vmatpush.bf16.msra.mxu0 %v2006
        %2103 = vmatmul.bf16.gmra.mxu0 %v1859
        %v2104 = vpop.f32.mrf.mxu0
        %v2105 = vadd.f32 %v2091, %v2104
        %v2106 = vpop.f32.mrf.mxu0
        %v2107 = vadd.f32 %v2093, %v2106
        %2108 = vdwg.mxu0
        %v2109 = vadd.f32 %v1787, %v2077
        %v2110 = vadd.f32 %v1815, %v2105
        %v2111 = vadd.f32 %v1789, %v2079
        %v2112 = vadd.f32 %v1817, %v2107
        %v2113 = vld [vmem:[%s9] sm:$0x3]
        %v2115 = vperm.slane %v2113, 0
        %v2116 = vperm.slane %v2113, 1
        %v2119 = vadd.f32 %v2109, %v2115
        %v2120 = vadd.f32 %v2110, %v2116
        %v2121 = vadd.f32 %v2111, %v2115
        %v2122 = vadd.f32 %v2112, %v2116
        %v2123 = vmax.f32 %v2119, 0.0
        %v2124 = vmax.f32 %v2120, 0.0
        %v2125 = vmax.f32 %v2121, 0.0
        %v2126 = vmax.f32 %v2122, 0.0
        %v2127 = vpack.c.bf16 %v2125, %v2123
        %v2128 = vpack.c.bf16 %v2126, %v2124
        %v2129 = vld [vmem:[%s10] sm:$0xf]
        %vm2130 = vcmask 130048
        %v2132 = vsel %vm2130, %v2129, 0
        %2134 = vmatpush.bf16.msra.mxu0 0
        %2135 = vmatpush.bf16.msra.mxu0 0
        %2136 = vmatpush.bf16.msra.mxu0 0
        %2137 = vmatpush.bf16.msra.mxu0 0
        %2138 = vmatpush.bf16.msra.mxu0 0
        %2139 = vmatpush.bf16.msra.mxu0 0
        %2140 = vmatpush.bf16.msra.mxu0 0
        %2141 = vmatpush.bf16.msra.mxu0 %v2127
        %2142 = vmatmul.bf16.gmra.mxu0 %v2132
        %v2143 = vpop.f32.mrf.mxu0
        %v2144 = vadd.f32 0.0, %v2143
        %v2145 = vpop.f32.mrf.mxu0
        %2146 = vdwg.mxu0
        %2147 = vmatpush.bf16.msra.mxu0 0
        %2148 = vmatpush.bf16.msra.mxu0 0
        %2149 = vmatpush.bf16.msra.mxu0 0
        %2150 = vmatpush.bf16.msra.mxu0 0
        %2151 = vmatpush.bf16.msra.mxu0 0
        %2152 = vmatpush.bf16.msra.mxu0 0
        %2153 = vmatpush.bf16.msra.mxu0 0
        %2154 = vmatpush.bf16.msra.mxu0 %v2128
        %2155 = vmatmul.bf16.gmra.mxu0 %v2132
        %v2156 = vpop.f32.mrf.mxu0
        %v2157 = vadd.f32 0.0, %v2156
        %v2158 = vpop.f32.mrf.mxu0
        %2159 = vdwg.mxu0
        %v2160 = vpack.c.bf16 %v2144, %v2144
        %v2161 = vpack.c.bf16 %v2157, %v2157
        %v2162 = vld [vmem:[%s11] sm:$0xff]
        %v2163 = vld [vmem:[%s11 + $0x8] sm:$0xff]
        %v2164 = vld [vmem:[%s11 + $0x10] sm:$0xff]
        %v2165 = vld [vmem:[%s11 + $0x18] sm:$0xff]
        %v2166 = vld [vmem:[%s11 + $0x20] sm:$0xff]
        %v2167 = vld [vmem:[%s11 + $0x28] sm:$0xff]
        %v2168 = vld [vmem:[%s11 + $0x30] sm:$0xff]
        %v2169 = vld [vmem:[%s11 + $0x38] sm:$0xff]
        %v2170 = vld [vmem:[%s11 + $0x40] sm:$0xff]
        %v2171 = vld [vmem:[%s11 + $0x48] sm:$0xff]
        %v2172 = vld [vmem:[%s11 + $0x50] sm:$0xff]
        %v2173 = vld [vmem:[%s11 + $0x58] sm:$0xff]
        %v2174 = vld [vmem:[%s11 + $0x60] sm:$0xff]
        %v2175 = vld [vmem:[%s11 + $0x68] sm:$0xff]
        %v2176 = vld [vmem:[%s11 + $0x70] sm:$0xff]
        %v2177 = vld [vmem:[%s11 + $0x78] sm:$0xff]
        %v2178 = vld [vmem:[%s11 + $0x80] sm:$0xff]
        %v2179 = vld [vmem:[%s11 + $0x88] sm:$0xff]
        %v2180 = vld [vmem:[%s11 + $0x90] sm:$0xff]
        %v2181 = vld [vmem:[%s11 + $0x98] sm:$0xff]
        %v2182 = vld [vmem:[%s11 + $0xa0] sm:$0xff]
        %v2183 = vld [vmem:[%s11 + $0xa8] sm:$0xff]
        %v2184 = vld [vmem:[%s11 + $0xb0] sm:$0xff]
        %v2185 = vld [vmem:[%s11 + $0xb8] sm:$0xff]
        %v2186 = vld [vmem:[%s11 + $0xc0] sm:$0xff]
        %v2187 = vld [vmem:[%s11 + $0xc8] sm:$0xff]
        %v2188 = vld [vmem:[%s11 + $0xd0] sm:$0xff]
        %v2189 = vld [vmem:[%s11 + $0xd8] sm:$0xff]
        %v2190 = vld [vmem:[%s11 + $0xe0] sm:$0xff]
        %v2191 = vld [vmem:[%s11 + $0xe8] sm:$0xff]
        %v2192 = vld [vmem:[%s11 + $0xf0] sm:$0xff]
        %v2193 = vld [vmem:[%s11 + $0xf8] sm:$0xff]
        %s2194 = scalar_lea.vmem %s10, 4
        %v2195 = vld [vmem:[%s2194] sm:$0xf]
        %v2197 = vsel %vm2130, %v2195, 0
        %2199 = vmatpush.bf16.msra.mxu0 0
        %2200 = vmatpush.bf16.msra.mxu0 0
        %2201 = vmatpush.bf16.msra.mxu0 0
        %2202 = vmatpush.bf16.msra.mxu0 0
        %2203 = vmatpush.bf16.msra.mxu0 0
        %2204 = vmatpush.bf16.msra.mxu0 0
        %2205 = vmatpush.bf16.msra.mxu0 0
        %2206 = vmatpush.bf16.msra.mxu0 %v2127
        %2207 = vmatmul.bf16.gmra.mxu0 %v2197
        %v2208 = vpop.f32.mrf.mxu0
        %v2209 = vadd.f32 0.0, %v2208
        %v2210 = vpop.f32.mrf.mxu0
        %2211 = vdwg.mxu0
        %2212 = vmatpush.bf16.msra.mxu0 0
        %2213 = vmatpush.bf16.msra.mxu0 0
        %2214 = vmatpush.bf16.msra.mxu0 0
        %2215 = vmatpush.bf16.msra.mxu0 0
        %2216 = vmatpush.bf16.msra.mxu0 0
        %2217 = vmatpush.bf16.msra.mxu0 0
        %2218 = vmatpush.bf16.msra.mxu0 0
        %2219 = vmatpush.bf16.msra.mxu0 %v2128
        %2220 = vmatmul.bf16.gmra.mxu0 %v2197
        %v2221 = vpop.f32.mrf.mxu0
        %v2222 = vadd.f32 0.0, %v2221
        %v2223 = vpop.f32.mrf.mxu0
        %2224 = vdwg.mxu0
        %v2225 = vpack.c.bf16 %v2209, %v2209
        %v2226 = vpack.c.bf16 %v2222, %v2222
        %s2227 = scalar_lea.vmem %s11, 256
        %v2228 = vld [vmem:[%s2227] sm:$0xff]
        %v2229 = vld [vmem:[%s2227 + $0x8] sm:$0xff]
        %v2230 = vld [vmem:[%s2227 + $0x10] sm:$0xff]
        %v2231 = vld [vmem:[%s2227 + $0x18] sm:$0xff]
        %v2232 = vld [vmem:[%s2227 + $0x20] sm:$0xff]
        %v2233 = vld [vmem:[%s2227 + $0x28] sm:$0xff]
        %v2234 = vld [vmem:[%s2227 + $0x30] sm:$0xff]
        %v2235 = vld [vmem:[%s2227 + $0x38] sm:$0xff]
        %v2236 = vld [vmem:[%s2227 + $0x40] sm:$0xff]
        %v2237 = vld [vmem:[%s2227 + $0x48] sm:$0xff]
        %v2238 = vld [vmem:[%s2227 + $0x50] sm:$0xff]
        %v2239 = vld [vmem:[%s2227 + $0x58] sm:$0xff]
        %v2240 = vld [vmem:[%s2227 + $0x60] sm:$0xff]
        %v2241 = vld [vmem:[%s2227 + $0x68] sm:$0xff]
        %v2242 = vld [vmem:[%s2227 + $0x70] sm:$0xff]
        %v2243 = vld [vmem:[%s2227 + $0x78] sm:$0xff]
        %v2244 = vld [vmem:[%s2227 + $0x80] sm:$0xff]
        %v2245 = vld [vmem:[%s2227 + $0x88] sm:$0xff]
        %v2246 = vld [vmem:[%s2227 + $0x90] sm:$0xff]
        %v2247 = vld [vmem:[%s2227 + $0x98] sm:$0xff]
        %v2248 = vld [vmem:[%s2227 + $0xa0] sm:$0xff]
        %v2249 = vld [vmem:[%s2227 + $0xa8] sm:$0xff]
        %v2250 = vld [vmem:[%s2227 + $0xb0] sm:$0xff]
        %v2251 = vld [vmem:[%s2227 + $0xb8] sm:$0xff]
        %v2252 = vld [vmem:[%s2227 + $0xc0] sm:$0xff]
        %v2253 = vld [vmem:[%s2227 + $0xc8] sm:$0xff]
        %v2254 = vld [vmem:[%s2227 + $0xd0] sm:$0xff]
        %v2255 = vld [vmem:[%s2227 + $0xd8] sm:$0xff]
        %v2256 = vld [vmem:[%s2227 + $0xe0] sm:$0xff]
        %v2257 = vld [vmem:[%s2227 + $0xe8] sm:$0xff]
        %v2258 = vld [vmem:[%s2227 + $0xf0] sm:$0xff]
        %v2259 = vld [vmem:[%s2227 + $0xf8] sm:$0xff]
        %v2292 = vunpack.c.l.b16 %v2228
        %v2293 = vunpack.c.h.b16 %v2228
        %v2294 = vunpack.c.l.b16 %v2229
        %v2295 = vunpack.c.h.b16 %v2229
        %v2296 = vunpack.c.l.b16 %v2230
        %v2297 = vunpack.c.h.b16 %v2230
        %v2298 = vunpack.c.l.b16 %v2231
        %v2299 = vunpack.c.h.b16 %v2231
        %v2300 = vunpack.c.l.b16 %v2232
        %v2301 = vunpack.c.h.b16 %v2232
        %v2302 = vunpack.c.l.b16 %v2233
        %v2303 = vunpack.c.h.b16 %v2233
        %v2304 = vunpack.c.l.b16 %v2234
        %v2305 = vunpack.c.h.b16 %v2234
        %v2306 = vunpack.c.l.b16 %v2235
        %v2307 = vunpack.c.h.b16 %v2235
        %v2308 = vunpack.c.l.b16 %v2236
        %v2309 = vunpack.c.h.b16 %v2236
        %v2310 = vunpack.c.l.b16 %v2237
        %v2311 = vunpack.c.h.b16 %v2237
        %v2312 = vunpack.c.l.b16 %v2238
        %v2313 = vunpack.c.h.b16 %v2238
        %v2314 = vunpack.c.l.b16 %v2239
        %v2315 = vunpack.c.h.b16 %v2239
        %v2316 = vunpack.c.l.b16 %v2240
        %v2317 = vunpack.c.h.b16 %v2240
        %v2318 = vunpack.c.l.b16 %v2241
        %v2319 = vunpack.c.h.b16 %v2241
        %v2320 = vunpack.c.l.b16 %v2242
        %v2321 = vunpack.c.h.b16 %v2242
        %v2322 = vunpack.c.l.b16 %v2243
        %v2323 = vunpack.c.h.b16 %v2243
        %v2324 = vunpack.c.l.b16 %v2244
        %v2325 = vunpack.c.h.b16 %v2244
        %v2326 = vunpack.c.l.b16 %v2245
        %v2327 = vunpack.c.h.b16 %v2245
        %v2328 = vunpack.c.l.b16 %v2246
        %v2329 = vunpack.c.h.b16 %v2246
        %v2330 = vunpack.c.l.b16 %v2247
        %v2331 = vunpack.c.h.b16 %v2247
        %v2332 = vunpack.c.l.b16 %v2248
        %v2333 = vunpack.c.h.b16 %v2248
        %v2334 = vunpack.c.l.b16 %v2249
        %v2335 = vunpack.c.h.b16 %v2249
        %v2336 = vunpack.c.l.b16 %v2250
        %v2337 = vunpack.c.h.b16 %v2250
        %v2338 = vunpack.c.l.b16 %v2251
        %v2339 = vunpack.c.h.b16 %v2251
        %v2340 = vunpack.c.l.b16 %v2252
        %v2341 = vunpack.c.h.b16 %v2252
        %v2342 = vunpack.c.l.b16 %v2253
        %v2343 = vunpack.c.h.b16 %v2253
        %v2344 = vunpack.c.l.b16 %v2254
        %v2345 = vunpack.c.h.b16 %v2254
        %v2346 = vunpack.c.l.b16 %v2255
        %v2347 = vunpack.c.h.b16 %v2255
        %v2348 = vunpack.c.l.b16 %v2256
        %v2349 = vunpack.c.h.b16 %v2256
        %v2350 = vunpack.c.l.b16 %v2257
        %v2351 = vunpack.c.h.b16 %v2257
        %v2352 = vunpack.c.l.b16 %v2258
        %v2353 = vunpack.c.h.b16 %v2258
        %v2354 = vunpack.c.l.b16 %v2259
        %v2355 = vunpack.c.h.b16 %v2259
        %v2356 = vpack.c.b16 %v2294, %v2292
        %v2357 = vpack.c.b16 %v2295, %v2293
        %v2358 = vpack.c.b16 %v2298, %v2296
        %v2359 = vpack.c.b16 %v2299, %v2297
        %v2360 = vpack.c.b16 %v2302, %v2300
        %v2361 = vpack.c.b16 %v2303, %v2301
        %v2362 = vpack.c.b16 %v2306, %v2304
        %v2363 = vpack.c.b16 %v2307, %v2305
        %v2364 = vpack.c.b16 %v2310, %v2308
        %v2365 = vpack.c.b16 %v2311, %v2309
        %v2366 = vpack.c.b16 %v2314, %v2312
        %v2367 = vpack.c.b16 %v2315, %v2313
        %v2368 = vpack.c.b16 %v2318, %v2316
        %v2369 = vpack.c.b16 %v2319, %v2317
        %v2370 = vpack.c.b16 %v2322, %v2320
        %v2371 = vpack.c.b16 %v2323, %v2321
        %v2372 = vpack.c.b16 %v2326, %v2324
        %v2373 = vpack.c.b16 %v2327, %v2325
        %v2374 = vpack.c.b16 %v2330, %v2328
        %v2375 = vpack.c.b16 %v2331, %v2329
        %v2376 = vpack.c.b16 %v2334, %v2332
        %v2377 = vpack.c.b16 %v2335, %v2333
        %v2378 = vpack.c.b16 %v2338, %v2336
        %v2379 = vpack.c.b16 %v2339, %v2337
        %v2380 = vpack.c.b16 %v2342, %v2340
        %v2381 = vpack.c.b16 %v2343, %v2341
        %v2382 = vpack.c.b16 %v2346, %v2344
        %v2383 = vpack.c.b16 %v2347, %v2345
        %v2384 = vpack.c.b16 %v2350, %v2348
        %v2385 = vpack.c.b16 %v2351, %v2349
        %v2386 = vpack.c.b16 %v2354, %v2352
        %v2387 = vpack.c.b16 %v2355, %v2353
        %2420 = vmatpush.bf16.msra.mxu0 %v2370
        %2421 = vmatpush.bf16.msra.mxu0 %v2368
        %2422 = vmatpush.bf16.msra.mxu0 %v2366
        %2423 = vmatpush.bf16.msra.mxu0 %v2364
        %2424 = vmatpush.bf16.msra.mxu0 %v2362
        %2425 = vmatpush.bf16.msra.mxu0 %v2360
        %2426 = vmatpush.bf16.msra.mxu0 %v2358
        %2427 = vmatpush.bf16.msra.mxu0 %v2356
        %2428 = vmatmul.bf16.gmra.mxu0 %v2225
        %v2429 = vpop.f32.mrf.mxu0
        %v2430 = vadd.f32 0.0, %v2429
        %v2431 = vpop.f32.mrf.mxu0
        %2432 = vdwg.mxu0
        %2433 = vmatpush.bf16.msra.mxu0 %v2386
        %2434 = vmatpush.bf16.msra.mxu0 %v2384
        %2435 = vmatpush.bf16.msra.mxu0 %v2382
        %2436 = vmatpush.bf16.msra.mxu0 %v2380
        %2437 = vmatpush.bf16.msra.mxu0 %v2378
        %2438 = vmatpush.bf16.msra.mxu0 %v2376
        %2439 = vmatpush.bf16.msra.mxu0 %v2374
        %2440 = vmatpush.bf16.msra.mxu0 %v2372
        %2441 = vmatmul.bf16.gmra.mxu0 %v2226
        %v2442 = vpop.f32.mrf.mxu0
        %v2443 = vadd.f32 %v2430, %v2442
        %v2444 = vpop.f32.mrf.mxu0
        %2445 = vdwg.mxu0
        %2446 = vmatpush.bf16.msra.mxu0 %v2371
        %2447 = vmatpush.bf16.msra.mxu0 %v2369
        %2448 = vmatpush.bf16.msra.mxu0 %v2367
        %2449 = vmatpush.bf16.msra.mxu0 %v2365
        %2450 = vmatpush.bf16.msra.mxu0 %v2363
        %2451 = vmatpush.bf16.msra.mxu0 %v2361
        %2452 = vmatpush.bf16.msra.mxu0 %v2359
        %2453 = vmatpush.bf16.msra.mxu0 %v2357
        %2454 = vmatmul.bf16.gmra.mxu0 %v2225
        %v2455 = vpop.f32.mrf.mxu0
        %v2456 = vadd.f32 0.0, %v2455
        %v2457 = vpop.f32.mrf.mxu0
        %2458 = vdwg.mxu0
        %2459 = vmatpush.bf16.msra.mxu0 %v2387
        %2460 = vmatpush.bf16.msra.mxu0 %v2385
        %2461 = vmatpush.bf16.msra.mxu0 %v2383
        %2462 = vmatpush.bf16.msra.mxu0 %v2381
        %2463 = vmatpush.bf16.msra.mxu0 %v2379
        %2464 = vmatpush.bf16.msra.mxu0 %v2377
        %2465 = vmatpush.bf16.msra.mxu0 %v2375
        %2466 = vmatpush.bf16.msra.mxu0 %v2373
        %2467 = vmatmul.bf16.gmra.mxu0 %v2226
        %v2468 = vpop.f32.mrf.mxu0
        %v2469 = vadd.f32 %v2456, %v2468
        %v2470 = vpop.f32.mrf.mxu0
        %2471 = vdwg.mxu0
        %v2504 = vunpack.c.l.b16 %v2162
        %v2505 = vunpack.c.h.b16 %v2162
        %v2506 = vunpack.c.l.b16 %v2163
        %v2507 = vunpack.c.h.b16 %v2163
        %v2508 = vunpack.c.l.b16 %v2164
        %v2509 = vunpack.c.h.b16 %v2164
        %v2510 = vunpack.c.l.b16 %v2165
        %v2511 = vunpack.c.h.b16 %v2165
        %v2512 = vunpack.c.l.b16 %v2166
        %v2513 = vunpack.c.h.b16 %v2166
        %v2514 = vunpack.c.l.b16 %v2167
        %v2515 = vunpack.c.h.b16 %v2167
        %v2516 = vunpack.c.l.b16 %v2168
        %v2517 = vunpack.c.h.b16 %v2168
        %v2518 = vunpack.c.l.b16 %v2169
        %v2519 = vunpack.c.h.b16 %v2169
        %v2520 = vunpack.c.l.b16 %v2170
        %v2521 = vunpack.c.h.b16 %v2170
        %v2522 = vunpack.c.l.b16 %v2171
        %v2523 = vunpack.c.h.b16 %v2171
        %v2524 = vunpack.c.l.b16 %v2172
        %v2525 = vunpack.c.h.b16 %v2172
        %v2526 = vunpack.c.l.b16 %v2173
        %v2527 = vunpack.c.h.b16 %v2173
        %v2528 = vunpack.c.l.b16 %v2174
        %v2529 = vunpack.c.h.b16 %v2174
        %v2530 = vunpack.c.l.b16 %v2175
        %v2531 = vunpack.c.h.b16 %v2175
        %v2532 = vunpack.c.l.b16 %v2176
        %v2533 = vunpack.c.h.b16 %v2176
        %v2534 = vunpack.c.l.b16 %v2177
        %v2535 = vunpack.c.h.b16 %v2177
        %v2536 = vunpack.c.l.b16 %v2178
        %v2537 = vunpack.c.h.b16 %v2178
        %v2538 = vunpack.c.l.b16 %v2179
        %v2539 = vunpack.c.h.b16 %v2179
        %v2540 = vunpack.c.l.b16 %v2180
        %v2541 = vunpack.c.h.b16 %v2180
        %v2542 = vunpack.c.l.b16 %v2181
        %v2543 = vunpack.c.h.b16 %v2181
        %v2544 = vunpack.c.l.b16 %v2182
        %v2545 = vunpack.c.h.b16 %v2182
        %v2546 = vunpack.c.l.b16 %v2183
        %v2547 = vunpack.c.h.b16 %v2183
        %v2548 = vunpack.c.l.b16 %v2184
        %v2549 = vunpack.c.h.b16 %v2184
        %v2550 = vunpack.c.l.b16 %v2185
        %v2551 = vunpack.c.h.b16 %v2185
        %v2552 = vunpack.c.l.b16 %v2186
        %v2553 = vunpack.c.h.b16 %v2186
        %v2554 = vunpack.c.l.b16 %v2187
        %v2555 = vunpack.c.h.b16 %v2187
        %v2556 = vunpack.c.l.b16 %v2188
        %v2557 = vunpack.c.h.b16 %v2188
        %v2558 = vunpack.c.l.b16 %v2189
        %v2559 = vunpack.c.h.b16 %v2189
        %v2560 = vunpack.c.l.b16 %v2190
        %v2561 = vunpack.c.h.b16 %v2190
        %v2562 = vunpack.c.l.b16 %v2191
        %v2563 = vunpack.c.h.b16 %v2191
        %v2564 = vunpack.c.l.b16 %v2192
        %v2565 = vunpack.c.h.b16 %v2192
        %v2566 = vunpack.c.l.b16 %v2193
        %v2567 = vunpack.c.h.b16 %v2193
        %v2568 = vpack.c.b16 %v2506, %v2504
        %v2569 = vpack.c.b16 %v2507, %v2505
        %v2570 = vpack.c.b16 %v2510, %v2508
        %v2571 = vpack.c.b16 %v2511, %v2509
        %v2572 = vpack.c.b16 %v2514, %v2512
        %v2573 = vpack.c.b16 %v2515, %v2513
        %v2574 = vpack.c.b16 %v2518, %v2516
        %v2575 = vpack.c.b16 %v2519, %v2517
        %v2576 = vpack.c.b16 %v2522, %v2520
        %v2577 = vpack.c.b16 %v2523, %v2521
        %v2578 = vpack.c.b16 %v2526, %v2524
        %v2579 = vpack.c.b16 %v2527, %v2525
        %v2580 = vpack.c.b16 %v2530, %v2528
        %v2581 = vpack.c.b16 %v2531, %v2529
        %v2582 = vpack.c.b16 %v2534, %v2532
        %v2583 = vpack.c.b16 %v2535, %v2533
        %v2584 = vpack.c.b16 %v2538, %v2536
        %v2585 = vpack.c.b16 %v2539, %v2537
        %v2586 = vpack.c.b16 %v2542, %v2540
        %v2587 = vpack.c.b16 %v2543, %v2541
        %v2588 = vpack.c.b16 %v2546, %v2544
        %v2589 = vpack.c.b16 %v2547, %v2545
        %v2590 = vpack.c.b16 %v2550, %v2548
        %v2591 = vpack.c.b16 %v2551, %v2549
        %v2592 = vpack.c.b16 %v2554, %v2552
        %v2593 = vpack.c.b16 %v2555, %v2553
        %v2594 = vpack.c.b16 %v2558, %v2556
        %v2595 = vpack.c.b16 %v2559, %v2557
        %v2596 = vpack.c.b16 %v2562, %v2560
        %v2597 = vpack.c.b16 %v2563, %v2561
        %v2598 = vpack.c.b16 %v2566, %v2564
        %v2599 = vpack.c.b16 %v2567, %v2565
        %2632 = vmatpush.bf16.msra.mxu0 %v2582
        %2633 = vmatpush.bf16.msra.mxu0 %v2580
        %2634 = vmatpush.bf16.msra.mxu0 %v2578
        %2635 = vmatpush.bf16.msra.mxu0 %v2576
        %2636 = vmatpush.bf16.msra.mxu0 %v2574
        %2637 = vmatpush.bf16.msra.mxu0 %v2572
        %2638 = vmatpush.bf16.msra.mxu0 %v2570
        %2639 = vmatpush.bf16.msra.mxu0 %v2568
        %2640 = vmatmul.bf16.gmra.mxu0 %v2160
        %v2641 = vpop.f32.mrf.mxu0
        %v2642 = vadd.f32 %v2443, %v2641
        %v2643 = vpop.f32.mrf.mxu0
        %2644 = vdwg.mxu0
        %2645 = vmatpush.bf16.msra.mxu0 %v2598
        %2646 = vmatpush.bf16.msra.mxu0 %v2596
        %2647 = vmatpush.bf16.msra.mxu0 %v2594
        %2648 = vmatpush.bf16.msra.mxu0 %v2592
        %2649 = vmatpush.bf16.msra.mxu0 %v2590
        %2650 = vmatpush.bf16.msra.mxu0 %v2588
        %2651 = vmatpush.bf16.msra.mxu0 %v2586
        %2652 = vmatpush.bf16.msra.mxu0 %v2584
        %2653 = vmatmul.bf16.gmra.mxu0 %v2161
        %v2654 = vpop.f32.mrf.mxu0
        %v2655 = vadd.f32 %v2642, %v2654
        %v2656 = vpop.f32.mrf.mxu0
        %2657 = vdwg.mxu0
        %2658 = vmatpush.bf16.msra.mxu0 %v2583
        %2659 = vmatpush.bf16.msra.mxu0 %v2581
        %2660 = vmatpush.bf16.msra.mxu0 %v2579
        %2661 = vmatpush.bf16.msra.mxu0 %v2577
        %2662 = vmatpush.bf16.msra.mxu0 %v2575
        %2663 = vmatpush.bf16.msra.mxu0 %v2573
        %2664 = vmatpush.bf16.msra.mxu0 %v2571
        %2665 = vmatpush.bf16.msra.mxu0 %v2569
        %2666 = vmatmul.bf16.gmra.mxu0 %v2160
        %v2667 = vpop.f32.mrf.mxu0
        %v2668 = vadd.f32 %v2469, %v2667
        %v2669 = vpop.f32.mrf.mxu0
        %2670 = vdwg.mxu0
        %2671 = vmatpush.bf16.msra.mxu0 %v2599
        %2672 = vmatpush.bf16.msra.mxu0 %v2597
        %2673 = vmatpush.bf16.msra.mxu0 %v2595
        %2674 = vmatpush.bf16.msra.mxu0 %v2593
        %2675 = vmatpush.bf16.msra.mxu0 %v2591
        %2676 = vmatpush.bf16.msra.mxu0 %v2589
        %2677 = vmatpush.bf16.msra.mxu0 %v2587
        %2678 = vmatpush.bf16.msra.mxu0 %v2585
        %2679 = vmatmul.bf16.gmra.mxu0 %v2161
        %v2680 = vpop.f32.mrf.mxu0
        %v2681 = vadd.f32 %v2668, %v2680
        %v2682 = vpop.f32.mrf.mxu0
        %2683 = vdwg.mxu0
        %s2684 = scalar_lea.vmem %s10, 8
        %v2685 = vld [vmem:[%s2684] sm:$0xf]
        %v2687 = vsel %vm2130, %v2685, 0
        %2689 = vmatpush.bf16.msra.mxu0 0
        %2690 = vmatpush.bf16.msra.mxu0 0
        %2691 = vmatpush.bf16.msra.mxu0 0
        %2692 = vmatpush.bf16.msra.mxu0 0
        %2693 = vmatpush.bf16.msra.mxu0 0
        %2694 = vmatpush.bf16.msra.mxu0 0
        %2695 = vmatpush.bf16.msra.mxu0 0
        %2696 = vmatpush.bf16.msra.mxu0 %v2127
        %2697 = vmatmul.bf16.gmra.mxu0 %v2687
        %v2698 = vpop.f32.mrf.mxu0
        %v2699 = vadd.f32 0.0, %v2698
        %v2700 = vpop.f32.mrf.mxu0
        %2701 = vdwg.mxu0
        %2702 = vmatpush.bf16.msra.mxu0 0
        %2703 = vmatpush.bf16.msra.mxu0 0
        %2704 = vmatpush.bf16.msra.mxu0 0
        %2705 = vmatpush.bf16.msra.mxu0 0
        %2706 = vmatpush.bf16.msra.mxu0 0
        %2707 = vmatpush.bf16.msra.mxu0 0
        %2708 = vmatpush.bf16.msra.mxu0 0
        %2709 = vmatpush.bf16.msra.mxu0 %v2128
        %2710 = vmatmul.bf16.gmra.mxu0 %v2687
        %v2711 = vpop.f32.mrf.mxu0
        %v2712 = vadd.f32 0.0, %v2711
        %v2713 = vpop.f32.mrf.mxu0
        %2714 = vdwg.mxu0
        %v2715 = vpack.c.bf16 %v2699, %v2699
        %v2716 = vpack.c.bf16 %v2712, %v2712
        %s2717 = scalar_lea.vmem %s11, 512
        %v2718 = vld [vmem:[%s2717] sm:$0xff]
        %v2719 = vld [vmem:[%s2717 + $0x8] sm:$0xff]
        %v2720 = vld [vmem:[%s2717 + $0x10] sm:$0xff]
        %v2721 = vld [vmem:[%s2717 + $0x18] sm:$0xff]
        %v2722 = vld [vmem:[%s2717 + $0x20] sm:$0xff]
        %v2723 = vld [vmem:[%s2717 + $0x28] sm:$0xff]
        %v2724 = vld [vmem:[%s2717 + $0x30] sm:$0xff]
        %v2725 = vld [vmem:[%s2717 + $0x38] sm:$0xff]
        %v2726 = vld [vmem:[%s2717 + $0x40] sm:$0xff]
        %v2727 = vld [vmem:[%s2717 + $0x48] sm:$0xff]
        %v2728 = vld [vmem:[%s2717 + $0x50] sm:$0xff]
        %v2729 = vld [vmem:[%s2717 + $0x58] sm:$0xff]
        %v2730 = vld [vmem:[%s2717 + $0x60] sm:$0xff]
        %v2731 = vld [vmem:[%s2717 + $0x68] sm:$0xff]
        %v2732 = vld [vmem:[%s2717 + $0x70] sm:$0xff]
        %v2733 = vld [vmem:[%s2717 + $0x78] sm:$0xff]
        %v2734 = vld [vmem:[%s2717 + $0x80] sm:$0xff]
        %v2735 = vld [vmem:[%s2717 + $0x88] sm:$0xff]
        %v2736 = vld [vmem:[%s2717 + $0x90] sm:$0xff]
        %v2737 = vld [vmem:[%s2717 + $0x98] sm:$0xff]
        %v2738 = vld [vmem:[%s2717 + $0xa0] sm:$0xff]
        %v2739 = vld [vmem:[%s2717 + $0xa8] sm:$0xff]
        %v2740 = vld [vmem:[%s2717 + $0xb0] sm:$0xff]
        %v2741 = vld [vmem:[%s2717 + $0xb8] sm:$0xff]
        %v2742 = vld [vmem:[%s2717 + $0xc0] sm:$0xff]
        %v2743 = vld [vmem:[%s2717 + $0xc8] sm:$0xff]
        %v2744 = vld [vmem:[%s2717 + $0xd0] sm:$0xff]
        %v2745 = vld [vmem:[%s2717 + $0xd8] sm:$0xff]
        %v2746 = vld [vmem:[%s2717 + $0xe0] sm:$0xff]
        %v2747 = vld [vmem:[%s2717 + $0xe8] sm:$0xff]
        %v2748 = vld [vmem:[%s2717 + $0xf0] sm:$0xff]
        %v2749 = vld [vmem:[%s2717 + $0xf8] sm:$0xff]
        %v2782 = vunpack.c.l.b16 %v2718
        %v2783 = vunpack.c.h.b16 %v2718
        %v2784 = vunpack.c.l.b16 %v2719
        %v2785 = vunpack.c.h.b16 %v2719
        %v2786 = vunpack.c.l.b16 %v2720
        %v2787 = vunpack.c.h.b16 %v2720
        %v2788 = vunpack.c.l.b16 %v2721
        %v2789 = vunpack.c.h.b16 %v2721
        %v2790 = vunpack.c.l.b16 %v2722
        %v2791 = vunpack.c.h.b16 %v2722
        %v2792 = vunpack.c.l.b16 %v2723
        %v2793 = vunpack.c.h.b16 %v2723
        %v2794 = vunpack.c.l.b16 %v2724
        %v2795 = vunpack.c.h.b16 %v2724
        %v2796 = vunpack.c.l.b16 %v2725
        %v2797 = vunpack.c.h.b16 %v2725
        %v2798 = vunpack.c.l.b16 %v2726
        %v2799 = vunpack.c.h.b16 %v2726
        %v2800 = vunpack.c.l.b16 %v2727
        %v2801 = vunpack.c.h.b16 %v2727
        %v2802 = vunpack.c.l.b16 %v2728
        %v2803 = vunpack.c.h.b16 %v2728
        %v2804 = vunpack.c.l.b16 %v2729
        %v2805 = vunpack.c.h.b16 %v2729
        %v2806 = vunpack.c.l.b16 %v2730
        %v2807 = vunpack.c.h.b16 %v2730
        %v2808 = vunpack.c.l.b16 %v2731
        %v2809 = vunpack.c.h.b16 %v2731
        %v2810 = vunpack.c.l.b16 %v2732
        %v2811 = vunpack.c.h.b16 %v2732
        %v2812 = vunpack.c.l.b16 %v2733
        %v2813 = vunpack.c.h.b16 %v2733
        %v2814 = vunpack.c.l.b16 %v2734
        %v2815 = vunpack.c.h.b16 %v2734
        %v2816 = vunpack.c.l.b16 %v2735
        %v2817 = vunpack.c.h.b16 %v2735
        %v2818 = vunpack.c.l.b16 %v2736
        %v2819 = vunpack.c.h.b16 %v2736
        %v2820 = vunpack.c.l.b16 %v2737
        %v2821 = vunpack.c.h.b16 %v2737
        %v2822 = vunpack.c.l.b16 %v2738
        %v2823 = vunpack.c.h.b16 %v2738
        %v2824 = vunpack.c.l.b16 %v2739
        %v2825 = vunpack.c.h.b16 %v2739
        %v2826 = vunpack.c.l.b16 %v2740
        %v2827 = vunpack.c.h.b16 %v2740
        %v2828 = vunpack.c.l.b16 %v2741
        %v2829 = vunpack.c.h.b16 %v2741
        %v2830 = vunpack.c.l.b16 %v2742
        %v2831 = vunpack.c.h.b16 %v2742
        %v2832 = vunpack.c.l.b16 %v2743
        %v2833 = vunpack.c.h.b16 %v2743
        %v2834 = vunpack.c.l.b16 %v2744
        %v2835 = vunpack.c.h.b16 %v2744
        %v2836 = vunpack.c.l.b16 %v2745
        %v2837 = vunpack.c.h.b16 %v2745
        %v2838 = vunpack.c.l.b16 %v2746
        %v2839 = vunpack.c.h.b16 %v2746
        %v2840 = vunpack.c.l.b16 %v2747
        %v2841 = vunpack.c.h.b16 %v2747
        %v2842 = vunpack.c.l.b16 %v2748
        %v2843 = vunpack.c.h.b16 %v2748
        %v2844 = vunpack.c.l.b16 %v2749
        %v2845 = vunpack.c.h.b16 %v2749
        %v2846 = vpack.c.b16 %v2784, %v2782
        %v2847 = vpack.c.b16 %v2785, %v2783
        %v2848 = vpack.c.b16 %v2788, %v2786
        %v2849 = vpack.c.b16 %v2789, %v2787
        %v2850 = vpack.c.b16 %v2792, %v2790
        %v2851 = vpack.c.b16 %v2793, %v2791
        %v2852 = vpack.c.b16 %v2796, %v2794
        %v2853 = vpack.c.b16 %v2797, %v2795
        %v2854 = vpack.c.b16 %v2800, %v2798
        %v2855 = vpack.c.b16 %v2801, %v2799
        %v2856 = vpack.c.b16 %v2804, %v2802
        %v2857 = vpack.c.b16 %v2805, %v2803
        %v2858 = vpack.c.b16 %v2808, %v2806
        %v2859 = vpack.c.b16 %v2809, %v2807
        %v2860 = vpack.c.b16 %v2812, %v2810
        %v2861 = vpack.c.b16 %v2813, %v2811
        %v2862 = vpack.c.b16 %v2816, %v2814
        %v2863 = vpack.c.b16 %v2817, %v2815
        %v2864 = vpack.c.b16 %v2820, %v2818
        %v2865 = vpack.c.b16 %v2821, %v2819
        %v2866 = vpack.c.b16 %v2824, %v2822
        %v2867 = vpack.c.b16 %v2825, %v2823
        %v2868 = vpack.c.b16 %v2828, %v2826
        %v2869 = vpack.c.b16 %v2829, %v2827
        %v2870 = vpack.c.b16 %v2832, %v2830
        %v2871 = vpack.c.b16 %v2833, %v2831
        %v2872 = vpack.c.b16 %v2836, %v2834
        %v2873 = vpack.c.b16 %v2837, %v2835
        %v2874 = vpack.c.b16 %v2840, %v2838
        %v2875 = vpack.c.b16 %v2841, %v2839
        %v2876 = vpack.c.b16 %v2844, %v2842
        %v2877 = vpack.c.b16 %v2845, %v2843
        %2910 = vmatpush.bf16.msra.mxu0 %v2860
        %2911 = vmatpush.bf16.msra.mxu0 %v2858
        %2912 = vmatpush.bf16.msra.mxu0 %v2856
        %2913 = vmatpush.bf16.msra.mxu0 %v2854
        %2914 = vmatpush.bf16.msra.mxu0 %v2852
        %2915 = vmatpush.bf16.msra.mxu0 %v2850
        %2916 = vmatpush.bf16.msra.mxu0 %v2848
        %2917 = vmatpush.bf16.msra.mxu0 %v2846
        %2918 = vmatmul.bf16.gmra.mxu0 %v2715
        %v2919 = vpop.f32.mrf.mxu0
        %v2920 = vadd.f32 0.0, %v2919
        %v2921 = vpop.f32.mrf.mxu0
        %2922 = vdwg.mxu0
        %2923 = vmatpush.bf16.msra.mxu0 %v2876
        %2924 = vmatpush.bf16.msra.mxu0 %v2874
        %2925 = vmatpush.bf16.msra.mxu0 %v2872
        %2926 = vmatpush.bf16.msra.mxu0 %v2870
        %2927 = vmatpush.bf16.msra.mxu0 %v2868
        %2928 = vmatpush.bf16.msra.mxu0 %v2866
        %2929 = vmatpush.bf16.msra.mxu0 %v2864
        %2930 = vmatpush.bf16.msra.mxu0 %v2862
        %2931 = vmatmul.bf16.gmra.mxu0 %v2716
        %v2932 = vpop.f32.mrf.mxu0
        %v2933 = vadd.f32 %v2920, %v2932
        %v2934 = vpop.f32.mrf.mxu0
        %2935 = vdwg.mxu0
        %2936 = vmatpush.bf16.msra.mxu0 %v2861
        %2937 = vmatpush.bf16.msra.mxu0 %v2859
        %2938 = vmatpush.bf16.msra.mxu0 %v2857
        %2939 = vmatpush.bf16.msra.mxu0 %v2855
        %2940 = vmatpush.bf16.msra.mxu0 %v2853
        %2941 = vmatpush.bf16.msra.mxu0 %v2851
        %2942 = vmatpush.bf16.msra.mxu0 %v2849
        %2943 = vmatpush.bf16.msra.mxu0 %v2847
        %2944 = vmatmul.bf16.gmra.mxu0 %v2715
        %v2945 = vpop.f32.mrf.mxu0
        %v2946 = vadd.f32 0.0, %v2945
        %v2947 = vpop.f32.mrf.mxu0
        %2948 = vdwg.mxu0
        %2949 = vmatpush.bf16.msra.mxu0 %v2877
        %2950 = vmatpush.bf16.msra.mxu0 %v2875
        %2951 = vmatpush.bf16.msra.mxu0 %v2873
        %2952 = vmatpush.bf16.msra.mxu0 %v2871
        %2953 = vmatpush.bf16.msra.mxu0 %v2869
        %2954 = vmatpush.bf16.msra.mxu0 %v2867
        %2955 = vmatpush.bf16.msra.mxu0 %v2865
        %2956 = vmatpush.bf16.msra.mxu0 %v2863
        %2957 = vmatmul.bf16.gmra.mxu0 %v2716
        %v2958 = vpop.f32.mrf.mxu0
        %v2959 = vadd.f32 %v2946, %v2958
        %v2960 = vpop.f32.mrf.mxu0
        %2961 = vdwg.mxu0
        %v2962 = vadd.f32 %v2655, %v2933
        %v2963 = vadd.f32 %v2681, %v2959
        %v2964 = vld [vmem:[%s12] sm:$0x3]
        %v2966 = vperm.slane %v2964, 0
        %v2967 = vperm.slane %v2964, 1
        %v2970 = vadd.f32 %v2962, %v2966
        %v2971 = vadd.f32 %v2963, %v2967
        %v2972 = vmax.f32 %v2970, 0.0
        %v2973 = vmax.f32 %v2971, 0.0
        %v2974 = vpack.c.bf16 %v2972, %v2972
        %v2975 = vpack.c.bf16 %v2973, %v2973
        %v2976 = vld [vmem:[%s13] sm:$0x3]
        %vm2977 = vcmask 64512
        %v2979 = vsel %vm2977, %v2976, 0
        %vm2981 = vcmask 1043456
        %v2983 = vsel %vm2981, %v2974, 0
        %v2986 = vsel %vm2981, %v2975, 0
        %2988 = vmatpush.bf16.msra.mxu0 0
        %2989 = vmatpush.bf16.msra.mxu0 0
        %2990 = vmatpush.bf16.msra.mxu0 0
        %2991 = vmatpush.bf16.msra.mxu0 0
        %2992 = vmatpush.bf16.msra.mxu0 0
        %2993 = vmatpush.bf16.msra.mxu0 0
        %2994 = vmatpush.bf16.msra.mxu0 0
        %2995 = vmatpush.bf16.msra.mxu0 %v2983
        %2996 = vmatmul.bf16.gmra.mxu0 %v2979
        %v2997 = vpop.f32.mrf.mxu0
        %v2998 = vadd.f32 0.0, %v2997
        %v2999 = vpop.f32.mrf.mxu0
        %3000 = vdwg.mxu0
        %3001 = vmatpush.bf16.msra.mxu0 0
        %3002 = vmatpush.bf16.msra.mxu0 0
        %3003 = vmatpush.bf16.msra.mxu0 0
        %3004 = vmatpush.bf16.msra.mxu0 0
        %3005 = vmatpush.bf16.msra.mxu0 0
        %3006 = vmatpush.bf16.msra.mxu0 0
        %3007 = vmatpush.bf16.msra.mxu0 0
        %3008 = vmatpush.bf16.msra.mxu0 %v2986
        %3009 = vmatmul.bf16.gmra.mxu0 %v2979
        %v3010 = vpop.f32.mrf.mxu0
        %v3011 = vadd.f32 0.0, %v3010
        %v3012 = vpop.f32.mrf.mxu0
        %3013 = vdwg.mxu0
        %v3014 = vpack.c.bf16 %v2998, %v2998
        %v3015 = vpack.c.bf16 %v3011, %v3011
        %v3016 = vld [vmem:[%s14] sm:$0xf]
        %v3017 = vld [vmem:[%s14 + $0x4] sm:$0xf]
        %v3018 = vld [vmem:[%s14 + $0x8] sm:$0xf]
        %v3019 = vld [vmem:[%s14 + $0xc] sm:$0xf]
        %v3020 = vld [vmem:[%s14 + $0x10] sm:$0xf]
        %v3021 = vld [vmem:[%s14 + $0x14] sm:$0xf]
        %v3022 = vld [vmem:[%s14 + $0x18] sm:$0xf]
        %v3023 = vld [vmem:[%s14 + $0x1c] sm:$0xf]
        %v3024 = vld [vmem:[%s14 + $0x20] sm:$0xf]
        %v3025 = vld [vmem:[%s14 + $0x24] sm:$0xf]
        %v3026 = vld [vmem:[%s14 + $0x28] sm:$0xf]
        %v3027 = vld [vmem:[%s14 + $0x2c] sm:$0xf]
        %v3028 = vld [vmem:[%s14 + $0x30] sm:$0xf]
        %v3029 = vld [vmem:[%s14 + $0x34] sm:$0xf]
        %v3030 = vld [vmem:[%s14 + $0x38] sm:$0xf]
        %v3031 = vld [vmem:[%s14 + $0x3c] sm:$0xf]
        %v3032 = vld [vmem:[%s14 + $0x40] sm:$0xf]
        %v3033 = vld [vmem:[%s14 + $0x44] sm:$0xf]
        %v3034 = vld [vmem:[%s14 + $0x48] sm:$0xf]
        %v3035 = vld [vmem:[%s14 + $0x4c] sm:$0xf]
        %v3036 = vld [vmem:[%s14 + $0x50] sm:$0xf]
        %v3037 = vld [vmem:[%s14 + $0x54] sm:$0xf]
        %v3038 = vld [vmem:[%s14 + $0x58] sm:$0xf]
        %v3039 = vld [vmem:[%s14 + $0x5c] sm:$0xf]
        %v3040 = vld [vmem:[%s14 + $0x60] sm:$0xf]
        %v3041 = vld [vmem:[%s14 + $0x64] sm:$0xf]
        %v3042 = vld [vmem:[%s14 + $0x68] sm:$0xf]
        %v3043 = vld [vmem:[%s14 + $0x6c] sm:$0xf]
        %v3044 = vld [vmem:[%s14 + $0x70] sm:$0xf]
        %v3045 = vld [vmem:[%s14 + $0x74] sm:$0xf]
        %v3046 = vld [vmem:[%s14 + $0x78] sm:$0xf]
        %v3047 = vld [vmem:[%s14 + $0x7c] sm:$0xf]
        %s3048 = scalar_lea.vmem %s13, 2
        %v3049 = vld [vmem:[%s3048] sm:$0x3]
        %v3051 = vsel %vm2977, %v3049, 0
        %3053 = vmatpush.bf16.msra.mxu0 0
        %3054 = vmatpush.bf16.msra.mxu0 0
        %3055 = vmatpush.bf16.msra.mxu0 0
        %3056 = vmatpush.bf16.msra.mxu0 0
        %3057 = vmatpush.bf16.msra.mxu0 0
        %3058 = vmatpush.bf16.msra.mxu0 0
        %3059 = vmatpush.bf16.msra.mxu0 0
        %3060 = vmatpush.bf16.msra.mxu0 %v2983
        %3061 = vmatmul.bf16.gmra.mxu0 %v3051
        %v3062 = vpop.f32.mrf.mxu0
        %v3063 = vadd.f32 0.0, %v3062
        %v3064 = vpop.f32.mrf.mxu0
        %3065 = vdwg.mxu0
        %3066 = vmatpush.bf16.msra.mxu0 0
        %3067 = vmatpush.bf16.msra.mxu0 0
        %3068 = vmatpush.bf16.msra.mxu0 0
        %3069 = vmatpush.bf16.msra.mxu0 0
        %3070 = vmatpush.bf16.msra.mxu0 0
        %3071 = vmatpush.bf16.msra.mxu0 0
        %3072 = vmatpush.bf16.msra.mxu0 0
        %3073 = vmatpush.bf16.msra.mxu0 %v2986
        %3074 = vmatmul.bf16.gmra.mxu0 %v3051
        %v3075 = vpop.f32.mrf.mxu0
        %v3076 = vadd.f32 0.0, %v3075
        %v3077 = vpop.f32.mrf.mxu0
        %3078 = vdwg.mxu0
        %v3079 = vpack.c.bf16 %v3063, %v3063
        %v3080 = vpack.c.bf16 %v3076, %v3076
        %s3081 = scalar_lea.vmem %s14, 128
        %v3082 = vld [vmem:[%s3081] sm:$0xf]
        %v3083 = vld [vmem:[%s3081 + $0x4] sm:$0xf]
        %v3084 = vld [vmem:[%s3081 + $0x8] sm:$0xf]
        %v3085 = vld [vmem:[%s3081 + $0xc] sm:$0xf]
        %v3086 = vld [vmem:[%s3081 + $0x10] sm:$0xf]
        %v3087 = vld [vmem:[%s3081 + $0x14] sm:$0xf]
        %v3088 = vld [vmem:[%s3081 + $0x18] sm:$0xf]
        %v3089 = vld [vmem:[%s3081 + $0x1c] sm:$0xf]
        %v3090 = vld [vmem:[%s3081 + $0x20] sm:$0xf]
        %v3091 = vld [vmem:[%s3081 + $0x24] sm:$0xf]
        %v3092 = vld [vmem:[%s3081 + $0x28] sm:$0xf]
        %v3093 = vld [vmem:[%s3081 + $0x2c] sm:$0xf]
        %v3094 = vld [vmem:[%s3081 + $0x30] sm:$0xf]
        %v3095 = vld [vmem:[%s3081 + $0x34] sm:$0xf]
        %v3096 = vld [vmem:[%s3081 + $0x38] sm:$0xf]
        %v3097 = vld [vmem:[%s3081 + $0x3c] sm:$0xf]
        %v3098 = vld [vmem:[%s3081 + $0x40] sm:$0xf]
        %v3099 = vld [vmem:[%s3081 + $0x44] sm:$0xf]
        %v3100 = vld [vmem:[%s3081 + $0x48] sm:$0xf]
        %v3101 = vld [vmem:[%s3081 + $0x4c] sm:$0xf]
        %v3102 = vld [vmem:[%s3081 + $0x50] sm:$0xf]
        %v3103 = vld [vmem:[%s3081 + $0x54] sm:$0xf]
        %v3104 = vld [vmem:[%s3081 + $0x58] sm:$0xf]
        %v3105 = vld [vmem:[%s3081 + $0x5c] sm:$0xf]
        %v3106 = vld [vmem:[%s3081 + $0x60] sm:$0xf]
        %v3107 = vld [vmem:[%s3081 + $0x64] sm:$0xf]
        %v3108 = vld [vmem:[%s3081 + $0x68] sm:$0xf]
        %v3109 = vld [vmem:[%s3081 + $0x6c] sm:$0xf]
        %v3110 = vld [vmem:[%s3081 + $0x70] sm:$0xf]
        %v3111 = vld [vmem:[%s3081 + $0x74] sm:$0xf]
        %v3112 = vld [vmem:[%s3081 + $0x78] sm:$0xf]
        %v3113 = vld [vmem:[%s3081 + $0x7c] sm:$0xf]
        %v3146 = vunpack.c.l.b16 %v3082
        %v3147 = vunpack.c.l.b16 %v3083
        %v3148 = vunpack.c.l.b16 %v3084
        %v3149 = vunpack.c.l.b16 %v3085
        %v3150 = vunpack.c.l.b16 %v3086
        %v3151 = vunpack.c.l.b16 %v3087
        %v3152 = vunpack.c.l.b16 %v3088
        %v3153 = vunpack.c.l.b16 %v3089
        %v3154 = vunpack.c.l.b16 %v3090
        %v3155 = vunpack.c.l.b16 %v3091
        %v3156 = vunpack.c.l.b16 %v3092
        %v3157 = vunpack.c.l.b16 %v3093
        %v3158 = vunpack.c.l.b16 %v3094
        %v3159 = vunpack.c.l.b16 %v3095
        %v3160 = vunpack.c.l.b16 %v3096
        %v3161 = vunpack.c.l.b16 %v3097
        %v3162 = vunpack.c.l.b16 %v3098
        %v3163 = vunpack.c.l.b16 %v3099
        %v3164 = vunpack.c.l.b16 %v3100
        %v3165 = vunpack.c.l.b16 %v3101
        %v3166 = vunpack.c.l.b16 %v3102
        %v3167 = vunpack.c.l.b16 %v3103
        %v3168 = vunpack.c.l.b16 %v3104
        %v3169 = vunpack.c.l.b16 %v3105
        %v3170 = vunpack.c.l.b16 %v3106
        %v3171 = vunpack.c.l.b16 %v3107
        %v3172 = vunpack.c.l.b16 %v3108
        %v3173 = vunpack.c.l.b16 %v3109
        %v3174 = vunpack.c.l.b16 %v3110
        %v3175 = vunpack.c.l.b16 %v3111
        %v3176 = vunpack.c.l.b16 %v3112
        %v3177 = vunpack.c.l.b16 %v3113
        %v3178 = vpack.c.b16 %v3147, %v3146
        %v3179 = vpack.c.b16 %v3149, %v3148
        %v3180 = vpack.c.b16 %v3151, %v3150
        %v3181 = vpack.c.b16 %v3153, %v3152
        %v3182 = vpack.c.b16 %v3155, %v3154
        %v3183 = vpack.c.b16 %v3157, %v3156
        %v3184 = vpack.c.b16 %v3159, %v3158
        %v3185 = vpack.c.b16 %v3161, %v3160
        %v3186 = vpack.c.b16 %v3163, %v3162
        %v3187 = vpack.c.b16 %v3165, %v3164
        %v3188 = vpack.c.b16 %v3167, %v3166
        %v3189 = vpack.c.b16 %v3169, %v3168
        %v3190 = vpack.c.b16 %v3171, %v3170
        %v3191 = vpack.c.b16 %v3173, %v3172
        %v3192 = vpack.c.b16 %v3175, %v3174
        %v3193 = vpack.c.b16 %v3177, %v3176
        %3210 = vmatpush.bf16.msra.mxu0 %v3185
        %3211 = vmatpush.bf16.msra.mxu0 %v3184
        %3212 = vmatpush.bf16.msra.mxu0 %v3183
        %3213 = vmatpush.bf16.msra.mxu0 %v3182
        %3214 = vmatpush.bf16.msra.mxu0 %v3181
        %3215 = vmatpush.bf16.msra.mxu0 %v3180
        %3216 = vmatpush.bf16.msra.mxu0 %v3179
        %3217 = vmatpush.bf16.msra.mxu0 %v3178
        %3218 = vmatmul.bf16.gmra.mxu0 %v3079
        %v3219 = vpop.f32.mrf.mxu0
        %v3220 = vadd.f32 0.0, %v3219
        %v3221 = vpop.f32.mrf.mxu0
        %3222 = vdwg.mxu0
        %3223 = vmatpush.bf16.msra.mxu0 %v3193
        %3224 = vmatpush.bf16.msra.mxu0 %v3192
        %3225 = vmatpush.bf16.msra.mxu0 %v3191
        %3226 = vmatpush.bf16.msra.mxu0 %v3190
        %3227 = vmatpush.bf16.msra.mxu0 %v3189
        %3228 = vmatpush.bf16.msra.mxu0 %v3188
        %3229 = vmatpush.bf16.msra.mxu0 %v3187
        %3230 = vmatpush.bf16.msra.mxu0 %v3186
        %3231 = vmatmul.bf16.gmra.mxu0 %v3080
        %v3232 = vpop.f32.mrf.mxu0
        %v3233 = vadd.f32 %v3220, %v3232
        %v3234 = vpop.f32.mrf.mxu0
        %3235 = vdwg.mxu0
        %v3268 = vunpack.c.l.b16 %v3016
        %v3269 = vunpack.c.l.b16 %v3017
        %v3270 = vunpack.c.l.b16 %v3018
        %v3271 = vunpack.c.l.b16 %v3019
        %v3272 = vunpack.c.l.b16 %v3020
        %v3273 = vunpack.c.l.b16 %v3021
        %v3274 = vunpack.c.l.b16 %v3022
        %v3275 = vunpack.c.l.b16 %v3023
        %v3276 = vunpack.c.l.b16 %v3024
        %v3277 = vunpack.c.l.b16 %v3025
        %v3278 = vunpack.c.l.b16 %v3026
        %v3279 = vunpack.c.l.b16 %v3027
        %v3280 = vunpack.c.l.b16 %v3028
        %v3281 = vunpack.c.l.b16 %v3029
        %v3282 = vunpack.c.l.b16 %v3030
        %v3283 = vunpack.c.l.b16 %v3031
        %v3284 = vunpack.c.l.b16 %v3032
        %v3285 = vunpack.c.l.b16 %v3033
        %v3286 = vunpack.c.l.b16 %v3034
        %v3287 = vunpack.c.l.b16 %v3035
        %v3288 = vunpack.c.l.b16 %v3036
        %v3289 = vunpack.c.l.b16 %v3037
        %v3290 = vunpack.c.l.b16 %v3038
        %v3291 = vunpack.c.l.b16 %v3039
        %v3292 = vunpack.c.l.b16 %v3040
        %v3293 = vunpack.c.l.b16 %v3041
        %v3294 = vunpack.c.l.b16 %v3042
        %v3295 = vunpack.c.l.b16 %v3043
        %v3296 = vunpack.c.l.b16 %v3044
        %v3297 = vunpack.c.l.b16 %v3045
        %v3298 = vunpack.c.l.b16 %v3046
        %v3299 = vunpack.c.l.b16 %v3047
        %v3300 = vpack.c.b16 %v3269, %v3268
        %v3301 = vpack.c.b16 %v3271, %v3270
        %v3302 = vpack.c.b16 %v3273, %v3272
        %v3303 = vpack.c.b16 %v3275, %v3274
        %v3304 = vpack.c.b16 %v3277, %v3276
        %v3305 = vpack.c.b16 %v3279, %v3278
        %v3306 = vpack.c.b16 %v3281, %v3280
        %v3307 = vpack.c.b16 %v3283, %v3282
        %v3308 = vpack.c.b16 %v3285, %v3284
        %v3309 = vpack.c.b16 %v3287, %v3286
        %v3310 = vpack.c.b16 %v3289, %v3288
        %v3311 = vpack.c.b16 %v3291, %v3290
        %v3312 = vpack.c.b16 %v3293, %v3292
        %v3313 = vpack.c.b16 %v3295, %v3294
        %v3314 = vpack.c.b16 %v3297, %v3296
        %v3315 = vpack.c.b16 %v3299, %v3298
        %3332 = vmatpush.bf16.msra.mxu0 %v3307
        %3333 = vmatpush.bf16.msra.mxu0 %v3306
        %3334 = vmatpush.bf16.msra.mxu0 %v3305
        %3335 = vmatpush.bf16.msra.mxu0 %v3304
        %3336 = vmatpush.bf16.msra.mxu0 %v3303
        %3337 = vmatpush.bf16.msra.mxu0 %v3302
        %3338 = vmatpush.bf16.msra.mxu0 %v3301
        %3339 = vmatpush.bf16.msra.mxu0 %v3300
        %3340 = vmatmul.bf16.gmra.mxu0 %v3014
        %v3341 = vpop.f32.mrf.mxu0
        %v3342 = vadd.f32 %v3233, %v3341
        %v3343 = vpop.f32.mrf.mxu0
        %3344 = vdwg.mxu0
        %3345 = vmatpush.bf16.msra.mxu0 %v3315
        %3346 = vmatpush.bf16.msra.mxu0 %v3314
        %3347 = vmatpush.bf16.msra.mxu0 %v3313
        %3348 = vmatpush.bf16.msra.mxu0 %v3312
        %3349 = vmatpush.bf16.msra.mxu0 %v3311
        %3350 = vmatpush.bf16.msra.mxu0 %v3310
        %3351 = vmatpush.bf16.msra.mxu0 %v3309
        %3352 = vmatpush.bf16.msra.mxu0 %v3308
        %3353 = vmatmul.bf16.gmra.mxu0 %v3015
        %v3354 = vpop.f32.mrf.mxu0
        %v3355 = vadd.f32 %v3342, %v3354
        %v3356 = vpop.f32.mrf.mxu0
        %3357 = vdwg.mxu0
        %s3358 = scalar_lea.vmem %s13, 4
        %v3359 = vld [vmem:[%s3358] sm:$0x3]
        %v3361 = vsel %vm2977, %v3359, 0
        %3363 = vmatpush.bf16.msra.mxu0 0
        %3364 = vmatpush.bf16.msra.mxu0 0
        %3365 = vmatpush.bf16.msra.mxu0 0
        %3366 = vmatpush.bf16.msra.mxu0 0
        %3367 = vmatpush.bf16.msra.mxu0 0
        %3368 = vmatpush.bf16.msra.mxu0 0
        %3369 = vmatpush.bf16.msra.mxu0 0
        %3370 = vmatpush.bf16.msra.mxu0 %v2983
        %3371 = vmatmul.bf16.gmra.mxu0 %v3361
        %v3372 = vpop.f32.mrf.mxu0
        %v3373 = vadd.f32 0.0, %v3372
        %v3374 = vpop.f32.mrf.mxu0
        %3375 = vdwg.mxu0
        %3376 = vmatpush.bf16.msra.mxu0 0
        %3377 = vmatpush.bf16.msra.mxu0 0
        %3378 = vmatpush.bf16.msra.mxu0 0
        %3379 = vmatpush.bf16.msra.mxu0 0
        %3380 = vmatpush.bf16.msra.mxu0 0
        %3381 = vmatpush.bf16.msra.mxu0 0
        %3382 = vmatpush.bf16.msra.mxu0 0
        %3383 = vmatpush.bf16.msra.mxu0 %v2986
        %3384 = vmatmul.bf16.gmra.mxu0 %v3361
        %v3385 = vpop.f32.mrf.mxu0
        %v3386 = vadd.f32 0.0, %v3385
        %v3387 = vpop.f32.mrf.mxu0
        %3388 = vdwg.mxu0
        %v3389 = vpack.c.bf16 %v3373, %v3373
        %v3390 = vpack.c.bf16 %v3386, %v3386
        %s3391 = scalar_lea.vmem %s14, 256
        %v3392 = vld [vmem:[%s3391] sm:$0xf]
        %v3393 = vld [vmem:[%s3391 + $0x4] sm:$0xf]
        %v3394 = vld [vmem:[%s3391 + $0x8] sm:$0xf]
        %v3395 = vld [vmem:[%s3391 + $0xc] sm:$0xf]
        %v3396 = vld [vmem:[%s3391 + $0x10] sm:$0xf]
        %v3397 = vld [vmem:[%s3391 + $0x14] sm:$0xf]
        %v3398 = vld [vmem:[%s3391 + $0x18] sm:$0xf]
        %v3399 = vld [vmem:[%s3391 + $0x1c] sm:$0xf]
        %v3400 = vld [vmem:[%s3391 + $0x20] sm:$0xf]
        %v3401 = vld [vmem:[%s3391 + $0x24] sm:$0xf]
        %v3402 = vld [vmem:[%s3391 + $0x28] sm:$0xf]
        %v3403 = vld [vmem:[%s3391 + $0x2c] sm:$0xf]
        %v3404 = vld [vmem:[%s3391 + $0x30] sm:$0xf]
        %v3405 = vld [vmem:[%s3391 + $0x34] sm:$0xf]
        %v3406 = vld [vmem:[%s3391 + $0x38] sm:$0xf]
        %v3407 = vld [vmem:[%s3391 + $0x3c] sm:$0xf]
        %v3408 = vld [vmem:[%s3391 + $0x40] sm:$0xf]
        %v3409 = vld [vmem:[%s3391 + $0x44] sm:$0xf]
        %v3410 = vld [vmem:[%s3391 + $0x48] sm:$0xf]
        %v3411 = vld [vmem:[%s3391 + $0x4c] sm:$0xf]
        %v3412 = vld [vmem:[%s3391 + $0x50] sm:$0xf]
        %v3413 = vld [vmem:[%s3391 + $0x54] sm:$0xf]
        %v3414 = vld [vmem:[%s3391 + $0x58] sm:$0xf]
        %v3415 = vld [vmem:[%s3391 + $0x5c] sm:$0xf]
        %v3416 = vld [vmem:[%s3391 + $0x60] sm:$0xf]
        %v3417 = vld [vmem:[%s3391 + $0x64] sm:$0xf]
        %v3418 = vld [vmem:[%s3391 + $0x68] sm:$0xf]
        %v3419 = vld [vmem:[%s3391 + $0x6c] sm:$0xf]
        %v3420 = vld [vmem:[%s3391 + $0x70] sm:$0xf]
        %v3421 = vld [vmem:[%s3391 + $0x74] sm:$0xf]
        %v3422 = vld [vmem:[%s3391 + $0x78] sm:$0xf]
        %v3423 = vld [vmem:[%s3391 + $0x7c] sm:$0xf]
        %v3456 = vunpack.c.l.b16 %v3392
        %v3457 = vunpack.c.l.b16 %v3393
        %v3458 = vunpack.c.l.b16 %v3394
        %v3459 = vunpack.c.l.b16 %v3395
        %v3460 = vunpack.c.l.b16 %v3396
        %v3461 = vunpack.c.l.b16 %v3397
        %v3462 = vunpack.c.l.b16 %v3398
        %v3463 = vunpack.c.l.b16 %v3399
        %v3464 = vunpack.c.l.b16 %v3400
        %v3465 = vunpack.c.l.b16 %v3401
        %v3466 = vunpack.c.l.b16 %v3402
        %v3467 = vunpack.c.l.b16 %v3403
        %v3468 = vunpack.c.l.b16 %v3404
        %v3469 = vunpack.c.l.b16 %v3405
        %v3470 = vunpack.c.l.b16 %v3406
        %v3471 = vunpack.c.l.b16 %v3407
        %v3472 = vunpack.c.l.b16 %v3408
        %v3473 = vunpack.c.l.b16 %v3409
        %v3474 = vunpack.c.l.b16 %v3410
        %v3475 = vunpack.c.l.b16 %v3411
        %v3476 = vunpack.c.l.b16 %v3412
        %v3477 = vunpack.c.l.b16 %v3413
        %v3478 = vunpack.c.l.b16 %v3414
        %v3479 = vunpack.c.l.b16 %v3415
        %v3480 = vunpack.c.l.b16 %v3416
        %v3481 = vunpack.c.l.b16 %v3417
        %v3482 = vunpack.c.l.b16 %v3418
        %v3483 = vunpack.c.l.b16 %v3419
        %v3484 = vunpack.c.l.b16 %v3420
        %v3485 = vunpack.c.l.b16 %v3421
        %v3486 = vunpack.c.l.b16 %v3422
        %v3487 = vunpack.c.l.b16 %v3423
        %v3488 = vpack.c.b16 %v3457, %v3456
        %v3489 = vpack.c.b16 %v3459, %v3458
        %v3490 = vpack.c.b16 %v3461, %v3460
        %v3491 = vpack.c.b16 %v3463, %v3462
        %v3492 = vpack.c.b16 %v3465, %v3464
        %v3493 = vpack.c.b16 %v3467, %v3466
        %v3494 = vpack.c.b16 %v3469, %v3468
        %v3495 = vpack.c.b16 %v3471, %v3470
        %v3496 = vpack.c.b16 %v3473, %v3472
        %v3497 = vpack.c.b16 %v3475, %v3474
        %v3498 = vpack.c.b16 %v3477, %v3476
        %v3499 = vpack.c.b16 %v3479, %v3478
        %v3500 = vpack.c.b16 %v3481, %v3480
        %v3501 = vpack.c.b16 %v3483, %v3482
        %v3502 = vpack.c.b16 %v3485, %v3484
        %v3503 = vpack.c.b16 %v3487, %v3486
        %3520 = vmatpush.bf16.msra.mxu0 %v3495
        %3521 = vmatpush.bf16.msra.mxu0 %v3494
        %3522 = vmatpush.bf16.msra.mxu0 %v3493
        %3523 = vmatpush.bf16.msra.mxu0 %v3492
        %3524 = vmatpush.bf16.msra.mxu0 %v3491
        %3525 = vmatpush.bf16.msra.mxu0 %v3490
        %3526 = vmatpush.bf16.msra.mxu0 %v3489
        %3527 = vmatpush.bf16.msra.mxu0 %v3488
        %3528 = vmatmul.bf16.gmra.mxu0 %v3389
        %v3529 = vpop.f32.mrf.mxu0
        %v3530 = vadd.f32 0.0, %v3529
        %v3531 = vpop.f32.mrf.mxu0
        %3532 = vdwg.mxu0
        %3533 = vmatpush.bf16.msra.mxu0 %v3503
        %3534 = vmatpush.bf16.msra.mxu0 %v3502
        %3535 = vmatpush.bf16.msra.mxu0 %v3501
        %3536 = vmatpush.bf16.msra.mxu0 %v3500
        %3537 = vmatpush.bf16.msra.mxu0 %v3499
        %3538 = vmatpush.bf16.msra.mxu0 %v3498
        %3539 = vmatpush.bf16.msra.mxu0 %v3497
        %3540 = vmatpush.bf16.msra.mxu0 %v3496
        %3541 = vmatmul.bf16.gmra.mxu0 %v3390
        %v3542 = vpop.f32.mrf.mxu0
        %v3543 = vadd.f32 %v3530, %v3542
        %v3544 = vpop.f32.mrf.mxu0
        %3545 = vdwg.mxu0
        %v3546 = vadd.f32 %v3355, %v3543
        %v3547 = vld [vmem:[%s15] sm:$0x1]
        %v3549 = vperm.slane %v3547, 0
        %v3551 = vadd.f32 %v3546, %v3549
        %v3552 = vmax.f32 %v3551, 0.0
        %vm3553 = vcmask 257024
        %3554 = vst.msk [vmem:[#allocation2] sm:$0xf] %vm3553, %v3552
        %3556 = vrot.lane.b32.xlu0 %v3552, 96
        %v3557 = vpop.permute.xlu0 %3556
        %3559 = vst.msk [vmem:[#allocation2 + $0x4] sm:$0xf] %vm3553, %v3557
        %3560 = vrot.lane.b32.xlu0 %v3552, 64
        %v3561 = vpop.permute.xlu0 %3560
        %3563 = vst.msk [vmem:[#allocation2 + $0x8] sm:$0xf] %vm3553, %v3561
        %3564 = vrot.lane.b32.xlu0 %v3552, 32
        %v3565 = vpop.permute.xlu0 %3564
        %3567 = vst.msk [vmem:[#allocation2 + $0xc] sm:$0xf] %vm3553, %v3565
        %v3568 = vld [vmem:[#allocation2] sm:$0xff]
        %v3569 = vld [vmem:[#allocation2 + $0x8] sm:$0xff]
        %v3570 = vpack.c.bf16 %v3569, %v3568
        %v3571 = vld [vmem:[#allocation10] sm:$0xff]
        %v3572 = vld [vmem:[#allocation10 + $0x8] sm:$0xff]
        %v3573 = vld [vmem:[#allocation10 + $0x10] sm:$0xff]
        %v3574 = vld [vmem:[#allocation10 + $0x18] sm:$0xf]
        %v3575 = vld [vmem:[#allocation10 + $0x1c] sm:$0xff]
        %v3576 = vld [vmem:[#allocation10 + $0x24] sm:$0xff]
        %v3577 = vld [vmem:[#allocation10 + $0x2c] sm:$0xff]
        %v3578 = vld [vmem:[#allocation10 + $0x34] sm:$0xf]
        %v3579 = vld [vmem:[#allocation10 + $0x38] sm:$0xff]
        %v3580 = vld [vmem:[#allocation10 + $0x40] sm:$0xff]
        %v3581 = vld [vmem:[#allocation10 + $0x48] sm:$0xff]
        %v3582 = vld [vmem:[#allocation10 + $0x50] sm:$0xf]
        %v3583 = vld [vmem:[#allocation10 + $0x54] sm:$0xff]
        %v3584 = vld [vmem:[#allocation10 + $0x5c] sm:$0xff]
        %v3585 = vld [vmem:[#allocation10 + $0x64] sm:$0xff]
        %v3586 = vld [vmem:[#allocation10 + $0x6c] sm:$0xf]
        %v3587 = vld [vmem:[%s17] sm:$0xff]
        %v3589 = vperm.slane %v3587, 0
        %v3590 = vperm.slane %v3587, 1
        %v3591 = vperm.slane %v3587, 2
        %v3592 = vperm.slane %v3587, 3
        %v3593 = vperm.slane %v3587, 4
        %v3594 = vperm.slane %v3587, 5
        %v3595 = vperm.slane %v3587, 6
        %v3619 = vunpack.c.l.b16 %v3571
        %v3620 = vunpack.c.h.b16 %v3571
        %v3621 = vunpack.c.l.b16 %v3572
        %v3622 = vunpack.c.h.b16 %v3572
        %v3623 = vunpack.c.l.b16 %v3573
        %v3624 = vunpack.c.h.b16 %v3573
        %v3625 = vunpack.c.l.b16 %v3574
        %v3626 = vunpack.c.l.b16 %v3575
        %v3627 = vunpack.c.h.b16 %v3575
        %v3628 = vunpack.c.l.b16 %v3576
        %v3629 = vunpack.c.h.b16 %v3576
        %v3630 = vunpack.c.l.b16 %v3577
        %v3631 = vunpack.c.h.b16 %v3577
        %v3632 = vunpack.c.l.b16 %v3578
        %v3633 = vunpack.c.l.b16 %v3579
        %v3634 = vunpack.c.h.b16 %v3579
        %v3635 = vunpack.c.l.b16 %v3580
        %v3636 = vunpack.c.h.b16 %v3580
        %v3637 = vunpack.c.l.b16 %v3581
        %v3638 = vunpack.c.h.b16 %v3581
        %v3639 = vunpack.c.l.b16 %v3582
        %v3640 = vunpack.c.l.b16 %v3583
        %v3641 = vunpack.c.h.b16 %v3583
        %v3642 = vunpack.c.l.b16 %v3584
        %v3643 = vunpack.c.h.b16 %v3584
        %v3644 = vunpack.c.l.b16 %v3585
        %v3645 = vunpack.c.h.b16 %v3585
        %v3646 = vunpack.c.l.b16 %v3586
        %v3647 = vpack.c.b16 %v3626, %v3619
        %v3648 = vpack.c.b16 %v3627, %v3620
        %v3649 = vpack.c.b16 %v3628, %v3621
        %v3650 = vpack.c.b16 %v3629, %v3622
        %v3651 = vpack.c.b16 %v3630, %v3623
        %v3652 = vpack.c.b16 %v3631, %v3624
        %v3653 = vpack.c.b16 %v3632, %v3625
        %v3654 = vpack.c.b16 %v3640, %v3633
        %v3655 = vpack.c.b16 %v3641, %v3634
        %v3656 = vpack.c.b16 %v3642, %v3635
        %v3657 = vpack.c.b16 %v3643, %v3636
        %v3658 = vpack.c.b16 %v3644, %v3637
        %v3659 = vpack.c.b16 %v3645, %v3638
        %v3660 = vpack.c.b16 %v3646, %v3639
        %v3676 = vsel %vm1247, %v3570, 0
        %3678 = vmatpush.bf16.msra.mxu0 0
        %3679 = vmatpush.bf16.msra.mxu0 0
        %3680 = vmatpush.bf16.msra.mxu0 0
        %3681 = vmatpush.bf16.msra.mxu0 0
        %3682 = vmatpush.bf16.msra.mxu0 0
        %3683 = vmatpush.bf16.msra.mxu0 0
        %3684 = vmatpush.bf16.msra.mxu0 %v3654
        %3685 = vmatpush.bf16.msra.mxu0 %v3647
        %3686 = vmatmul.bf16.gmra.mxu0 %v3676
        %v3687 = vpop.f32.mrf.mxu0
        %v3688 = vadd.f32 %v3589, %v3687
        %v3689 = vpop.f32.mrf.mxu0
        %v3690 = vadd.f32 %v3589, %v3689
        %3691 = vdwg.mxu0
        %3692 = vmatpush.bf16.msra.mxu0 0
        %3693 = vmatpush.bf16.msra.mxu0 0
        %3694 = vmatpush.bf16.msra.mxu0 0
        %3695 = vmatpush.bf16.msra.mxu0 0
        %3696 = vmatpush.bf16.msra.mxu0 0
        %3697 = vmatpush.bf16.msra.mxu0 0
        %3698 = vmatpush.bf16.msra.mxu0 %v3655
        %3699 = vmatpush.bf16.msra.mxu0 %v3648
        %3700 = vmatmul.bf16.gmra.mxu0 %v3676
        %v3701 = vpop.f32.mrf.mxu0
        %v3702 = vadd.f32 %v3590, %v3701
        %v3703 = vpop.f32.mrf.mxu0
        %v3704 = vadd.f32 %v3590, %v3703
        %3705 = vdwg.mxu0
        %3706 = vmatpush.bf16.msra.mxu0 0
        %3707 = vmatpush.bf16.msra.mxu0 0
        %3708 = vmatpush.bf16.msra.mxu0 0
        %3709 = vmatpush.bf16.msra.mxu0 0
        %3710 = vmatpush.bf16.msra.mxu0 0
        %3711 = vmatpush.bf16.msra.mxu0 0
        %3712 = vmatpush.bf16.msra.mxu0 %v3656
        %3713 = vmatpush.bf16.msra.mxu0 %v3649
        %3714 = vmatmul.bf16.gmra.mxu0 %v3676
        %v3715 = vpop.f32.mrf.mxu0
        %v3716 = vadd.f32 %v3591, %v3715
        %v3717 = vpop.f32.mrf.mxu0
        %v3718 = vadd.f32 %v3591, %v3717
        %3719 = vdwg.mxu0
        %3720 = vmatpush.bf16.msra.mxu0 0
        %3721 = vmatpush.bf16.msra.mxu0 0
        %3722 = vmatpush.bf16.msra.mxu0 0
        %3723 = vmatpush.bf16.msra.mxu0 0
        %3724 = vmatpush.bf16.msra.mxu0 0
        %3725 = vmatpush.bf16.msra.mxu0 0
        %3726 = vmatpush.bf16.msra.mxu0 %v3657
        %3727 = vmatpush.bf16.msra.mxu0 %v3650
        %3728 = vmatmul.bf16.gmra.mxu0 %v3676
        %v3729 = vpop.f32.mrf.mxu0
        %v3730 = vadd.f32 %v3592, %v3729
        %v3731 = vpop.f32.mrf.mxu0
        %v3732 = vadd.f32 %v3592, %v3731
        %3733 = vdwg.mxu0
        %3734 = vmatpush.bf16.msra.mxu0 0
        %3735 = vmatpush.bf16.msra.mxu0 0
        %3736 = vmatpush.bf16.msra.mxu0 0
        %3737 = vmatpush.bf16.msra.mxu0 0
        %3738 = vmatpush.bf16.msra.mxu0 0
        %3739 = vmatpush.bf16.msra.mxu0 0
        %3740 = vmatpush.bf16.msra.mxu0 %v3658
        %3741 = vmatpush.bf16.msra.mxu0 %v3651
        %3742 = vmatmul.bf16.gmra.mxu0 %v3676
        %v3743 = vpop.f32.mrf.mxu0
        %v3744 = vadd.f32 %v3593, %v3743
        %v3745 = vpop.f32.mrf.mxu0
        %v3746 = vadd.f32 %v3593, %v3745
        %3747 = vdwg.mxu0
        %3748 = vmatpush.bf16.msra.mxu0 0
        %3749 = vmatpush.bf16.msra.mxu0 0
        %3750 = vmatpush.bf16.msra.mxu0 0
        %3751 = vmatpush.bf16.msra.mxu0 0
        %3752 = vmatpush.bf16.msra.mxu0 0
        %3753 = vmatpush.bf16.msra.mxu0 0
        %3754 = vmatpush.bf16.msra.mxu0 %v3659
        %3755 = vmatpush.bf16.msra.mxu0 %v3652
        %3756 = vmatmul.bf16.gmra.mxu0 %v3676
        %v3757 = vpop.f32.mrf.mxu0
        %v3758 = vadd.f32 %v3594, %v3757
        %v3759 = vpop.f32.mrf.mxu0
        %v3760 = vadd.f32 %v3594, %v3759
        %3761 = vdwg.mxu0
        %3762 = vmatpush.bf16.msra.mxu0 0
        %3763 = vmatpush.bf16.msra.mxu0 0
        %3764 = vmatpush.bf16.msra.mxu0 0
        %3765 = vmatpush.bf16.msra.mxu0 0
        %3766 = vmatpush.bf16.msra.mxu0 0
        %3767 = vmatpush.bf16.msra.mxu0 0
        %3768 = vmatpush.bf16.msra.mxu0 %v3660
        %3769 = vmatpush.bf16.msra.mxu0 %v3653
        %3770 = vmatmul.bf16.gmra.mxu0 %v3676
        %v3771 = vpop.f32.mrf.mxu0
        %v3772 = vadd.f32 %v3595, %v3771
        %v3773 = vpop.f32.mrf.mxu0
        %v3774 = vadd.f32 %v3595, %v3773
        %3775 = vdwg.mxu0
        %3776 = vst [vmem:[%s707] sm:$0xff] %v3688
        %3777 = vst [vmem:[%s707 + $0x8] sm:$0xff] %v3702
        %3778 = vst [vmem:[%s707 + $0x10] sm:$0xff] %v3716
        %3779 = vst [vmem:[%s707 + $0x18] sm:$0xff] %v3730
        %3780 = vst [vmem:[%s707 + $0x20] sm:$0xff] %v3744
        %3781 = vst [vmem:[%s707 + $0x28] sm:$0xff] %v3758
        %3782 = vst [vmem:[%s707 + $0x30] sm:$0xff] %v3772
        %3783 = vst [vmem:[%s707 + $0x38] sm:$0xff] %v3690
        %3784 = vst [vmem:[%s707 + $0x40] sm:$0xff] %v3704
        %3785 = vst [vmem:[%s707 + $0x48] sm:$0xff] %v3718
        %3786 = vst [vmem:[%s707 + $0x50] sm:$0xff] %v3732
        %3787 = vst [vmem:[%s707 + $0x58] sm:$0xff] %v3746
        %3788 = vst [vmem:[%s707 + $0x60] sm:$0xff] %v3760
        %3789 = vst [vmem:[%s707 + $0x68] sm:$0xff] %v3774
        %vm3790 = vcmask 785408
        %v3791 = vsel %vm3790, %v3702, -inf
        %v3792 = vmax.f32 %v3688, %v3791
        %3793 = vmax.xlane.f32.xlu0 %v3792
        %v3794 = vpop.xlane.xlu0 %3793
        %v3795 = vsel %vm3790, %v3704, -inf
        %v3796 = vmax.f32 %v3690, %v3795
        %3797 = vmax.xlane.f32.xlu0 %v3796
        %v3798 = vpop.xlane.xlu0 %3797
        %v3799 = vmax.f32 %v3794, %v3798
        %v3800 = vrot.slane %v3799, 4
        %v3801 = vmax.f32 %v3799, %v3800
        %v3802 = vrot.slane %v3801, 2
        %v3803 = vmax.f32 %v3801, %v3802
        %v3804 = vrot.slane %v3803, 1
        %v3805 = vmax.f32 %v3803, %v3804
        %v3806 = vsub.f32 %v3688, %v3805
        %v3807 = vsub.f32 %v3702, %v3805
        %v3808 = vsub.f32 %v3690, %v3805
        %v3809 = vsub.f32 %v3704, %v3805
        %v3810 = vmul.f32 %v3806, 1.442695
        %v3811 = vpow.pop %v3810
        %v3812 = vmul.f32 %v3807, 1.442695
        %v3813 = vpow.pop %v3812
        %v3814 = vmul.f32 %v3808, 1.442695
        %v3815 = vpow.pop %v3814
        %v3816 = vmul.f32 %v3809, 1.442695
        %v3817 = vpow.pop %v3816
        %v3818 = vld [vmem:[#allocation12] sm:$0xff]
        %v3819 = vld [vmem:[#allocation12 + $0x8] sm:$0xff]
        %v3820 = vld [vmem:[#allocation12 + $0x10] sm:$0xff]
        %v3821 = vld [vmem:[#allocation12 + $0x18] sm:$0xff]
        %v3822 = vld [vmem:[#allocation13] sm:$0xff]
        %v3823 = vld [vmem:[#allocation13 + $0x8] sm:$0xff]
        %v3824 = vld [vmem:[#allocation13 + $0x10] sm:$0xff]
        %v3825 = vld [vmem:[#allocation13 + $0x18] sm:$0xff]
        %v3826 = vadd.f32 %v3811, %v3815
        %v3827 = vrot.slane %v3826, 4
        %v3828 = vadd.f32 %v3826, %v3827
        %v3829 = vrot.slane %v3828, 2
        %v3830 = vadd.f32 %v3828, %v3829
        %v3831 = vrot.slane %v3830, 1
        %v3832 = vadd.f32 %v3830, %v3831
        %v3833 = vsel %vm3790, %v3813, 0.0
        %v3834 = vsel %vm3790, %v3817, 0.0
        %v3835 = vadd.f32 %v3833, %v3834
        %v3836 = vrot.slane %v3835, 4
        %v3837 = vadd.f32 %v3835, %v3836
        %v3838 = vrot.slane %v3837, 2
        %v3839 = vadd.f32 %v3837, %v3838
        %v3840 = vrot.slane %v3839, 1
        %v3841 = vadd.f32 %v3839, %v3840
        %3844 = vrot.lane.b32.xlu0 %v3832, 16
        %v3845 = vpop.permute.xlu0 %3844
        %3846 = vrot.lane.b32.xlu0 %v3841, 16
        %v3847 = vpop.permute.xlu0 %3846
        %v3848 = vsel %vm2130, %v3845, %v3847
        %v3850 = vadd.f32 %v3832, %v3848
        %3852 = vrot.lane.b32.xlu0 %v3850, 72
        %v3853 = vpop.permute.xlu0 %3852
        %v3855 = vadd.f32 %v3850, %v3853
        %3857 = vrot.lane.b32.xlu0 %v3855, 100
        %v3858 = vpop.permute.xlu0 %3857
        %v3860 = vadd.f32 %v3855, %v3858
        %3862 = vrot.lane.b32.xlu0 %v3860, 114
        %v3863 = vpop.permute.xlu0 %3862
        %v3865 = vadd.f32 %v3860, %v3863
        %v3866 = vrcp.pop %v3865
        %v3867 = vmul.f32 %v3811, %v3818
        %v3868 = vmul.f32 %v3813, %v3819
        %v3869 = vmul.f32 %v3815, %v3820
        %v3870 = vmul.f32 %v3817, %v3821
        %v3871 = vadd.f32 %v3867, %v3869
        %v3872 = vrot.slane %v3871, 4
        %v3873 = vadd.f32 %v3871, %v3872
        %v3874 = vrot.slane %v3873, 2
        %v3875 = vadd.f32 %v3873, %v3874
        %v3876 = vrot.slane %v3875, 1
        %v3877 = vadd.f32 %v3875, %v3876
        %v3878 = vsel %vm3790, %v3868, 0.0
        %v3879 = vsel %vm3790, %v3870, 0.0
        %v3880 = vadd.f32 %v3878, %v3879
        %v3881 = vrot.slane %v3880, 4
        %v3882 = vadd.f32 %v3880, %v3881
        %v3883 = vrot.slane %v3882, 2
        %v3884 = vadd.f32 %v3882, %v3883
        %v3885 = vrot.slane %v3884, 1
        %v3886 = vadd.f32 %v3884, %v3885
        %3889 = vrot.lane.b32.xlu0 %v3877, 16
        %v3890 = vpop.permute.xlu0 %3889
        %3891 = vrot.lane.b32.xlu0 %v3886, 16
        %v3892 = vpop.permute.xlu0 %3891
        %v3893 = vsel %vm2130, %v3890, %v3892
        %v3895 = vadd.f32 %v3877, %v3893
        %3897 = vrot.lane.b32.xlu0 %v3895, 72
        %v3898 = vpop.permute.xlu0 %3897
        %v3900 = vadd.f32 %v3895, %v3898
        %3902 = vrot.lane.b32.xlu0 %v3900, 100
        %v3903 = vpop.permute.xlu0 %3902
        %v3905 = vadd.f32 %v3900, %v3903
        %3907 = vrot.lane.b32.xlu0 %v3905, 114
        %v3908 = vpop.permute.xlu0 %3907
        %v3910 = vadd.f32 %v3905, %v3908
        %v3911 = vmul.f32 %v3910, %v3866
        %v3912 = vmul.f32 %v3811, %v3822
        %v3913 = vmul.f32 %v3813, %v3823
        %v3914 = vmul.f32 %v3815, %v3824
        %v3915 = vmul.f32 %v3817, %v3825
        %v3916 = vadd.f32 %v3912, %v3914
        %v3917 = vrot.slane %v3916, 4
        %v3918 = vadd.f32 %v3916, %v3917
        %v3919 = vrot.slane %v3918, 2
        %v3920 = vadd.f32 %v3918, %v3919
        %v3921 = vrot.slane %v3920, 1
        %v3922 = vadd.f32 %v3920, %v3921
        %v3923 = vsel %vm3790, %v3913, 0.0
        %v3924 = vsel %vm3790, %v3915, 0.0
        %v3925 = vadd.f32 %v3923, %v3924
        %v3926 = vrot.slane %v3925, 4
        %v3927 = vadd.f32 %v3925, %v3926
        %v3928 = vrot.slane %v3927, 2
        %v3929 = vadd.f32 %v3927, %v3928
        %v3930 = vrot.slane %v3929, 1
        %v3931 = vadd.f32 %v3929, %v3930
        %3934 = vrot.lane.b32.xlu0 %v3922, 16
        %v3935 = vpop.permute.xlu0 %3934
        %3936 = vrot.lane.b32.xlu0 %v3931, 16
        %v3937 = vpop.permute.xlu0 %3936
        %v3938 = vsel %vm2130, %v3935, %v3937
        %v3940 = vadd.f32 %v3922, %v3938
        %3942 = vrot.lane.b32.xlu0 %v3940, 72
        %v3943 = vpop.permute.xlu0 %3942
        %v3945 = vadd.f32 %v3940, %v3943
        %3947 = vrot.lane.b32.xlu0 %v3945, 100
        %v3948 = vpop.permute.xlu0 %3947
        %v3950 = vadd.f32 %v3945, %v3948
        %3952 = vrot.lane.b32.xlu0 %v3950, 114
        %v3953 = vpop.permute.xlu0 %3952
        %v3955 = vadd.f32 %v3950, %v3953
        %v3956 = vmul.f32 %v3955, %v3866
        %3963 = vrot.lane.b32.xlu0 %v3702, 32
        %v3964 = vpop.permute.xlu0 %3963
        %3965 = vrot.lane.b32.xlu0 %v3716, 32
        %v3966 = vpop.permute.xlu0 %3965
        %3967 = vrot.lane.b32.xlu0 %v3730, 32
        %v3968 = vpop.permute.xlu0 %3967
        %3969 = vrot.lane.b32.xlu0 %v3704, 32
        %v3970 = vpop.permute.xlu0 %3969
        %3971 = vrot.lane.b32.xlu0 %v3718, 32
        %v3972 = vpop.permute.xlu0 %3971
        %3973 = vrot.lane.b32.xlu0 %v3732, 32
        %v3974 = vpop.permute.xlu0 %3973
        %v3975 = vsel %vm1247, %v3964, %v3966
        %v3976 = vsel %vm1247, %v3966, %v3968
        %v3977 = vsel %vm1247, %v3970, %v3972
        %v3978 = vsel %vm1247, %v3972, %v3974
        %v3983 = vadd.f32 %v3818, %v3975
        %v3984 = vadd.f32 %v3819, %v3976
        %v3985 = vadd.f32 %v3820, %v3977
        %v3986 = vadd.f32 %v3821, %v3978
        %v3987 = vmul.f32 %v3811, %v3983
        %v3988 = vmul.f32 %v3813, %v3984
        %v3989 = vmul.f32 %v3815, %v3985
        %v3990 = vmul.f32 %v3817, %v3986
        %v3991 = vadd.f32 %v3987, %v3989
        %v3992 = vrot.slane %v3991, 4
        %v3993 = vadd.f32 %v3991, %v3992
        %v3994 = vrot.slane %v3993, 2
        %v3995 = vadd.f32 %v3993, %v3994
        %v3996 = vrot.slane %v3995, 1
        %v3997 = vadd.f32 %v3995, %v3996
        %v3998 = vsel %vm3790, %v3988, 0.0
        %v3999 = vsel %vm3790, %v3990, 0.0
        %v4000 = vadd.f32 %v3998, %v3999
        %v4001 = vrot.slane %v4000, 4
        %v4002 = vadd.f32 %v4000, %v4001
        %v4003 = vrot.slane %v4002, 2
        %v4004 = vadd.f32 %v4002, %v4003
        %v4005 = vrot.slane %v4004, 1
        %v4006 = vadd.f32 %v4004, %v4005
        %4009 = vrot.lane.b32.xlu0 %v3997, 16
        %v4010 = vpop.permute.xlu0 %4009
        %4011 = vrot.lane.b32.xlu0 %v4006, 16
        %v4012 = vpop.permute.xlu0 %4011
        %v4013 = vsel %vm2130, %v4010, %v4012
        %v4015 = vadd.f32 %v3997, %v4013
        %4017 = vrot.lane.b32.xlu0 %v4015, 72
        %v4018 = vpop.permute.xlu0 %4017
        %v4020 = vadd.f32 %v4015, %v4018
        %4022 = vrot.lane.b32.xlu0 %v4020, 100
        %v4023 = vpop.permute.xlu0 %4022
        %v4025 = vadd.f32 %v4020, %v4023
        %4027 = vrot.lane.b32.xlu0 %v4025, 114
        %v4028 = vpop.permute.xlu0 %4027
        %v4030 = vadd.f32 %v4025, %v4028
        %v4031 = vmul.f32 %v4030, %v3866
        %4036 = vrot.lane.b32.xlu0 %v3730, 64
        %v4037 = vpop.permute.xlu0 %4036
        %4038 = vrot.lane.b32.xlu0 %v3744, 64
        %v4039 = vpop.permute.xlu0 %4038
        %4040 = vrot.lane.b32.xlu0 %v3758, 64
        %v4041 = vpop.permute.xlu0 %4040
        %4042 = vrot.lane.b32.xlu0 %v3732, 64
        %v4043 = vpop.permute.xlu0 %4042
        %4044 = vrot.lane.b32.xlu0 %v3746, 64
        %v4045 = vpop.permute.xlu0 %4044
        %4046 = vrot.lane.b32.xlu0 %v3760, 64
        %v4047 = vpop.permute.xlu0 %4046
        %v4048 = vsel %vm790, %v4037, %v4039
        %v4049 = vsel %vm790, %v4039, %v4041
        %v4050 = vsel %vm790, %v4043, %v4045
        %v4051 = vsel %vm790, %v4045, %v4047
        %v4056 = vadd.f32 %v3822, %v4048
        %v4057 = vadd.f32 %v3823, %v4049
        %v4058 = vadd.f32 %v3824, %v4050
        %v4059 = vadd.f32 %v3825, %v4051
        %v4060 = vmul.f32 %v3811, %v4056
        %v4061 = vmul.f32 %v3813, %v4057
        %v4062 = vmul.f32 %v3815, %v4058
        %v4063 = vmul.f32 %v3817, %v4059
        %v4064 = vadd.f32 %v4060, %v4062
        %v4065 = vrot.slane %v4064, 4
        %v4066 = vadd.f32 %v4064, %v4065
        %v4067 = vrot.slane %v4066, 2
        %v4068 = vadd.f32 %v4066, %v4067
        %v4069 = vrot.slane %v4068, 1
        %v4070 = vadd.f32 %v4068, %v4069
        %v4071 = vsel %vm3790, %v4061, 0.0
        %v4072 = vsel %vm3790, %v4063, 0.0
        %v4073 = vadd.f32 %v4071, %v4072
        %v4074 = vrot.slane %v4073, 4
        %v4075 = vadd.f32 %v4073, %v4074
        %v4076 = vrot.slane %v4075, 2
        %v4077 = vadd.f32 %v4075, %v4076
        %v4078 = vrot.slane %v4077, 1
        %v4079 = vadd.f32 %v4077, %v4078
        %4082 = vrot.lane.b32.xlu0 %v4070, 16
        %v4083 = vpop.permute.xlu0 %4082
        %4084 = vrot.lane.b32.xlu0 %v4079, 16
        %v4085 = vpop.permute.xlu0 %4084
        %v4086 = vsel %vm2130, %v4083, %v4085
        %v4088 = vadd.f32 %v4070, %v4086
        %4090 = vrot.lane.b32.xlu0 %v4088, 72
        %v4091 = vpop.permute.xlu0 %4090
        %v4093 = vadd.f32 %v4088, %v4091
        %4095 = vrot.lane.b32.xlu0 %v4093, 100
        %v4096 = vpop.permute.xlu0 %4095
        %v4098 = vadd.f32 %v4093, %v4096
        %4100 = vrot.lane.b32.xlu0 %v4098, 114
        %v4101 = vpop.permute.xlu0 %4100
        %v4103 = vadd.f32 %v4098, %v4101
        %v4104 = vmul.f32 %v4103, %v3866
        %4107 = vrot.lane.b32.xlu0 %v3758, 96
        %v4108 = vpop.permute.xlu0 %4107
        %4109 = vrot.lane.b32.xlu0 %v3772, 96
        %v4110 = vpop.permute.xlu0 %4109
        %4111 = vrot.lane.b32.xlu0 %v3760, 96
        %v4112 = vpop.permute.xlu0 %4111
        %4113 = vrot.lane.b32.xlu0 %v3774, 96
        %v4114 = vpop.permute.xlu0 %4113
        %v4115 = vsel %vm3790, %v4108, %v4110
        %v4116 = vsel %vm3790, %v4112, %v4114
        %v4121 = vmul.f32 %v3811, %v4115
        %v4122 = vmul.f32 %v3813, %v4110
        %v4123 = vmul.f32 %v3815, %v4116
        %v4124 = vmul.f32 %v3817, %v4114
        %v4125 = vadd.f32 %v4121, %v4123
        %v4126 = vrot.slane %v4125, 4
        %v4127 = vadd.f32 %v4125, %v4126
        %v4128 = vrot.slane %v4127, 2
        %v4129 = vadd.f32 %v4127, %v4128
        %v4130 = vrot.slane %v4129, 1
        %v4131 = vadd.f32 %v4129, %v4130
        %v4132 = vsel %vm3790, %v4122, 0.0
        %v4133 = vsel %vm3790, %v4124, 0.0
        %v4134 = vadd.f32 %v4132, %v4133
        %v4135 = vrot.slane %v4134, 4
        %v4136 = vadd.f32 %v4134, %v4135
        %v4137 = vrot.slane %v4136, 2
        %v4138 = vadd.f32 %v4136, %v4137
        %v4139 = vrot.slane %v4138, 1
        %v4140 = vadd.f32 %v4138, %v4139
        %4143 = vrot.lane.b32.xlu0 %v4131, 16
        %v4144 = vpop.permute.xlu0 %4143
        %4145 = vrot.lane.b32.xlu0 %v4140, 16
        %v4146 = vpop.permute.xlu0 %4145
        %v4147 = vsel %vm2130, %v4144, %v4146
        %v4149 = vadd.f32 %v4131, %v4147
        %4151 = vrot.lane.b32.xlu0 %v4149, 72
        %v4152 = vpop.permute.xlu0 %4151
        %v4154 = vadd.f32 %v4149, %v4152
        %4156 = vrot.lane.b32.xlu0 %v4154, 100
        %v4157 = vpop.permute.xlu0 %4156
        %v4159 = vadd.f32 %v4154, %v4157
        %4161 = vrot.lane.b32.xlu0 %v4159, 114
        %v4162 = vpop.permute.xlu0 %4161
        %v4164 = vadd.f32 %v4159, %v4162
        %v4165 = vmul.f32 %v4164, %v3866
        %s4166 = smul.u32 %s58, 128
        %s4167 = sld [smem:[#allocation6 + %s4166]]
        %s4168 = sadd.s32 %s4166, 1
        %s4169 = sld [smem:[#allocation6 + %s4168]]
        %s4170 = sadd.s32 %s4166, 2
        %s4171 = sld [smem:[#allocation6 + %s4170]]
        %s4172 = sadd.s32 %s4166, 3
        %s4173 = sld [smem:[#allocation6 + %s4172]]
        %s4174 = sadd.s32 %s4166, 4
        %s4175 = sld [smem:[#allocation6 + %s4174]]
        %s4176 = sadd.s32 %s4166, 5
        %s4177 = sld [smem:[#allocation6 + %s4176]]
        %s4178 = sadd.s32 %s4166, 6
        %s4179 = sld [smem:[#allocation6 + %s4178]]
        %s4180 = sadd.s32 %s4166, 7
        %s4181 = sld [smem:[#allocation6 + %s4180]]
        %s4182 = sadd.s32 %s4166, 8
        %s4183 = sld [smem:[#allocation6 + %s4182]]
        %v4184 = vstv %s4179
        %v4185 = vmul.f32 %v4184, %v4031
        %v4186 = vstv %s4181
        %v4187 = vmul.f32 %v4186, %v4104
        %v4188 = vadd.f32 %v4185, %v4187
        %v4189 = vstv %s4183
        %v4190 = vadd.f32 %v4188, %v4189
        %v4191 = vstv %s4167
        %v4192 = vmul.f32 %v4191, %v4031
        %v4193 = vstv %s4169
        %v4194 = vmul.f32 %v4193, %v4104
        %v4195 = vadd.f32 %v4192, %v4194
        %v4196 = vstv %s4171
        %v4197 = vadd.f32 %v4195, %v4196
        %v4198 = vrcp.pop %v4190
        %v4199 = vmul.f32 %v4190, %v4198
        %v4200 = vsub.f32 1.0, %v4199
        %v4201 = vmul.f32 %v4198, %v4200
        %v4202 = vadd.f32 %v4198, %v4201
        %vm4203 = vweird.f32 %v4190
        %vm4204 = vweird.f32 %v4198
        %vm4205 = vmor %vm4203, %vm4204
        %v4206 = vsel %vm4205, %v4198, %v4202
        %v4207 = vand.u32 2147483647, %v4190
        %vm4208 = vcmp.eq.f32.partialorder %v4207, 8.507059e+37
        %v4209 = vand.u32 %v4190, 2147483648
        %v4210 = vor.u32 1.1754944e-38, %v4209
        %v4211 = vsel %vm4208, %v4210, %v4206
        %v4212 = vmul.f32 %v4197, %v4211
        %v4213 = vstv %s4173
        %v4214 = vmul.f32 %v4213, %v4031
        %v4215 = vstv %s4175
        %v4216 = vmul.f32 %v4215, %v4104
        %v4217 = vadd.f32 %v4214, %v4216
        %v4218 = vstv %s4177
        %v4219 = vadd.f32 %v4217, %v4218
        %v4220 = vmul.f32 %v4219, %v4211
        %s4221 = sld [smem:[#allocation5 + %s58]]
        %s4222 = smul.f32 %s4221, 0.5
        %v4223 = vstv %s4222
        %v4224 = vmul.f32 %v4165, %v4223
        %s4225 = sld [smem:[#allocation4 + %s58]]
        %v4226 = vstv %s4225
        %v4227 = vadd.f32 %v4224, %v4226
        %v4228 = vsub.f32 %v4212, 320.0
        %v4229 = vmul.f32 %v4228, %v4227
        %v4230 = vmul.f32 %v4229, 0.0017006802
        %v4231 = vsub.f32 %v4220, 240.0
        %v4232 = vmul.f32 %v4231, %v4227
        %v4233 = vmul.f32 %v4232, 0.0017035775
        %vm4234 = vcmask 106496
        %4235 = vst.msk [vmem:[%s711] sm:$0x1] %vm4234, %v3911
        %4236 = vst.msk [vmem:[%s711 + $0x1] sm:$0x1] %vm4234, %v3956
        %4237 = vst.msk [vmem:[%s711 + $0x2] sm:$0x1] %vm4234, %v4031
        %4238 = vst.msk [vmem:[%s711 + $0x3] sm:$0x1] %vm4234, %v4104
        %4239 = vst.msk [vmem:[%s711 + $0x4] sm:$0x1] %vm4234, %v4165
        %4240 = vst.msk [vmem:[%s711 + $0x5] sm:$0x1] %vm4234, %v4230
        %4241 = vst.msk [vmem:[%s711 + $0x6] sm:$0x1] %vm4234, %v4233
        %4242 = vst.msk [vmem:[%s711 + $0x7] sm:$0x1] %vm4234, %v4227
        %s4243 = sand.u32 %s428, 1
        %s4244 = scalar_lea.sflag [#allocation9], %s4243
        %s4245 = sand.u32 %s428, 1
        %s4246 = smul.addr %s4245, 64
        %s4247 = scalar_lea.vmem [#allocation15], %s4246
        %p4248 = scmp.lt.s32.totalorder %s58, 1
        %s4249 = scalar_select %p4248, %s58, 1
        %s4250 = smul.addr %s4249, 14
        %s4251 = smul.addr %s4250, 8
        %s4252 = scalar_lea.vmem %s21, %s4251
        %p4253 = scmp.lt.s32.totalorder %s58, 1
        %s4254 = scalar_select %p4253, %s58, 1
        %s4255 = smul.addr %s4254, 8
        %s4256 = scalar_lea.vmem %s22, %s4255
        // Predicated region
        $region105: #{_lambda_.1} parent=87 // pred_check
          %p4257 = pneg %p438
        $region106: #{_lambda_.1} parent=87 // pred_check_branch
          %4259 = sbr.rel (%p4257) target = $region108
        $region107: #{_lambda_.1} parent=87 // pred_region
          %4261 = vsyncadd %s4244, 0
          %s4262 = smul.addr %s58, 8
          %s4263 = smul.addr %s4262, 8
          %s4264 = scalar_lea.hbm %s20, %s4263
          %s4265 = sshll.u32 %s4247, 4
          %s4266 = int_to_ptr.vmem [resolvable:$true] %s4265
          %s4267 = sshll.u32 %s4264, 4
          %s4268 = int_to_ptr.hbm [resolvable:$true] %s4267
          %4273 = dma.vmem_to_hbm [thread:$0]  %s4266, 1024, %s4268, %s4244, 128, 128, 8
        $region108: #{_lambda_.1} parent=87 // pred_fallthru
          _
        // Predicated region
        $region109: #{_lambda_.1} parent=87 // pred_check
          %p4274 = pneg %p464
        $region110: #{_lambda_.1} parent=87 // pred_check_branch
          %4276 = sbr.rel (%p4274) target = $region112
        $region111: #{_lambda_.1} parent=87 // pred_region
          _
        $region112: #{_lambda_.1} parent=87 // pred_fallthru
          _
        // Predicated region
        $region113: #{_lambda_.1} parent=87 // pred_check
          %p4277 = pneg %p490
        $region114: #{_lambda_.1} parent=87 // pred_check_branch
          %4279 = sbr.rel (%p4277) target = $region116
        $region115: #{_lambda_.1} parent=87 // pred_region
          _
        $region116: #{_lambda_.1} parent=87 // pred_fallthru
          _
      $region88: #{_lambda_.1} parent=5 // pred_fallthru
        _
      %p4280 = scmp.le.s32.totalorder 2, %s53
      // Predicated region
      $region117: #{_lambda_.1} parent=5 // pred_check
        %p4281 = pneg %p4280
      $region118: #{_lambda_.1} parent=5 // pred_check_branch
        %4283 = sbr.rel (%p4281) target = $region120
      $region119: #{_lambda_.1} parent=5 // pred_region
        %s4284 = ssub.s32 %s53, 2
        // Predicated region
        $region121: #{_lambda_.1} parent=119 // pred_check
          %p4285 = pneg %p444
        $region122: #{_lambda_.1} parent=119 // pred_check_branch
          %4287 = sbr.rel (%p4285) target = $region124
        $region123: #{_lambda_.1} parent=119 // pred_region
          %s4288 = sand.u32 %s429, 1
          %s4289 = scalar_lea.sflag [#allocation9], %s4288
          %s4290 = sand.u32 %s429, 1
          %s4291 = smul.addr %s4290, 64
          %s4292 = scalar_lea.vmem [#allocation15], %s4291
          %4294 = dma.done %s4289, 1024
        $region124: #{_lambda_.1} parent=119 // pred_fallthru
          _
        // Predicated region
        $region125: #{_lambda_.1} parent=119 // pred_check
          %p4295 = pneg %p470
        $region126: #{_lambda_.1} parent=119 // pred_check_branch
          %4297 = sbr.rel (%p4295) target = $region128
        $region127: #{_lambda_.1} parent=119 // pred_region
          %p4298 = scmp.lt.s32.totalorder %s59, 1
          %s4299 = scalar_select %p4298, %s59, 1
          %s4300 = smul.addr %s4299, 14
          %s4301 = smul.addr %s4300, 8
          %s4302 = scalar_lea.vmem %s21, %s4301
        $region128: #{_lambda_.1} parent=119 // pred_fallthru
          _
        // Predicated region
        $region129: #{_lambda_.1} parent=119 // pred_check
          %p4303 = pneg %p496
        $region130: #{_lambda_.1} parent=119 // pred_check_branch
          %4305 = sbr.rel (%p4303) target = $region132
        $region131: #{_lambda_.1} parent=119 // pred_region
          %p4306 = scmp.lt.s32.totalorder %s59, 1
          %s4307 = scalar_select %p4306, %s59, 1
          %s4308 = smul.addr %s4307, 8
          %s4309 = scalar_lea.vmem %s22, %s4308
        $region132: #{_lambda_.1} parent=119 // pred_fallthru
          _
      $region120: #{_lambda_.1} parent=5 // pred_fallthru
        _
    $region6: #{_lambda_.1} parent=1 // loop_footer
      %s57 = sadd.s32 1, %s53
    $region7: #{_lambda_.1} parent=1 // loop_footer_branch
      %52 = sbr.rel target = $region3
    $region8: #{_lambda_.1} parent=1 // loop_exit
      _
    %4310 = vsyncpa [#allocation8], 1
    %s4311 = scalar_lea.sflag [#allocation8], 1
    %4312 = vsyncpa %s4311, 1
    %4313 = vsyncpa [#allocation11], 1
    %4314 = vsyncpa [#allocation14], 1
    %4315 = vsyncpa [#allocation9], 1
    %s4316 = scalar_lea.sflag [#allocation9], 1
    %4317 = vsyncpa %s4316, 1

</llo_original>
